<compile_context>
chip_gen: v7x
topology: tpu7x:2x2x1
jax: 0.10.0
libtpu: 0.0.40
codegen_flags: <defaults>
</compile_context>

<pallas_src>
import functools

import jax
import jax.numpy as jnp
import numpy as np
from jax import lax
from jax.experimental import pallas as pl
from jax.experimental.pallas import tpu as pltpu


def _block_kernel(x_ref, dww_ref, dwb_ref, lnw_ref, lnb_ref,
                  w1_ref, b1_ref, gamma_ref, beta_ref, w2_ref, b2_ref,
                  out_ref, xpad_ref, *, dw_dtype):
    # x_ref / out_ref: (BT, H, W, C); xpad_ref scratch: (BT, H+6, W+6, C) f32
    BT, H, W, C = out_ref.shape
    C4 = w1_ref.shape[1]
    HW = H * W
    M = BT * HW

    # --- build zero-padded slab in VMEM: halo-only zeroing + interior store ---
    # (zeroed every step: with a "parallel" grid axis each TensorCore owns its own
    #  scratch, so a once-only pl.when(program_id==0) init would be unsafe.)
    xpad_ref[:, pl.ds(0, 3), :, :] = jnp.zeros((BT, 3, W + 6, C), xpad_ref.dtype)
    xpad_ref[:, pl.ds(H + 3, 3), :, :] = jnp.zeros((BT, 3, W + 6, C), xpad_ref.dtype)
    xpad_ref[:, pl.ds(3, H), pl.ds(0, 3), :] = jnp.zeros((BT, H, 3, C), xpad_ref.dtype)
    xpad_ref[:, pl.ds(3, H), pl.ds(W + 3, 3), :] = jnp.zeros((BT, H, 3, C), xpad_ref.dtype)
    xpad_ref[:, pl.ds(3, H), pl.ds(3, W), :] = x_ref[...].astype(xpad_ref.dtype)

    # --- depthwise 7x7 conv (padding=3, groups=C) ---
    # W-shift hoisted: 7 kw-shifted slabs read directly from the scratch ref; the 7
    # vertical taps are cheap leading-axis slices. Per-kw group runs in dw_dtype
    # (bf16 on v6e/v7x), groups accumulated in f32.
    dww_c = dww_ref[...].astype(dw_dtype)                       # (7, 7, C)
    dwb_f = dwb_ref[...].reshape(1, 1, 1, C).astype(jnp.float32)
    acc = None
    for kw in range(7):
        slab = xpad_ref[:, :, pl.ds(kw, W), :].astype(dw_dtype)  # (BT, H+6, W, C)
        part = None
        for kh in range(7):
            tap = dww_c[kh:kh + 1, kw:kw + 1, :].reshape(1, 1, 1, C)
            p = slab[:, kh:kh + H, :, :] * tap
            part = p if part is None else part + p
        part = part.astype(jnp.float32)
        acc = (part + dwb_f) if acc is None else (acc + part)    # bias folded into init

    # --- LayerNorm over channels (eps=1e-6, biased variance) ---
    mean = jnp.mean(acc, axis=-1, keepdims=True)
    cent = acc - mean
    var = jnp.mean(cent * cent, axis=-1, keepdims=True)
    xn = cent * lax.rsqrt(var + 1e-6)
    xn = xn * lnw_ref[...].reshape(1, 1, 1, C) + lnb_ref[...].reshape(1, 1, 1, C)

    # --- pwconv1 (bf16 operands, f32 MXU acc) + tanh GELU (EUP) ---
    xn2 = xn.reshape(M, C).astype(jnp.bfloat16)
    h = jnp.dot(xn2, w1_ref[...], preferred_element_type=jnp.float32)   # (M, 4C) f32
    h = h + b1_ref[...]
    h = jax.nn.gelu(h, approximate=True)        # tanh approx (accuracy tradeoff vs erf)
    hb = h.astype(jnp.bfloat16).reshape(BT, HW, C4)     # bf16 intermediate

    # --- GRN: per batch element, per channel, reduced over spatial positions ---
    # Sum of squares via MXU (batched ones-row matmul); gx/nx statistics stay f32.
    sq = hb * hb
    ones_row = jnp.ones((BT, 1, HW), jnp.bfloat16)
    gx2 = jnp.einsum('bon,bnc->boc', ones_row, sq,
                     preferred_element_type=jnp.float32)         # (BT, 1, 4C) f32
    gx = jnp.sqrt(gx2)
    nx = gx / (jnp.mean(gx, axis=-1, keepdims=True) + 1e-6)
    gam = gamma_ref[...].reshape(1, 1, C4).astype(jnp.bfloat16)
    bet = beta_ref[...].reshape(1, 1, C4).astype(jnp.bfloat16)
    h3 = gam * (hb * nx.astype(jnp.bfloat16)) + bet + hb         # bf16 scale/shift

    # --- pwconv2 (bf16 operands, f32 MXU acc) + residual (x re-read here, not kept live) ---
    y = jnp.dot(h3.reshape(M, C4), w2_ref[...], preferred_element_type=jnp.float32)
    y = y + b2_ref[...]
    out_ref[...] = (x_ref[...].astype(jnp.float32)
                    + y.reshape(BT, H, W, C)).astype(out_ref.dtype)


def _supports_native_bf16_valu():
    """bf16 elementwise runs at full rate on v6e and newer; <=v5 emulate it."""
    try:
        kind = jax.devices()[0].device_kind.lower()
    except Exception:
        return False
    return not any(t in kind for t in ("v2", "v3", "v4", "v5"))


def _vmem_limit_bytes():
    """Scoped VMEM limit derived from the chip (96 MiB-class on v5e/v6e, tighter on v7x)."""
    try:
        cap = int(pltpu.get_tpu_info().vmem_capacity_bytes)
        return min(100 * 1024 * 1024, (cap * 3) // 4)
    except Exception:
        return 48 * 1024 * 1024


def _convnext_block_nhwc(x_nhwc, params, batch_tile=1, dw_bf16=None):
    """One ConvNeXtV2 block on an NHWC activation. Returns NHWC (same dtype as input)."""
    B, H, W, C = x_nhwc.shape
    dww, dwb, lnw, lnb, w1, b1, gamma, beta, w2, b2 = params
    bt = batch_tile
    assert B % bt == 0, "batch_tile must divide batch"
    C4 = w1.shape[1]

    if dw_bf16 is None:
        dw_bf16 = _supports_native_bf16_valu()
    dw_dtype = jnp.bfloat16 if dw_bf16 else jnp.float32

    # bf16 weights for the two MXU matmuls (halves weight VMEM, higher MXU throughput).
    w1 = w1.astype(jnp.bfloat16)
    w2 = w2.astype(jnp.bfloat16)

    def full_spec(a):
        nd = a.ndim
        return pl.BlockSpec(a.shape, lambda b, _nd=nd: (0,) * _nd)

    flops = 2 * B * H * W * (49 * C + 2 * C * C4 + C4)
    transcendentals = B * H * W * C4 + B * C4
    bytes_accessed = (2 * B * H * W * C) * x_nhwc.dtype.itemsize + (w1.size + w2.size) * 2 + (
        dww.size + dwb.size + lnw.size + lnb.size
        + b1.size + gamma.size + beta.size + b2.size) * 4

    grid_spec = pltpu.PrefetchScalarGridSpec(
        num_scalar_prefetch=0,
        grid=(B // bt,),
        in_specs=[
            pl.BlockSpec((bt, H, W, C), lambda b: (b, 0, 0, 0)),   # raw (unpadded) input
            full_spec(dww), full_spec(dwb),
            full_spec(lnw), full_spec(lnb),
            full_spec(w1), full_spec(b1),
            full_spec(gamma), full_spec(beta),
            full_spec(w2), full_spec(b2),
        ],
        out_specs=pl.BlockSpec((bt, H, W, C), lambda b: (b, 0, 0, 0)),
        scratch_shapes=[pltpu.VMEM((bt, H + 6, W + 6, C), jnp.float32)],
    )

    return pl.pallas_call(
        functools.partial(_block_kernel, dw_dtype=dw_dtype),
        out_shape=jax.ShapeDtypeStruct((B, H, W, C), x_nhwc.dtype),
        grid_spec=grid_spec,
        compiler_params=pltpu.CompilerParams(
            dimension_semantics=("parallel",),        # independent batch tiles (megacore)
            vmem_limit_bytes=_vmem_limit_bytes(),
        ),
        cost_estimate=pl.CostEstimate(
            flops=int(flops),
            transcendentals=int(transcendentals),
            bytes_accessed=int(bytes_accessed),
        ),
    )(x_nhwc, dww, dwb, lnw, lnb, w1, b1, gamma, beta, w2, b2)


def convnext_forward(x_nchw, blocks_params, batch_tile=1, activation_dtype=None):
    """ConvNext module forward: sequential blocks. x_nchw: (B, C, H, W).

    Keep batch_tile <= B/2 on v7x so the parallel grid has >= 2 steps (2 TensorCores).
    activation_dtype=jnp.bfloat16 halves inter-block HBM traffic (accuracy tradeoff).
    """
    # Single NCHW->NHWC transpose for the whole block stack (not per block).
    x = jnp.transpose(x_nchw, (0, 2, 3, 1))
    if activation_dtype is not None:
        x = x.astype(activation_dtype)
    for params in blocks_params:
        x = _convnext_block_nhwc(x, params, batch_tile=batch_tile)
    return jnp.transpose(x, (0, 3, 1, 2)).astype(x_nchw.dtype)


def make_params(key, dim):
    """Deterministic synthetic parameters (shapes mirror the PyTorch Block __init__)."""
    ks = jax.random.split(key, 10)
    dww = 0.1 * jax.random.normal(ks[0], (7, 7, dim), jnp.float32)      # Conv2d (dim,1,7,7) -> (7,7,dim)
    dwb = 0.1 * jax.random.normal(ks[1], (1, dim), jnp.float32)
    lnw = 1.0 + 0.1 * jax.random.normal(ks[2], (1, dim), jnp.float32)   # LayerNorm weight
    lnb = 0.1 * jax.random.normal(ks[3], (1, dim), jnp.float32)
    w1 = 0.1 * jax.random.normal(ks[4], (dim, 4 * dim), jnp.float32)    # Linear dim -> 4*dim
    b1 = 0.1 * jax.random.normal(ks[5], (1, 4 * dim), jnp.float32)
    gamma = 0.1 * jax.random.normal(ks[6], (1, 4 * dim), jnp.float32)   # GRN gamma
    beta = 0.1 * jax.random.normal(ks[7], (1, 4 * dim), jnp.float32)    # GRN beta
    w2 = 0.1 * jax.random.normal(ks[8], (4 * dim, dim), jnp.float32)    # Linear 4*dim -> dim
    b2 = 0.1 * jax.random.normal(ks[9], (1, dim), jnp.float32)
    return (dww, dwb, lnw, lnb, w1, b1, gamma, beta, w2, b2)


def ref_block(x_nchw, params):
    """Pure-JAX reference for one Block, mirroring the PyTorch forward exactly (f32, erf GELU)."""
    dww, dwb, lnw, lnb, w1, b1, gamma, beta, w2, b2 = params
    B, C, H, W = x_nchw.shape
    w_oihw = jnp.transpose(dww, (2, 0, 1))[:, None, :, :]               # (C, 1, 7, 7)
    y = jax.lax.conv_general_dilated(
        x_nchw, w_oihw, window_strides=(1, 1), padding=((3, 3), (3, 3)),
        feature_group_count=C, dimension_numbers=("NCHW", "OIHW", "NCHW"))
    y = y + dwb.reshape(1, C, 1, 1)
    y = jnp.transpose(y, (0, 2, 3, 1))                                  # NHWC
    mean = jnp.mean(y, axis=-1, keepdims=True)
    var = jnp.mean((y - mean) ** 2, axis=-1, keepdims=True)
    y = (y - mean) * jax.lax.rsqrt(var + 1e-6) * lnw.reshape(1, 1, 1, C) + lnb.reshape(1, 1, 1, C)
    h = y @ w1 + b1.reshape(1, 1, 1, -1)
    h = jax.nn.gelu(h, approximate=False)
    gx = jnp.sqrt(jnp.sum(h * h, axis=(1, 2), keepdims=True))
    nx = gx / (jnp.mean(gx, axis=-1, keepdims=True) + 1e-6)
    h = gamma.reshape(1, 1, 1, -1) * (h * nx) + beta.reshape(1, 1, 1, -1) + h
    y = h @ w2 + b2.reshape(1, 1, 1, C)
    return x_nchw + jnp.transpose(y, (0, 3, 1, 2))


if __name__ == "__main__":
    B, dim, H, W = 2, 32, 8, 8
    n_blocks = 2
    key = jax.random.PRNGKey(0)
    kx, kp = jax.random.split(key)
    x = jax.random.normal(kx, (B, dim, H, W), jnp.float32)
    blocks_params = [make_params(k, dim) for k in jax.random.split(kp, n_blocks)]

    # f32 / erf-GELU reference (exact PyTorch semantics).
    ref = x
    for p in blocks_params:
        ref = ref_block(ref, p)
    ref = jax.block_until_ready(ref)

    # batch_tile=1: grid=(B,)=2 parallel steps (megacore-friendly on v7x).
    out1 = jax.block_until_ready(convnext_forward(x, blocks_params, batch_tile=1))
    np.testing.assert_allclose(np.asarray(out1), np.asarray(ref), atol=5e-2, rtol=2e-2)

    # batch_tile=2: whole batch per grid step (larger matmul M dim, fewer grid steps).
    out2 = jax.block_until_ready(convnext_forward(x, blocks_params, batch_tile=2))
    np.testing.assert_allclose(np.asarray(out2), np.asarray(ref), atol=5e-2, rtol=2e-2)

    # bf16 inter-block activations (halved HBM traffic) -- looser tolerance by design.
    out3 = jax.block_until_ready(
        convnext_forward(x, blocks_params, batch_tile=1, activation_dtype=jnp.bfloat16))
    np.testing.assert_allclose(np.asarray(out3), np.asarray(ref), atol=1.5e-1, rtol=5e-2)

    print("KERNEL_OK")
</pallas_src>

<mosaic_0001>
module attributes {stable_mosaic.version = 11 : i64} {
  func.func @_block_kernel(%arg0: i32, %arg1: memref<1x8x8x32xf32, #tpu.memory_space<vmem>>, %arg2: memref<7x7x32xf32, #tpu.memory_space<vmem>>, %arg3: memref<1x32xf32, #tpu.memory_space<vmem>>, %arg4: memref<1x32xf32, #tpu.memory_space<vmem>>, %arg5: memref<1x32xf32, #tpu.memory_space<vmem>>, %arg6: memref<32x128xbf16, #tpu.memory_space<vmem>>, %arg7: memref<1x128xf32, #tpu.memory_space<vmem>>, %arg8: memref<1x128xf32, #tpu.memory_space<vmem>>, %arg9: memref<1x128xf32, #tpu.memory_space<vmem>>, %arg10: memref<128x32xbf16, #tpu.memory_space<vmem>>, %arg11: memref<1x32xf32, #tpu.memory_space<vmem>>, %arg12: memref<1x8x8x32xf32, #tpu.memory_space<vmem>>, %arg13: memref<1x14x14x32xf32, #tpu.memory_space<vmem>>) attributes {dimension_semantics = [#tpu.dimension_semantics<parallel>], iteration_bounds = array<i64: 2>, scalar_prefetch = 0 : i64, scratch_operands = 1 : i64, tpu.core_type = #tpu.core_type<tc>, window_params = [{transform_indices = @transform_0, window_bounds = array<i64: 1, 8, 8, 32>}, {pipeline_mode = #tpu.pipeline_mode<synchronous>, transform_indices = @transform_1, window_bounds = array<i64: 7, 7, 32>}, {pipeline_mode = #tpu.pipeline_mode<synchronous>, transform_indices = @transform_2, window_bounds = array<i64: 1, 32>}, {pipeline_mode = #tpu.pipeline_mode<synchronous>, transform_indices = @transform_3, window_bounds = array<i64: 1, 32>}, {pipeline_mode = #tpu.pipeline_mode<synchronous>, transform_indices = @transform_4, window_bounds = array<i64: 1, 32>}, {pipeline_mode = #tpu.pipeline_mode<synchronous>, transform_indices = @transform_5, window_bounds = array<i64: 32, 128>}, {pipeline_mode = #tpu.pipeline_mode<synchronous>, transform_indices = @transform_6, window_bounds = array<i64: 1, 128>}, {pipeline_mode = #tpu.pipeline_mode<synchronous>, transform_indices = @transform_7, window_bounds = array<i64: 1, 128>}, {pipeline_mode = #tpu.pipeline_mode<synchronous>, transform_indices = @transform_8, window_bounds = array<i64: 1, 128>}, {pipeline_mode = #tpu.pipeline_mode<synchronous>, transform_indices = @transform_9, window_bounds = array<i64: 128, 32>}, {pipeline_mode = #tpu.pipeline_mode<synchronous>, transform_indices = @transform_10, window_bounds = array<i64: 1, 32>}, {transform_indices = @transform_11, window_bounds = array<i64: 1, 8, 8, 32>}]} {
    %cst = arith.constant 0.000000e+00 : f32
    %0 = vector.broadcast %cst : f32 to vector<1x3x14x32xf32>
    %c0 = arith.constant 0 : index
    %c0_0 = arith.constant 0 : index
    %c0_1 = arith.constant 0 : index
    %c0_2 = arith.constant 0 : index
    %1 = vector.load %arg13[%c0, %c0_0, %c0_1, %c0_2] : memref<1x14x14x32xf32, #tpu.memory_space<vmem>>, vector<1x3x14x32xf32>
    tpu.vector_store %arg13[%c0, %c0_0, %c0_1, %c0_2], %0 {strides = array<i32>} : memref<1x14x14x32xf32, #tpu.memory_space<vmem>>, vector<1x3x14x32xf32>,
    %cst_3 = arith.constant 0.000000e+00 : f32
    %2 = vector.broadcast %cst_3 : f32 to vector<1x3x14x32xf32>
    %c0_4 = arith.constant 0 : index
    %c11 = arith.constant 11 : index
    %c0_5 = arith.constant 0 : index
    %c0_6 = arith.constant 0 : index
    %3 = vector.load %arg13[%c0_4, %c11, %c0_5, %c0_6] : memref<1x14x14x32xf32, #tpu.memory_space<vmem>>, vector<1x3x14x32xf32>
    tpu.vector_store %arg13[%c0_4, %c11, %c0_5, %c0_6], %2 {strides = array<i32>} : memref<1x14x14x32xf32, #tpu.memory_space<vmem>>, vector<1x3x14x32xf32>,
    %cst_7 = arith.constant 0.000000e+00 : f32
    %4 = vector.broadcast %cst_7 : f32 to vector<1x8x3x32xf32>
    %c0_8 = arith.constant 0 : index
    %c3 = arith.constant 3 : index
    %c0_9 = arith.constant 0 : index
    %c0_10 = arith.constant 0 : index
    %5 = vector.load %arg13[%c0_8, %c3, %c0_9, %c0_10] : memref<1x14x14x32xf32, #tpu.memory_space<vmem>>, vector<1x8x3x32xf32>
    tpu.vector_store %arg13[%c0_8, %c3, %c0_9, %c0_10], %4 {strides = array<i32>} : memref<1x14x14x32xf32, #tpu.memory_space<vmem>>, vector<1x8x3x32xf32>,
    %cst_11 = arith.constant 0.000000e+00 : f32
    %6 = vector.broadcast %cst_11 : f32 to vector<1x8x3x32xf32>
    %c0_12 = arith.constant 0 : index
    %c3_13 = arith.constant 3 : index
    %c11_14 = arith.constant 11 : index
    %c0_15 = arith.constant 0 : index
    %7 = vector.load %arg13[%c0_12, %c3_13, %c11_14, %c0_15] : memref<1x14x14x32xf32, #tpu.memory_space<vmem>>, vector<1x8x3x32xf32>
    tpu.vector_store %arg13[%c0_12, %c3_13, %c11_14, %c0_15], %6 {strides = array<i32>} : memref<1x14x14x32xf32, #tpu.memory_space<vmem>>, vector<1x8x3x32xf32>,
    %c0_16 = arith.constant 0 : index
    %c0_17 = arith.constant 0 : index
    %c0_18 = arith.constant 0 : index
    %c0_19 = arith.constant 0 : index
    %8 = vector.load %arg1[%c0_16, %c0_17, %c0_18, %c0_19] : memref<1x8x8x32xf32, #tpu.memory_space<vmem>>, vector<1x8x8x32xf32>
    %c0_20 = arith.constant 0 : index
    %c3_21 = arith.constant 3 : index
    %c3_22 = arith.constant 3 : index
    %c0_23 = arith.constant 0 : index
    %9 = vector.load %arg13[%c0_20, %c3_21, %c3_22, %c0_23] : memref<1x14x14x32xf32, #tpu.memory_space<vmem>>, vector<1x8x8x32xf32>
    tpu.vector_store %arg13[%c0_20, %c3_21, %c3_22, %c0_23], %8 {strides = array<i32>} : memref<1x14x14x32xf32, #tpu.memory_space<vmem>>, vector<1x8x8x32xf32>,
    %c0_24 = arith.constant 0 : index
    %c0_25 = arith.constant 0 : index
    %c0_26 = arith.constant 0 : index
    %10 = vector.load %arg2[%c0_24, %c0_25, %c0_26] : memref<7x7x32xf32, #tpu.memory_space<vmem>>, vector<7x7x32xf32>
    %11 = arith.truncf %10 : vector<7x7x32xf32> to vector<7x7x32xbf16>
    %c0_27 = arith.constant 0 : index
    %c0_28 = arith.constant 0 : index
    %12 = vector.load %arg3[%c0_27, %c0_28] : memref<1x32xf32, #tpu.memory_space<vmem>>, vector<1x32xf32>
    %13 = vector.shape_cast %12 : vector<1x32xf32> to vector<1x1x1x32xf32>
    %c0_29 = arith.constant 0 : index
    %c0_30 = arith.constant 0 : index
    %c0_31 = arith.constant 0 : index
    %c0_32 = arith.constant 0 : index
    %14 = vector.load %arg13[%c0_29, %c0_30, %c0_31, %c0_32] : memref<1x14x14x32xf32, #tpu.memory_space<vmem>>, vector<1x14x8x32xf32>
    %15 = arith.truncf %14 : vector<1x14x8x32xf32> to vector<1x14x8x32xbf16>
    %16 = vector.extract_strided_slice %11 {offsets = [0, 0, 0], sizes = [1, 1, 32], strides = [1, 1, 1]} : vector<7x7x32xbf16> to vector<1x1x32xbf16>
    %17 = vector.shape_cast %16 : vector<1x1x32xbf16> to vector<1x1x1x32xbf16>
    %18 = vector.extract_strided_slice %15 {offsets = [0, 0, 0, 0], sizes = [1, 8, 8, 32], strides = [1, 1, 1, 1]} : vector<1x14x8x32xbf16> to vector<1x8x8x32xbf16>
    %19 = vector.broadcast %17 : vector<1x1x1x32xbf16> to vector<1x8x8x32xbf16>
    %20 = arith.mulf %18, %19 : vector<1x8x8x32xbf16>
    %21 = vector.extract_strided_slice %11 {offsets = [1, 0, 0], sizes = [1, 1, 32], strides = [1, 1, 1]} : vector<7x7x32xbf16> to vector<1x1x32xbf16>
    %22 = vector.shape_cast %21 : vector<1x1x32xbf16> to vector<1x1x1x32xbf16>
    %23 = vector.extract_strided_slice %15 {offsets = [0, 1, 0, 0], sizes = [1, 8, 8, 32], strides = [1, 1, 1, 1]} : vector<1x14x8x32xbf16> to vector<1x8x8x32xbf16>
    %24 = vector.broadcast %22 : vector<1x1x1x32xbf16> to vector<1x8x8x32xbf16>
    %25 = arith.mulf %23, %24 : vector<1x8x8x32xbf16>
    %26 = arith.addf %20, %25 : vector<1x8x8x32xbf16>
    %27 = vector.extract_strided_slice %11 {offsets = [2, 0, 0], sizes = [1, 1, 32], strides = [1, 1, 1]} : vector<7x7x32xbf16> to vector<1x1x32xbf16>
    %28 = vector.shape_cast %27 : vector<1x1x32xbf16> to vector<1x1x1x32xbf16>
    %29 = vector.extract_strided_slice %15 {offsets = [0, 2, 0, 0], sizes = [1, 8, 8, 32], strides = [1, 1, 1, 1]} : vector<1x14x8x32xbf16> to vector<1x8x8x32xbf16>
    %30 = vector.broadcast %28 : vector<1x1x1x32xbf16> to vector<1x8x8x32xbf16>
    %31 = arith.mulf %29, %30 : vector<1x8x8x32xbf16>
    %32 = arith.addf %26, %31 : vector<1x8x8x32xbf16>
    %33 = vector.extract_strided_slice %11 {offsets = [3, 0, 0], sizes = [1, 1, 32], strides = [1, 1, 1]} : vector<7x7x32xbf16> to vector<1x1x32xbf16>
    %34 = vector.shape_cast %33 : vector<1x1x32xbf16> to vector<1x1x1x32xbf16>
    %35 = vector.extract_strided_slice %15 {offsets = [0, 3, 0, 0], sizes = [1, 8, 8, 32], strides = [1, 1, 1, 1]} : vector<1x14x8x32xbf16> to vector<1x8x8x32xbf16>
    %36 = vector.broadcast %34 : vector<1x1x1x32xbf16> to vector<1x8x8x32xbf16>
    %37 = arith.mulf %35, %36 : vector<1x8x8x32xbf16>
    %38 = arith.addf %32, %37 : vector<1x8x8x32xbf16>
    %39 = vector.extract_strided_slice %11 {offsets = [4, 0, 0], sizes = [1, 1, 32], strides = [1, 1, 1]} : vector<7x7x32xbf16> to vector<1x1x32xbf16>
    %40 = vector.shape_cast %39 : vector<1x1x32xbf16> to vector<1x1x1x32xbf16>
    %41 = vector.extract_strided_slice %15 {offsets = [0, 4, 0, 0], sizes = [1, 8, 8, 32], strides = [1, 1, 1, 1]} : vector<1x14x8x32xbf16> to vector<1x8x8x32xbf16>
    %42 = vector.broadcast %40 : vector<1x1x1x32xbf16> to vector<1x8x8x32xbf16>
    %43 = arith.mulf %41, %42 : vector<1x8x8x32xbf16>
    %44 = arith.addf %38, %43 : vector<1x8x8x32xbf16>
    %45 = vector.extract_strided_slice %11 {offsets = [5, 0, 0], sizes = [1, 1, 32], strides = [1, 1, 1]} : vector<7x7x32xbf16> to vector<1x1x32xbf16>
    %46 = vector.shape_cast %45 : vector<1x1x32xbf16> to vector<1x1x1x32xbf16>
    %47 = vector.extract_strided_slice %15 {offsets = [0, 5, 0, 0], sizes = [1, 8, 8, 32], strides = [1, 1, 1, 1]} : vector<1x14x8x32xbf16> to vector<1x8x8x32xbf16>
    %48 = vector.broadcast %46 : vector<1x1x1x32xbf16> to vector<1x8x8x32xbf16>
    %49 = arith.mulf %47, %48 : vector<1x8x8x32xbf16>
    %50 = arith.addf %44, %49 : vector<1x8x8x32xbf16>
    %51 = vector.extract_strided_slice %11 {offsets = [6, 0, 0], sizes = [1, 1, 32], strides = [1, 1, 1]} : vector<7x7x32xbf16> to vector<1x1x32xbf16>
    %52 = vector.shape_cast %51 : vector<1x1x32xbf16> to vector<1x1x1x32xbf16>
    %53 = vector.extract_strided_slice %15 {offsets = [0, 6, 0, 0], sizes = [1, 8, 8, 32], strides = [1, 1, 1, 1]} : vector<1x14x8x32xbf16> to vector<1x8x8x32xbf16>
    %54 = vector.broadcast %52 : vector<1x1x1x32xbf16> to vector<1x8x8x32xbf16>
    %55 = arith.mulf %53, %54 : vector<1x8x8x32xbf16>
    %56 = arith.addf %50, %55 : vector<1x8x8x32xbf16>
    %57 = arith.extf %56 : vector<1x8x8x32xbf16> to vector<1x8x8x32xf32>
    %58 = vector.broadcast %13 : vector<1x1x1x32xf32> to vector<1x8x8x32xf32>
    %59 = arith.addf %57, %58 : vector<1x8x8x32xf32>
    %c0_33 = arith.constant 0 : index
    %c0_34 = arith.constant 0 : index
    %c1 = arith.constant 1 : index
    %c0_35 = arith.constant 0 : index
    %60 = vector.load %arg13[%c0_33, %c0_34, %c1, %c0_35] : memref<1x14x14x32xf32, #tpu.memory_space<vmem>>, vector<1x14x8x32xf32>
    %61 = arith.truncf %60 : vector<1x14x8x32xf32> to vector<1x14x8x32xbf16>
    %62 = vector.extract_strided_slice %11 {offsets = [0, 1, 0], sizes = [1, 1, 32], strides = [1, 1, 1]} : vector<7x7x32xbf16> to vector<1x1x32xbf16>
    %63 = vector.shape_cast %62 : vector<1x1x32xbf16> to vector<1x1x1x32xbf16>
    %64 = vector.extract_strided_slice %61 {offsets = [0, 0, 0, 0], sizes = [1, 8, 8, 32], strides = [1, 1, 1, 1]} : vector<1x14x8x32xbf16> to vector<1x8x8x32xbf16>
    %65 = vector.broadcast %63 : vector<1x1x1x32xbf16> to vector<1x8x8x32xbf16>
    %66 = arith.mulf %64, %65 : vector<1x8x8x32xbf16>
    %67 = vector.extract_strided_slice %11 {offsets = [1, 1, 0], sizes = [1, 1, 32], strides = [1, 1, 1]} : vector<7x7x32xbf16> to vector<1x1x32xbf16>
    %68 = vector.shape_cast %67 : vector<1x1x32xbf16> to vector<1x1x1x32xbf16>
    %69 = vector.extract_strided_slice %61 {offsets = [0, 1, 0, 0], sizes = [1, 8, 8, 32], strides = [1, 1, 1, 1]} : vector<1x14x8x32xbf16> to vector<1x8x8x32xbf16>
    %70 = vector.broadcast %68 : vector<1x1x1x32xbf16> to vector<1x8x8x32xbf16>
    %71 = arith.mulf %69, %70 : vector<1x8x8x32xbf16>
    %72 = arith.addf %66, %71 : vector<1x8x8x32xbf16>
    %73 = vector.extract_strided_slice %11 {offsets = [2, 1, 0], sizes = [1, 1, 32], strides = [1, 1, 1]} : vector<7x7x32xbf16> to vector<1x1x32xbf16>
    %74 = vector.shape_cast %73 : vector<1x1x32xbf16> to vector<1x1x1x32xbf16>
    %75 = vector.extract_strided_slice %61 {offsets = [0, 2, 0, 0], sizes = [1, 8, 8, 32], strides = [1, 1, 1, 1]} : vector<1x14x8x32xbf16> to vector<1x8x8x32xbf16>
    %76 = vector.broadcast %74 : vector<1x1x1x32xbf16> to vector<1x8x8x32xbf16>
    %77 = arith.mulf %75, %76 : vector<1x8x8x32xbf16>
    %78 = arith.addf %72, %77 : vector<1x8x8x32xbf16>
    %79 = vector.extract_strided_slice %11 {offsets = [3, 1, 0], sizes = [1, 1, 32], strides = [1, 1, 1]} : vector<7x7x32xbf16> to vector<1x1x32xbf16>
    %80 = vector.shape_cast %79 : vector<1x1x32xbf16> to vector<1x1x1x32xbf16>
    %81 = vector.extract_strided_slice %61 {offsets = [0, 3, 0, 0], sizes = [1, 8, 8, 32], strides = [1, 1, 1, 1]} : vector<1x14x8x32xbf16> to vector<1x8x8x32xbf16>
    %82 = vector.broadcast %80 : vector<1x1x1x32xbf16> to vector<1x8x8x32xbf16>
    %83 = arith.mulf %81, %82 : vector<1x8x8x32xbf16>
    %84 = arith.addf %78, %83 : vector<1x8x8x32xbf16>
    %85 = vector.extract_strided_slice %11 {offsets = [4, 1, 0], sizes = [1, 1, 32], strides = [1, 1, 1]} : vector<7x7x32xbf16> to vector<1x1x32xbf16>
    %86 = vector.shape_cast %85 : vector<1x1x32xbf16> to vector<1x1x1x32xbf16>
    %87 = vector.extract_strided_slice %61 {offsets = [0, 4, 0, 0], sizes = [1, 8, 8, 32], strides = [1, 1, 1, 1]} : vector<1x14x8x32xbf16> to vector<1x8x8x32xbf16>
    %88 = vector.broadcast %86 : vector<1x1x1x32xbf16> to vector<1x8x8x32xbf16>
    %89 = arith.mulf %87, %88 : vector<1x8x8x32xbf16>
    %90 = arith.addf %84, %89 : vector<1x8x8x32xbf16>
    %91 = vector.extract_strided_slice %11 {offsets = [5, 1, 0], sizes = [1, 1, 32], strides = [1, 1, 1]} : vector<7x7x32xbf16> to vector<1x1x32xbf16>
    %92 = vector.shape_cast %91 : vector<1x1x32xbf16> to vector<1x1x1x32xbf16>
    %93 = vector.extract_strided_slice %61 {offsets = [0, 5, 0, 0], sizes = [1, 8, 8, 32], strides = [1, 1, 1, 1]} : vector<1x14x8x32xbf16> to vector<1x8x8x32xbf16>
    %94 = vector.broadcast %92 : vector<1x1x1x32xbf16> to vector<1x8x8x32xbf16>
    %95 = arith.mulf %93, %94 : vector<1x8x8x32xbf16>
    %96 = arith.addf %90, %95 : vector<1x8x8x32xbf16>
    %97 = vector.extract_strided_slice %11 {offsets = [6, 1, 0], sizes = [1, 1, 32], strides = [1, 1, 1]} : vector<7x7x32xbf16> to vector<1x1x32xbf16>
    %98 = vector.shape_cast %97 : vector<1x1x32xbf16> to vector<1x1x1x32xbf16>
    %99 = vector.extract_strided_slice %61 {offsets = [0, 6, 0, 0], sizes = [1, 8, 8, 32], strides = [1, 1, 1, 1]} : vector<1x14x8x32xbf16> to vector<1x8x8x32xbf16>
    %100 = vector.broadcast %98 : vector<1x1x1x32xbf16> to vector<1x8x8x32xbf16>
    %101 = arith.mulf %99, %100 : vector<1x8x8x32xbf16>
    %102 = arith.addf %96, %101 : vector<1x8x8x32xbf16>
    %103 = arith.extf %102 : vector<1x8x8x32xbf16> to vector<1x8x8x32xf32>
    %104 = arith.addf %59, %103 : vector<1x8x8x32xf32>
    %c0_36 = arith.constant 0 : index
    %c0_37 = arith.constant 0 : index
    %c2 = arith.constant 2 : index
    %c0_38 = arith.constant 0 : index
    %105 = vector.load %arg13[%c0_36, %c0_37, %c2, %c0_38] : memref<1x14x14x32xf32, #tpu.memory_space<vmem>>, vector<1x14x8x32xf32>
    %106 = arith.truncf %105 : vector<1x14x8x32xf32> to vector<1x14x8x32xbf16>
    %107 = vector.extract_strided_slice %11 {offsets = [0, 2, 0], sizes = [1, 1, 32], strides = [1, 1, 1]} : vector<7x7x32xbf16> to vector<1x1x32xbf16>
    %108 = vector.shape_cast %107 : vector<1x1x32xbf16> to vector<1x1x1x32xbf16>
    %109 = vector.extract_strided_slice %106 {offsets = [0, 0, 0, 0], sizes = [1, 8, 8, 32], strides = [1, 1, 1, 1]} : vector<1x14x8x32xbf16> to vector<1x8x8x32xbf16>
    %110 = vector.broadcast %108 : vector<1x1x1x32xbf16> to vector<1x8x8x32xbf16>
    %111 = arith.mulf %109, %110 : vector<1x8x8x32xbf16>
    %112 = vector.extract_strided_slice %11 {offsets = [1, 2, 0], sizes = [1, 1, 32], strides = [1, 1, 1]} : vector<7x7x32xbf16> to vector<1x1x32xbf16>
    %113 = vector.shape_cast %112 : vector<1x1x32xbf16> to vector<1x1x1x32xbf16>
    %114 = vector.extract_strided_slice %106 {offsets = [0, 1, 0, 0], sizes = [1, 8, 8, 32], strides = [1, 1, 1, 1]} : vector<1x14x8x32xbf16> to vector<1x8x8x32xbf16>
    %115 = vector.broadcast %113 : vector<1x1x1x32xbf16> to vector<1x8x8x32xbf16>
    %116 = arith.mulf %114, %115 : vector<1x8x8x32xbf16>
    %117 = arith.addf %111, %116 : vector<1x8x8x32xbf16>
    %118 = vector.extract_strided_slice %11 {offsets = [2, 2, 0], sizes = [1, 1, 32], strides = [1, 1, 1]} : vector<7x7x32xbf16> to vector<1x1x32xbf16>
    %119 = vector.shape_cast %118 : vector<1x1x32xbf16> to vector<1x1x1x32xbf16>
    %120 = vector.extract_strided_slice %106 {offsets = [0, 2, 0, 0], sizes = [1, 8, 8, 32], strides = [1, 1, 1, 1]} : vector<1x14x8x32xbf16> to vector<1x8x8x32xbf16>
    %121 = vector.broadcast %119 : vector<1x1x1x32xbf16> to vector<1x8x8x32xbf16>
    %122 = arith.mulf %120, %121 : vector<1x8x8x32xbf16>
    %123 = arith.addf %117, %122 : vector<1x8x8x32xbf16>
    %124 = vector.extract_strided_slice %11 {offsets = [3, 2, 0], sizes = [1, 1, 32], strides = [1, 1, 1]} : vector<7x7x32xbf16> to vector<1x1x32xbf16>
    %125 = vector.shape_cast %124 : vector<1x1x32xbf16> to vector<1x1x1x32xbf16>
    %126 = vector.extract_strided_slice %106 {offsets = [0, 3, 0, 0], sizes = [1, 8, 8, 32], strides = [1, 1, 1, 1]} : vector<1x14x8x32xbf16> to vector<1x8x8x32xbf16>
    %127 = vector.broadcast %125 : vector<1x1x1x32xbf16> to vector<1x8x8x32xbf16>
    %128 = arith.mulf %126, %127 : vector<1x8x8x32xbf16>
    %129 = arith.addf %123, %128 : vector<1x8x8x32xbf16>
    %130 = vector.extract_strided_slice %11 {offsets = [4, 2, 0], sizes = [1, 1, 32], strides = [1, 1, 1]} : vector<7x7x32xbf16> to vector<1x1x32xbf16>
    %131 = vector.shape_cast %130 : vector<1x1x32xbf16> to vector<1x1x1x32xbf16>
    %132 = vector.extract_strided_slice %106 {offsets = [0, 4, 0, 0], sizes = [1, 8, 8, 32], strides = [1, 1, 1, 1]} : vector<1x14x8x32xbf16> to vector<1x8x8x32xbf16>
    %133 = vector.broadcast %131 : vector<1x1x1x32xbf16> to vector<1x8x8x32xbf16>
    %134 = arith.mulf %132, %133 : vector<1x8x8x32xbf16>
    %135 = arith.addf %129, %134 : vector<1x8x8x32xbf16>
    %136 = vector.extract_strided_slice %11 {offsets = [5, 2, 0], sizes = [1, 1, 32], strides = [1, 1, 1]} : vector<7x7x32xbf16> to vector<1x1x32xbf16>
    %137 = vector.shape_cast %136 : vector<1x1x32xbf16> to vector<1x1x1x32xbf16>
    %138 = vector.extract_strided_slice %106 {offsets = [0, 5, 0, 0], sizes = [1, 8, 8, 32], strides = [1, 1, 1, 1]} : vector<1x14x8x32xbf16> to vector<1x8x8x32xbf16>
    %139 = vector.broadcast %137 : vector<1x1x1x32xbf16> to vector<1x8x8x32xbf16>
    %140 = arith.mulf %138, %139 : vector<1x8x8x32xbf16>
    %141 = arith.addf %135, %140 : vector<1x8x8x32xbf16>
    %142 = vector.extract_strided_slice %11 {offsets = [6, 2, 0], sizes = [1, 1, 32], strides = [1, 1, 1]} : vector<7x7x32xbf16> to vector<1x1x32xbf16>
    %143 = vector.shape_cast %142 : vector<1x1x32xbf16> to vector<1x1x1x32xbf16>
    %144 = vector.extract_strided_slice %106 {offsets = [0, 6, 0, 0], sizes = [1, 8, 8, 32], strides = [1, 1, 1, 1]} : vector<1x14x8x32xbf16> to vector<1x8x8x32xbf16>
    %145 = vector.broadcast %143 : vector<1x1x1x32xbf16> to vector<1x8x8x32xbf16>
    %146 = arith.mulf %144, %145 : vector<1x8x8x32xbf16>
    %147 = arith.addf %141, %146 : vector<1x8x8x32xbf16>
    %148 = arith.extf %147 : vector<1x8x8x32xbf16> to vector<1x8x8x32xf32>
    %149 = arith.addf %104, %148 : vector<1x8x8x32xf32>
    %c0_39 = arith.constant 0 : index
    %c0_40 = arith.constant 0 : index
    %c3_41 = arith.constant 3 : index
    %c0_42 = arith.constant 0 : index
    %150 = vector.load %arg13[%c0_39, %c0_40, %c3_41, %c0_42] : memref<1x14x14x32xf32, #tpu.memory_space<vmem>>, vector<1x14x8x32xf32>
    %151 = arith.truncf %150 : vector<1x14x8x32xf32> to vector<1x14x8x32xbf16>
    %152 = vector.extract_strided_slice %11 {offsets = [0, 3, 0], sizes = [1, 1, 32], strides = [1, 1, 1]} : vector<7x7x32xbf16> to vector<1x1x32xbf16>
    %153 = vector.shape_cast %152 : vector<1x1x32xbf16> to vector<1x1x1x32xbf16>
    %154 = vector.extract_strided_slice %151 {offsets = [0, 0, 0, 0], sizes = [1, 8, 8, 32], strides = [1, 1, 1, 1]} : vector<1x14x8x32xbf16> to vector<1x8x8x32xbf16>
    %155 = vector.broadcast %153 : vector<1x1x1x32xbf16> to vector<1x8x8x32xbf16>
    %156 = arith.mulf %154, %155 : vector<1x8x8x32xbf16>
    %157 = vector.extract_strided_slice %11 {offsets = [1, 3, 0], sizes = [1, 1, 32], strides = [1, 1, 1]} : vector<7x7x32xbf16> to vector<1x1x32xbf16>
    %158 = vector.shape_cast %157 : vector<1x1x32xbf16> to vector<1x1x1x32xbf16>
    %159 = vector.extract_strided_slice %151 {offsets = [0, 1, 0, 0], sizes = [1, 8, 8, 32], strides = [1, 1, 1, 1]} : vector<1x14x8x32xbf16> to vector<1x8x8x32xbf16>
    %160 = vector.broadcast %158 : vector<1x1x1x32xbf16> to vector<1x8x8x32xbf16>
    %161 = arith.mulf %159, %160 : vector<1x8x8x32xbf16>
    %162 = arith.addf %156, %161 : vector<1x8x8x32xbf16>
    %163 = vector.extract_strided_slice %11 {offsets = [2, 3, 0], sizes = [1, 1, 32], strides = [1, 1, 1]} : vector<7x7x32xbf16> to vector<1x1x32xbf16>
    %164 = vector.shape_cast %163 : vector<1x1x32xbf16> to vector<1x1x1x32xbf16>
    %165 = vector.extract_strided_slice %151 {offsets = [0, 2, 0, 0], sizes = [1, 8, 8, 32], strides = [1, 1, 1, 1]} : vector<1x14x8x32xbf16> to vector<1x8x8x32xbf16>
    %166 = vector.broadcast %164 : vector<1x1x1x32xbf16> to vector<1x8x8x32xbf16>
    %167 = arith.mulf %165, %166 : vector<1x8x8x32xbf16>
    %168 = arith.addf %162, %167 : vector<1x8x8x32xbf16>
    %169 = vector.extract_strided_slice %11 {offsets = [3, 3, 0], sizes = [1, 1, 32], strides = [1, 1, 1]} : vector<7x7x32xbf16> to vector<1x1x32xbf16>
    %170 = vector.shape_cast %169 : vector<1x1x32xbf16> to vector<1x1x1x32xbf16>
    %171 = vector.extract_strided_slice %151 {offsets = [0, 3, 0, 0], sizes = [1, 8, 8, 32], strides = [1, 1, 1, 1]} : vector<1x14x8x32xbf16> to vector<1x8x8x32xbf16>
    %172 = vector.broadcast %170 : vector<1x1x1x32xbf16> to vector<1x8x8x32xbf16>
    %173 = arith.mulf %171, %172 : vector<1x8x8x32xbf16>
    %174 = arith.addf %168, %173 : vector<1x8x8x32xbf16>
    %175 = vector.extract_strided_slice %11 {offsets = [4, 3, 0], sizes = [1, 1, 32], strides = [1, 1, 1]} : vector<7x7x32xbf16> to vector<1x1x32xbf16>
    %176 = vector.shape_cast %175 : vector<1x1x32xbf16> to vector<1x1x1x32xbf16>
    %177 = vector.extract_strided_slice %151 {offsets = [0, 4, 0, 0], sizes = [1, 8, 8, 32], strides = [1, 1, 1, 1]} : vector<1x14x8x32xbf16> to vector<1x8x8x32xbf16>
    %178 = vector.broadcast %176 : vector<1x1x1x32xbf16> to vector<1x8x8x32xbf16>
    %179 = arith.mulf %177, %178 : vector<1x8x8x32xbf16>
    %180 = arith.addf %174, %179 : vector<1x8x8x32xbf16>
    %181 = vector.extract_strided_slice %11 {offsets = [5, 3, 0], sizes = [1, 1, 32], strides = [1, 1, 1]} : vector<7x7x32xbf16> to vector<1x1x32xbf16>
    %182 = vector.shape_cast %181 : vector<1x1x32xbf16> to vector<1x1x1x32xbf16>
    %183 = vector.extract_strided_slice %151 {offsets = [0, 5, 0, 0], sizes = [1, 8, 8, 32], strides = [1, 1, 1, 1]} : vector<1x14x8x32xbf16> to vector<1x8x8x32xbf16>
    %184 = vector.broadcast %182 : vector<1x1x1x32xbf16> to vector<1x8x8x32xbf16>
    %185 = arith.mulf %183, %184 : vector<1x8x8x32xbf16>
    %186 = arith.addf %180, %185 : vector<1x8x8x32xbf16>
    %187 = vector.extract_strided_slice %11 {offsets = [6, 3, 0], sizes = [1, 1, 32], strides = [1, 1, 1]} : vector<7x7x32xbf16> to vector<1x1x32xbf16>
    %188 = vector.shape_cast %187 : vector<1x1x32xbf16> to vector<1x1x1x32xbf16>
    %189 = vector.extract_strided_slice %151 {offsets = [0, 6, 0, 0], sizes = [1, 8, 8, 32], strides = [1, 1, 1, 1]} : vector<1x14x8x32xbf16> to vector<1x8x8x32xbf16>
    %190 = vector.broadcast %188 : vector<1x1x1x32xbf16> to vector<1x8x8x32xbf16>
    %191 = arith.mulf %189, %190 : vector<1x8x8x32xbf16>
    %192 = arith.addf %186, %191 : vector<1x8x8x32xbf16>
    %193 = arith.extf %192 : vector<1x8x8x32xbf16> to vector<1x8x8x32xf32>
    %194 = arith.addf %149, %193 : vector<1x8x8x32xf32>
    %c0_43 = arith.constant 0 : index
    %c0_44 = arith.constant 0 : index
    %c4 = arith.constant 4 : index
    %c0_45 = arith.constant 0 : index
    %195 = vector.load %arg13[%c0_43, %c0_44, %c4, %c0_45] : memref<1x14x14x32xf32, #tpu.memory_space<vmem>>, vector<1x14x8x32xf32>
    %196 = arith.truncf %195 : vector<1x14x8x32xf32> to vector<1x14x8x32xbf16>
    %197 = vector.extract_strided_slice %11 {offsets = [0, 4, 0], sizes = [1, 1, 32], strides = [1, 1, 1]} : vector<7x7x32xbf16> to vector<1x1x32xbf16>
    %198 = vector.shape_cast %197 : vector<1x1x32xbf16> to vector<1x1x1x32xbf16>
    %199 = vector.extract_strided_slice %196 {offsets = [0, 0, 0, 0], sizes = [1, 8, 8, 32], strides = [1, 1, 1, 1]} : vector<1x14x8x32xbf16> to vector<1x8x8x32xbf16>
    %200 = vector.broadcast %198 : vector<1x1x1x32xbf16> to vector<1x8x8x32xbf16>
    %201 = arith.mulf %199, %200 : vector<1x8x8x32xbf16>
    %202 = vector.extract_strided_slice %11 {offsets = [1, 4, 0], sizes = [1, 1, 32], strides = [1, 1, 1]} : vector<7x7x32xbf16> to vector<1x1x32xbf16>
    %203 = vector.shape_cast %202 : vector<1x1x32xbf16> to vector<1x1x1x32xbf16>
    %204 = vector.extract_strided_slice %196 {offsets = [0, 1, 0, 0], sizes = [1, 8, 8, 32], strides = [1, 1, 1, 1]} : vector<1x14x8x32xbf16> to vector<1x8x8x32xbf16>
    %205 = vector.broadcast %203 : vector<1x1x1x32xbf16> to vector<1x8x8x32xbf16>
    %206 = arith.mulf %204, %205 : vector<1x8x8x32xbf16>
    %207 = arith.addf %201, %206 : vector<1x8x8x32xbf16>
    %208 = vector.extract_strided_slice %11 {offsets = [2, 4, 0], sizes = [1, 1, 32], strides = [1, 1, 1]} : vector<7x7x32xbf16> to vector<1x1x32xbf16>
    %209 = vector.shape_cast %208 : vector<1x1x32xbf16> to vector<1x1x1x32xbf16>
    %210 = vector.extract_strided_slice %196 {offsets = [0, 2, 0, 0], sizes = [1, 8, 8, 32], strides = [1, 1, 1, 1]} : vector<1x14x8x32xbf16> to vector<1x8x8x32xbf16>
    %211 = vector.broadcast %209 : vector<1x1x1x32xbf16> to vector<1x8x8x32xbf16>
    %212 = arith.mulf %210, %211 : vector<1x8x8x32xbf16>
    %213 = arith.addf %207, %212 : vector<1x8x8x32xbf16>
    %214 = vector.extract_strided_slice %11 {offsets = [3, 4, 0], sizes = [1, 1, 32], strides = [1, 1, 1]} : vector<7x7x32xbf16> to vector<1x1x32xbf16>
    %215 = vector.shape_cast %214 : vector<1x1x32xbf16> to vector<1x1x1x32xbf16>
    %216 = vector.extract_strided_slice %196 {offsets = [0, 3, 0, 0], sizes = [1, 8, 8, 32], strides = [1, 1, 1, 1]} : vector<1x14x8x32xbf16> to vector<1x8x8x32xbf16>
    %217 = vector.broadcast %215 : vector<1x1x1x32xbf16> to vector<1x8x8x32xbf16>
    %218 = arith.mulf %216, %217 : vector<1x8x8x32xbf16>
    %219 = arith.addf %213, %218 : vector<1x8x8x32xbf16>
    %220 = vector.extract_strided_slice %11 {offsets = [4, 4, 0], sizes = [1, 1, 32], strides = [1, 1, 1]} : vector<7x7x32xbf16> to vector<1x1x32xbf16>
    %221 = vector.shape_cast %220 : vector<1x1x32xbf16> to vector<1x1x1x32xbf16>
    %222 = vector.extract_strided_slice %196 {offsets = [0, 4, 0, 0], sizes = [1, 8, 8, 32], strides = [1, 1, 1, 1]} : vector<1x14x8x32xbf16> to vector<1x8x8x32xbf16>
    %223 = vector.broadcast %221 : vector<1x1x1x32xbf16> to vector<1x8x8x32xbf16>
    %224 = arith.mulf %222, %223 : vector<1x8x8x32xbf16>
    %225 = arith.addf %219, %224 : vector<1x8x8x32xbf16>
    %226 = vector.extract_strided_slice %11 {offsets = [5, 4, 0], sizes = [1, 1, 32], strides = [1, 1, 1]} : vector<7x7x32xbf16> to vector<1x1x32xbf16>
    %227 = vector.shape_cast %226 : vector<1x1x32xbf16> to vector<1x1x1x32xbf16>
    %228 = vector.extract_strided_slice %196 {offsets = [0, 5, 0, 0], sizes = [1, 8, 8, 32], strides = [1, 1, 1, 1]} : vector<1x14x8x32xbf16> to vector<1x8x8x32xbf16>
    %229 = vector.broadcast %227 : vector<1x1x1x32xbf16> to vector<1x8x8x32xbf16>
    %230 = arith.mulf %228, %229 : vector<1x8x8x32xbf16>
    %231 = arith.addf %225, %230 : vector<1x8x8x32xbf16>
    %232 = vector.extract_strided_slice %11 {offsets = [6, 4, 0], sizes = [1, 1, 32], strides = [1, 1, 1]} : vector<7x7x32xbf16> to vector<1x1x32xbf16>
    %233 = vector.shape_cast %232 : vector<1x1x32xbf16> to vector<1x1x1x32xbf16>
    %234 = vector.extract_strided_slice %196 {offsets = [0, 6, 0, 0], sizes = [1, 8, 8, 32], strides = [1, 1, 1, 1]} : vector<1x14x8x32xbf16> to vector<1x8x8x32xbf16>
    %235 = vector.broadcast %233 : vector<1x1x1x32xbf16> to vector<1x8x8x32xbf16>
    %236 = arith.mulf %234, %235 : vector<1x8x8x32xbf16>
    %237 = arith.addf %231, %236 : vector<1x8x8x32xbf16>
    %238 = arith.extf %237 : vector<1x8x8x32xbf16> to vector<1x8x8x32xf32>
    %239 = arith.addf %194, %238 : vector<1x8x8x32xf32>
    %c0_46 = arith.constant 0 : index
    %c0_47 = arith.constant 0 : index
    %c5 = arith.constant 5 : index
    %c0_48 = arith.constant 0 : index
    %240 = vector.load %arg13[%c0_46, %c0_47, %c5, %c0_48] : memref<1x14x14x32xf32, #tpu.memory_space<vmem>>, vector<1x14x8x32xf32>
    %241 = arith.truncf %240 : vector<1x14x8x32xf32> to vector<1x14x8x32xbf16>
    %242 = vector.extract_strided_slice %11 {offsets = [0, 5, 0], sizes = [1, 1, 32], strides = [1, 1, 1]} : vector<7x7x32xbf16> to vector<1x1x32xbf16>
    %243 = vector.shape_cast %242 : vector<1x1x32xbf16> to vector<1x1x1x32xbf16>
    %244 = vector.extract_strided_slice %241 {offsets = [0, 0, 0, 0], sizes = [1, 8, 8, 32], strides = [1, 1, 1, 1]} : vector<1x14x8x32xbf16> to vector<1x8x8x32xbf16>
    %245 = vector.broadcast %243 : vector<1x1x1x32xbf16> to vector<1x8x8x32xbf16>
    %246 = arith.mulf %244, %245 : vector<1x8x8x32xbf16>
    %247 = vector.extract_strided_slice %11 {offsets = [1, 5, 0], sizes = [1, 1, 32], strides = [1, 1, 1]} : vector<7x7x32xbf16> to vector<1x1x32xbf16>
    %248 = vector.shape_cast %247 : vector<1x1x32xbf16> to vector<1x1x1x32xbf16>
    %249 = vector.extract_strided_slice %241 {offsets = [0, 1, 0, 0], sizes = [1, 8, 8, 32], strides = [1, 1, 1, 1]} : vector<1x14x8x32xbf16> to vector<1x8x8x32xbf16>
    %250 = vector.broadcast %248 : vector<1x1x1x32xbf16> to vector<1x8x8x32xbf16>
    %251 = arith.mulf %249, %250 : vector<1x8x8x32xbf16>
    %252 = arith.addf %246, %251 : vector<1x8x8x32xbf16>
    %253 = vector.extract_strided_slice %11 {offsets = [2, 5, 0], sizes = [1, 1, 32], strides = [1, 1, 1]} : vector<7x7x32xbf16> to vector<1x1x32xbf16>
    %254 = vector.shape_cast %253 : vector<1x1x32xbf16> to vector<1x1x1x32xbf16>
    %255 = vector.extract_strided_slice %241 {offsets = [0, 2, 0, 0], sizes = [1, 8, 8, 32], strides = [1, 1, 1, 1]} : vector<1x14x8x32xbf16> to vector<1x8x8x32xbf16>
    %256 = vector.broadcast %254 : vector<1x1x1x32xbf16> to vector<1x8x8x32xbf16>
    %257 = arith.mulf %255, %256 : vector<1x8x8x32xbf16>
    %258 = arith.addf %252, %257 : vector<1x8x8x32xbf16>
    %259 = vector.extract_strided_slice %11 {offsets = [3, 5, 0], sizes = [1, 1, 32], strides = [1, 1, 1]} : vector<7x7x32xbf16> to vector<1x1x32xbf16>
    %260 = vector.shape_cast %259 : vector<1x1x32xbf16> to vector<1x1x1x32xbf16>
    %261 = vector.extract_strided_slice %241 {offsets = [0, 3, 0, 0], sizes = [1, 8, 8, 32], strides = [1, 1, 1, 1]} : vector<1x14x8x32xbf16> to vector<1x8x8x32xbf16>
    %262 = vector.broadcast %260 : vector<1x1x1x32xbf16> to vector<1x8x8x32xbf16>
    %263 = arith.mulf %261, %262 : vector<1x8x8x32xbf16>
    %264 = arith.addf %258, %263 : vector<1x8x8x32xbf16>
    %265 = vector.extract_strided_slice %11 {offsets = [4, 5, 0], sizes = [1, 1, 32], strides = [1, 1, 1]} : vector<7x7x32xbf16> to vector<1x1x32xbf16>
    %266 = vector.shape_cast %265 : vector<1x1x32xbf16> to vector<1x1x1x32xbf16>
    %267 = vector.extract_strided_slice %241 {offsets = [0, 4, 0, 0], sizes = [1, 8, 8, 32], strides = [1, 1, 1, 1]} : vector<1x14x8x32xbf16> to vector<1x8x8x32xbf16>
    %268 = vector.broadcast %266 : vector<1x1x1x32xbf16> to vector<1x8x8x32xbf16>
    %269 = arith.mulf %267, %268 : vector<1x8x8x32xbf16>
    %270 = arith.addf %264, %269 : vector<1x8x8x32xbf16>
    %271 = vector.extract_strided_slice %11 {offsets = [5, 5, 0], sizes = [1, 1, 32], strides = [1, 1, 1]} : vector<7x7x32xbf16> to vector<1x1x32xbf16>
    %272 = vector.shape_cast %271 : vector<1x1x32xbf16> to vector<1x1x1x32xbf16>
    %273 = vector.extract_strided_slice %241 {offsets = [0, 5, 0, 0], sizes = [1, 8, 8, 32], strides = [1, 1, 1, 1]} : vector<1x14x8x32xbf16> to vector<1x8x8x32xbf16>
    %274 = vector.broadcast %272 : vector<1x1x1x32xbf16> to vector<1x8x8x32xbf16>
    %275 = arith.mulf %273, %274 : vector<1x8x8x32xbf16>
    %276 = arith.addf %270, %275 : vector<1x8x8x32xbf16>
    %277 = vector.extract_strided_slice %11 {offsets = [6, 5, 0], sizes = [1, 1, 32], strides = [1, 1, 1]} : vector<7x7x32xbf16> to vector<1x1x32xbf16>
    %278 = vector.shape_cast %277 : vector<1x1x32xbf16> to vector<1x1x1x32xbf16>
    %279 = vector.extract_strided_slice %241 {offsets = [0, 6, 0, 0], sizes = [1, 8, 8, 32], strides = [1, 1, 1, 1]} : vector<1x14x8x32xbf16> to vector<1x8x8x32xbf16>
    %280 = vector.broadcast %278 : vector<1x1x1x32xbf16> to vector<1x8x8x32xbf16>
    %281 = arith.mulf %279, %280 : vector<1x8x8x32xbf16>
    %282 = arith.addf %276, %281 : vector<1x8x8x32xbf16>
    %283 = arith.extf %282 : vector<1x8x8x32xbf16> to vector<1x8x8x32xf32>
    %284 = arith.addf %239, %283 : vector<1x8x8x32xf32>
    %c0_49 = arith.constant 0 : index
    %c0_50 = arith.constant 0 : index
    %c6 = arith.constant 6 : index
    %c0_51 = arith.constant 0 : index
    %285 = vector.load %arg13[%c0_49, %c0_50, %c6, %c0_51] : memref<1x14x14x32xf32, #tpu.memory_space<vmem>>, vector<1x14x8x32xf32>
    %286 = arith.truncf %285 : vector<1x14x8x32xf32> to vector<1x14x8x32xbf16>
    %287 = vector.extract_strided_slice %11 {offsets = [0, 6, 0], sizes = [1, 1, 32], strides = [1, 1, 1]} : vector<7x7x32xbf16> to vector<1x1x32xbf16>
    %288 = vector.shape_cast %287 : vector<1x1x32xbf16> to vector<1x1x1x32xbf16>
    %289 = vector.extract_strided_slice %286 {offsets = [0, 0, 0, 0], sizes = [1, 8, 8, 32], strides = [1, 1, 1, 1]} : vector<1x14x8x32xbf16> to vector<1x8x8x32xbf16>
    %290 = vector.broadcast %288 : vector<1x1x1x32xbf16> to vector<1x8x8x32xbf16>
    %291 = arith.mulf %289, %290 : vector<1x8x8x32xbf16>
    %292 = vector.extract_strided_slice %11 {offsets = [1, 6, 0], sizes = [1, 1, 32], strides = [1, 1, 1]} : vector<7x7x32xbf16> to vector<1x1x32xbf16>
    %293 = vector.shape_cast %292 : vector<1x1x32xbf16> to vector<1x1x1x32xbf16>
    %294 = vector.extract_strided_slice %286 {offsets = [0, 1, 0, 0], sizes = [1, 8, 8, 32], strides = [1, 1, 1, 1]} : vector<1x14x8x32xbf16> to vector<1x8x8x32xbf16>
    %295 = vector.broadcast %293 : vector<1x1x1x32xbf16> to vector<1x8x8x32xbf16>
    %296 = arith.mulf %294, %295 : vector<1x8x8x32xbf16>
    %297 = arith.addf %291, %296 : vector<1x8x8x32xbf16>
    %298 = vector.extract_strided_slice %11 {offsets = [2, 6, 0], sizes = [1, 1, 32], strides = [1, 1, 1]} : vector<7x7x32xbf16> to vector<1x1x32xbf16>
    %299 = vector.shape_cast %298 : vector<1x1x32xbf16> to vector<1x1x1x32xbf16>
    %300 = vector.extract_strided_slice %286 {offsets = [0, 2, 0, 0], sizes = [1, 8, 8, 32], strides = [1, 1, 1, 1]} : vector<1x14x8x32xbf16> to vector<1x8x8x32xbf16>
    %301 = vector.broadcast %299 : vector<1x1x1x32xbf16> to vector<1x8x8x32xbf16>
    %302 = arith.mulf %300, %301 : vector<1x8x8x32xbf16>
    %303 = arith.addf %297, %302 : vector<1x8x8x32xbf16>
    %304 = vector.extract_strided_slice %11 {offsets = [3, 6, 0], sizes = [1, 1, 32], strides = [1, 1, 1]} : vector<7x7x32xbf16> to vector<1x1x32xbf16>
    %305 = vector.shape_cast %304 : vector<1x1x32xbf16> to vector<1x1x1x32xbf16>
    %306 = vector.extract_strided_slice %286 {offsets = [0, 3, 0, 0], sizes = [1, 8, 8, 32], strides = [1, 1, 1, 1]} : vector<1x14x8x32xbf16> to vector<1x8x8x32xbf16>
    %307 = vector.broadcast %305 : vector<1x1x1x32xbf16> to vector<1x8x8x32xbf16>
    %308 = arith.mulf %306, %307 : vector<1x8x8x32xbf16>
    %309 = arith.addf %303, %308 : vector<1x8x8x32xbf16>
    %310 = vector.extract_strided_slice %11 {offsets = [4, 6, 0], sizes = [1, 1, 32], strides = [1, 1, 1]} : vector<7x7x32xbf16> to vector<1x1x32xbf16>
    %311 = vector.shape_cast %310 : vector<1x1x32xbf16> to vector<1x1x1x32xbf16>
    %312 = vector.extract_strided_slice %286 {offsets = [0, 4, 0, 0], sizes = [1, 8, 8, 32], strides = [1, 1, 1, 1]} : vector<1x14x8x32xbf16> to vector<1x8x8x32xbf16>
    %313 = vector.broadcast %311 : vector<1x1x1x32xbf16> to vector<1x8x8x32xbf16>
    %314 = arith.mulf %312, %313 : vector<1x8x8x32xbf16>
    %315 = arith.addf %309, %314 : vector<1x8x8x32xbf16>
    %316 = vector.extract_strided_slice %11 {offsets = [5, 6, 0], sizes = [1, 1, 32], strides = [1, 1, 1]} : vector<7x7x32xbf16> to vector<1x1x32xbf16>
    %317 = vector.shape_cast %316 : vector<1x1x32xbf16> to vector<1x1x1x32xbf16>
    %318 = vector.extract_strided_slice %286 {offsets = [0, 5, 0, 0], sizes = [1, 8, 8, 32], strides = [1, 1, 1, 1]} : vector<1x14x8x32xbf16> to vector<1x8x8x32xbf16>
    %319 = vector.broadcast %317 : vector<1x1x1x32xbf16> to vector<1x8x8x32xbf16>
    %320 = arith.mulf %318, %319 : vector<1x8x8x32xbf16>
    %321 = arith.addf %315, %320 : vector<1x8x8x32xbf16>
    %322 = vector.extract_strided_slice %11 {offsets = [6, 6, 0], sizes = [1, 1, 32], strides = [1, 1, 1]} : vector<7x7x32xbf16> to vector<1x1x32xbf16>
    %323 = vector.shape_cast %322 : vector<1x1x32xbf16> to vector<1x1x1x32xbf16>
    %324 = vector.extract_strided_slice %286 {offsets = [0, 6, 0, 0], sizes = [1, 8, 8, 32], strides = [1, 1, 1, 1]} : vector<1x14x8x32xbf16> to vector<1x8x8x32xbf16>
    %325 = vector.broadcast %323 : vector<1x1x1x32xbf16> to vector<1x8x8x32xbf16>
    %326 = arith.mulf %324, %325 : vector<1x8x8x32xbf16>
    %327 = arith.addf %321, %326 : vector<1x8x8x32xbf16>
    %328 = arith.extf %327 : vector<1x8x8x32xbf16> to vector<1x8x8x32xf32>
    %329 = arith.addf %284, %328 : vector<1x8x8x32xf32>
    %cst_52 = arith.constant dense<0.000000e+00> : vector<1x8x8xf32>
    %330 = vector.multi_reduction <add>, %329, %cst_52 [3] : vector<1x8x8x32xf32> to vector<1x8x8xf32>
    %331 = vector.shape_cast %330 : vector<1x8x8xf32> to vector<1x8x8x1xf32>
    %cst_53 = arith.constant 3.200000e+01 : f32
    %332 = vector.broadcast %cst_53 : f32 to vector<1x8x8x1xf32>
    %333 = arith.divf %331, %332 : vector<1x8x8x1xf32>
    %334 = vector.broadcast %333 : vector<1x8x8x1xf32> to vector<1x8x8x32xf32>
    %335 = arith.subf %329, %334 : vector<1x8x8x32xf32>
    %336 = arith.mulf %335, %335 : vector<1x8x8x32xf32>
    %cst_54 = arith.constant dense<0.000000e+00> : vector<1x8x8xf32>
    %337 = vector.multi_reduction <add>, %336, %cst_54 [3] : vector<1x8x8x32xf32> to vector<1x8x8xf32>
    %338 = vector.shape_cast %337 : vector<1x8x8xf32> to vector<1x8x8x1xf32>
    %cst_55 = arith.constant 3.200000e+01 : f32
    %339 = vector.broadcast %cst_55 : f32 to vector<1x8x8x1xf32>
    %340 = arith.divf %338, %339 : vector<1x8x8x1xf32>
    %cst_56 = arith.constant 9.99999997E-7 : f32
    %341 = vector.broadcast %cst_56 : f32 to vector<1x8x8x1xf32>
    %342 = arith.addf %340, %341 : vector<1x8x8x1xf32>
    %343 = math.rsqrt %342 : vector<1x8x8x1xf32>
    %344 = vector.broadcast %343 : vector<1x8x8x1xf32> to vector<1x8x8x32xf32>
    %345 = arith.mulf %335, %344 : vector<1x8x8x32xf32>
    %c0_57 = arith.constant 0 : index
    %c0_58 = arith.constant 0 : index
    %346 = vector.load %arg4[%c0_57, %c0_58] : memref<1x32xf32, #tpu.memory_space<vmem>>, vector<1x32xf32>
    %347 = vector.shape_cast %346 : vector<1x32xf32> to vector<1x1x1x32xf32>
    %348 = vector.broadcast %347 : vector<1x1x1x32xf32> to vector<1x8x8x32xf32>
    %349 = arith.mulf %345, %348 : vector<1x8x8x32xf32>
    %c0_59 = arith.constant 0 : index
    %c0_60 = arith.constant 0 : index
    %350 = vector.load %arg5[%c0_59, %c0_60] : memref<1x32xf32, #tpu.memory_space<vmem>>, vector<1x32xf32>
    %351 = vector.shape_cast %350 : vector<1x32xf32> to vector<1x1x1x32xf32>
    %352 = vector.broadcast %351 : vector<1x1x1x32xf32> to vector<1x8x8x32xf32>
    %353 = arith.addf %349, %352 : vector<1x8x8x32xf32>
    %354 = vector.shape_cast %353 : vector<1x8x8x32xf32> to vector<64x32xf32>
    %355 = arith.truncf %354 : vector<64x32xf32> to vector<64x32xbf16>
    %c0_61 = arith.constant 0 : index
    %c0_62 = arith.constant 0 : index
    %356 = vector.load %arg6[%c0_61, %c0_62] : memref<32x128xbf16, #tpu.memory_space<vmem>>, vector<32x128xbf16>
    %cst_63 = arith.constant dense<0.000000e+00> : vector<64x128xf32>
    %357 = tpu.matmul %355, %356, %cst_63 {dimension_numbers = #tpu.dot_dimension_numbers<[1], [0], [0], [1], [0, 0, 1, 1], [], []>} : vector<64x32xbf16>, vector<32x128xbf16>, vector<64x128xf32> -> vector<64x128xf32>
    %c0_64 = arith.constant 0 : index
    %c0_65 = arith.constant 0 : index
    %358 = vector.load %arg7[%c0_64, %c0_65] : memref<1x128xf32, #tpu.memory_space<vmem>>, vector<1x128xf32>
    %359 = vector.broadcast %358 : vector<1x128xf32> to vector<64x128xf32>
    %360 = arith.addf %357, %359 : vector<64x128xf32>
    %361 = arith.mulf %360, %360 : vector<64x128xf32>
    %362 = arith.mulf %360, %361 : vector<64x128xf32>
    %cst_66 = arith.constant 4.471500e-02 : f32
    %363 = vector.broadcast %cst_66 : f32 to vector<64x128xf32>
    %364 = arith.mulf %363, %362 : vector<64x128xf32>
    %365 = arith.addf %360, %364 : vector<64x128xf32>
    %cst_67 = arith.constant 0.797884583 : f32
    %366 = vector.broadcast %cst_67 : f32 to vector<64x128xf32>
    %367 = arith.mulf %366, %365 : vector<64x128xf32>
    %368 = math.tanh %367 : vector<64x128xf32>
    %cst_68 = arith.constant 1.000000e+00 : f32
    %369 = vector.broadcast %cst_68 : f32 to vector<64x128xf32>
    %370 = arith.addf %369, %368 : vector<64x128xf32>
    %cst_69 = arith.constant 5.000000e-01 : f32
    %371 = vector.broadcast %cst_69 : f32 to vector<64x128xf32>
    %372 = arith.mulf %371, %370 : vector<64x128xf32>
    %373 = arith.mulf %360, %372 : vector<64x128xf32>
    %374 = arith.truncf %373 : vector<64x128xf32> to vector<64x128xbf16>
    %375 = vector.shape_cast %374 : vector<64x128xbf16> to vector<1x64x128xbf16>
    %376 = arith.mulf %375, %375 : vector<1x64x128xbf16>
    %cst_70 = arith.constant 1.000000e+00 : bf16
    %377 = vector.broadcast %cst_70 : bf16 to vector<1x1x64xbf16>
    "tpu.trace_start"() <{level = 10 : i32, message = "bon,bnc->boc"}> : () -> ()
    %cst_71 = arith.constant dense<0.000000e+00> : vector<1x1x128xf32>
    %378 = tpu.matmul %377, %376, %cst_71 {dimension_numbers = #tpu.dot_dimension_numbers<[2], [1], [1], [2], [0, 0, 0, 1, 1, 2], [0], [0]>} : vector<1x1x64xbf16>, vector<1x64x128xbf16>, vector<1x1x128xf32> -> vector<1x1x128xf32>
    "tpu.trace_stop"() : () -> ()
    %379 = math.sqrt %378 : vector<1x1x128xf32>
    %cst_72 = arith.constant dense<0.000000e+00> : vector<1x1xf32>
    %380 = vector.multi_reduction <add>, %379, %cst_72 [2] : vector<1x1x128xf32> to vector<1x1xf32>
    %381 = vector.shape_cast %380 : vector<1x1xf32> to vector<1x1x1xf32>
    %cst_73 = arith.constant 1.280000e+02 : f32
    %382 = vector.broadcast %cst_73 : f32 to vector<1x1x1xf32>
    %383 = arith.divf %381, %382 : vector<1x1x1xf32>
    %cst_74 = arith.constant 9.99999997E-7 : f32
    %384 = vector.broadcast %cst_74 : f32 to vector<1x1x1xf32>
    %385 = arith.addf %383, %384 : vector<1x1x1xf32>
    %386 = vector.broadcast %385 : vector<1x1x1xf32> to vector<1x1x128xf32>
    %387 = arith.divf %379, %386 : vector<1x1x128xf32>
    %c0_75 = arith.constant 0 : index
    %c0_76 = arith.constant 0 : index
    %388 = vector.load %arg8[%c0_75, %c0_76] : memref<1x128xf32, #tpu.memory_space<vmem>>, vector<1x128xf32>
    %389 = vector.shape_cast %388 : vector<1x128xf32> to vector<1x1x128xf32>
    %390 = arith.truncf %389 : vector<1x1x128xf32> to vector<1x1x128xbf16>
    %c0_77 = arith.constant 0 : index
    %c0_78 = arith.constant 0 : index
    %391 = vector.load %arg9[%c0_77, %c0_78] : memref<1x128xf32, #tpu.memory_space<vmem>>, vector<1x128xf32>
    %392 = vector.shape_cast %391 : vector<1x128xf32> to vector<1x1x128xf32>
    %393 = arith.truncf %392 : vector<1x1x128xf32> to vector<1x1x128xbf16>
    %394 = arith.truncf %387 : vector<1x1x128xf32> to vector<1x1x128xbf16>
    %395 = vector.broadcast %394 : vector<1x1x128xbf16> to vector<1x64x128xbf16>
    %396 = arith.mulf %375, %395 : vector<1x64x128xbf16>
    %397 = vector.broadcast %390 : vector<1x1x128xbf16> to vector<1x64x128xbf16>
    %398 = arith.mulf %397, %396 : vector<1x64x128xbf16>
    %399 = vector.broadcast %393 : vector<1x1x128xbf16> to vector<1x64x128xbf16>
    %400 = arith.addf %398, %399 : vector<1x64x128xbf16>
    %401 = arith.addf %400, %375 : vector<1x64x128xbf16>
    %402 = vector.shape_cast %401 : vector<1x64x128xbf16> to vector<64x128xbf16>
    %c0_79 = arith.constant 0 : index
    %c0_80 = arith.constant 0 : index
    %403 = vector.load %arg10[%c0_79, %c0_80] : memref<128x32xbf16, #tpu.memory_space<vmem>>, vector<128x32xbf16>
    %cst_81 = arith.constant dense<0.000000e+00> : vector<64x32xf32>
    %404 = tpu.matmul %402, %403, %cst_81 {dimension_numbers = #tpu.dot_dimension_numbers<[1], [0], [0], [1], [0, 0, 1, 1], [], []>} : vector<64x128xbf16>, vector<128x32xbf16>, vector<64x32xf32> -> vector<64x32xf32>
    %c0_82 = arith.constant 0 : index
    %c0_83 = arith.constant 0 : index
    %405 = vector.load %arg11[%c0_82, %c0_83] : memref<1x32xf32, #tpu.memory_space<vmem>>, vector<1x32xf32>
    %406 = vector.broadcast %405 : vector<1x32xf32> to vector<64x32xf32>
    %407 = arith.addf %404, %406 : vector<64x32xf32>
    %c0_84 = arith.constant 0 : index
    %c0_85 = arith.constant 0 : index
    %c0_86 = arith.constant 0 : index
    %c0_87 = arith.constant 0 : index
    %408 = vector.load %arg1[%c0_84, %c0_85, %c0_86, %c0_87] : memref<1x8x8x32xf32, #tpu.memory_space<vmem>>, vector<1x8x8x32xf32>
    %409 = vector.shape_cast %407 : vector<64x32xf32> to vector<1x8x8x32xf32>
    %410 = arith.addf %408, %409 : vector<1x8x8x32xf32>
    %c0_88 = arith.constant 0 : index
    %c0_89 = arith.constant 0 : index
    %c0_90 = arith.constant 0 : index
    %c0_91 = arith.constant 0 : index
    %411 = vector.load %arg12[%c0_88, %c0_89, %c0_90, %c0_91] : memref<1x8x8x32xf32, #tpu.memory_space<vmem>>, vector<1x8x8x32xf32>
    tpu.vector_store %arg12[%c0_88, %c0_89, %c0_90, %c0_91], %410 {strides = array<i32>} : memref<1x8x8x32xf32, #tpu.memory_space<vmem>>, vector<1x8x8x32xf32>,
    return
  }
  func.func @transform_0(%arg0: i32) -> (i32, i32, i32, i32) {
    %c0_i32 = arith.constant 0 : i32
    %c0_i32_0 = arith.constant 0 : i32
    %c0_i32_1 = arith.constant 0 : i32
    %c0_i32_2 = arith.constant 0 : i32
    return %arg0, %c0_i32, %c0_i32_0, %c0_i32_1 : i32, i32, i32, i32
  }
  func.func @transform_1(%arg0: i32) -> (i32, i32, i32) {
    %c0_i32 = arith.constant 0 : i32
    %c0_i32_0 = arith.constant 0 : i32
    %c0_i32_1 = arith.constant 0 : i32
    %c0_i32_2 = arith.constant 0 : i32
    return %c0_i32, %c0_i32_0, %c0_i32_1 : i32, i32, i32
  }
  func.func @transform_2(%arg0: i32) -> (i32, i32) {
    %c0_i32 = arith.constant 0 : i32
    %c0_i32_0 = arith.constant 0 : i32
    %c0_i32_1 = arith.constant 0 : i32
    return %c0_i32, %c0_i32_0 : i32, i32
  }
  func.func @transform_3(%arg0: i32) -> (i32, i32) {
    %c0_i32 = arith.constant 0 : i32
    %c0_i32_0 = arith.constant 0 : i32
    %c0_i32_1 = arith.constant 0 : i32
    return %c0_i32, %c0_i32_0 : i32, i32
  }
  func.func @transform_4(%arg0: i32) -> (i32, i32) {
    %c0_i32 = arith.constant 0 : i32
    %c0_i32_0 = arith.constant 0 : i32
    %c0_i32_1 = arith.constant 0 : i32
    return %c0_i32, %c0_i32_0 : i32, i32
  }
  func.func @transform_5(%arg0: i32) -> (i32, i32) {
    %c0_i32 = arith.constant 0 : i32
    %c0_i32_0 = arith.constant 0 : i32
    %c0_i32_1 = arith.constant 0 : i32
    return %c0_i32, %c0_i32_0 : i32, i32
  }
  func.func @transform_6(%arg0: i32) -> (i32, i32) {
    %c0_i32 = arith.constant 0 : i32
    %c0_i32_0 = arith.constant 0 : i32
    %c0_i32_1 = arith.constant 0 : i32
    return %c0_i32, %c0_i32_0 : i32, i32
  }
  func.func @transform_7(%arg0: i32) -> (i32, i32) {
    %c0_i32 = arith.constant 0 : i32
    %c0_i32_0 = arith.constant 0 : i32
    %c0_i32_1 = arith.constant 0 : i32
    return %c0_i32, %c0_i32_0 : i32, i32
  }
  func.func @transform_8(%arg0: i32) -> (i32, i32) {
    %c0_i32 = arith.constant 0 : i32
    %c0_i32_0 = arith.constant 0 : i32
    %c0_i32_1 = arith.constant 0 : i32
    return %c0_i32, %c0_i32_0 : i32, i32
  }
  func.func @transform_9(%arg0: i32) -> (i32, i32) {
    %c0_i32 = arith.constant 0 : i32
    %c0_i32_0 = arith.constant 0 : i32
    %c0_i32_1 = arith.constant 0 : i32
    return %c0_i32, %c0_i32_0 : i32, i32
  }
  func.func @transform_10(%arg0: i32) -> (i32, i32) {
    %c0_i32 = arith.constant 0 : i32
    %c0_i32_0 = arith.constant 0 : i32
    %c0_i32_1 = arith.constant 0 : i32
    return %c0_i32, %c0_i32_0 : i32, i32
  }
  func.func @transform_11(%arg0: i32) -> (i32, i32, i32, i32) {
    %c0_i32 = arith.constant 0 : i32
    %c0_i32_0 = arith.constant 0 : i32
    %c0_i32_1 = arith.constant 0 : i32
    %c0_i32_2 = arith.constant 0 : i32
    return %arg0, %c0_i32, %c0_i32_0, %c0_i32_1 : i32, i32, i32, i32
  }
}

</mosaic_0001>

<llo_original>
// kernel: tpu_custom_call.1
$region0: #{tpu_custom_call.1}
  #allocation0 [shape = 'u32[]', space=smem, size = 0x4, offset = 0x4, fixed_abs, tag = 'smem constant byte address 0x4 - core index']
  #allocation1 [shape = 'u32[144,128]{1,0:T(1,128)}', space=vmem, size = 0x12000, scoped, tag = 'internal scratch']
  #allocation2 [shape = 'f32[1,14,14,32]{3,2,1,0:T(8,128)}', space=vmem, size = 0x1c000, scoped, tag = 'scratch operand']
  %s0 = inlined_call_operand.hbm [shape: f32[2,8,8,32], index: 0, kind: input, shape index: {}]
  %s1 = inlined_call_operand.vmem [shape: f32[7,7,32], index: 1, kind: input, shape index: {}]
  %s2 = inlined_call_operand.vmem [shape: f32[1,32], index: 2, kind: input, shape index: {}]
  %s3 = inlined_call_operand.vmem [shape: f32[1,32], index: 3, kind: input, shape index: {}]
  %s4 = inlined_call_operand.vmem [shape: f32[1,32], index: 4, kind: input, shape index: {}]
  %s5 = inlined_call_operand.vmem [shape: bf16[32,128], index: 5, kind: input, shape index: {}]
  %s6 = inlined_call_operand.vmem [shape: f32[1,128], index: 6, kind: input, shape index: {}]
  %s7 = inlined_call_operand.vmem [shape: f32[1,128], index: 7, kind: input, shape index: {}]
  %s8 = inlined_call_operand.vmem [shape: f32[1,128], index: 8, kind: input, shape index: {}]
  %s9 = inlined_call_operand.vmem [shape: bf16[128,32], index: 9, kind: input, shape index: {}]
  %s10 = inlined_call_operand.vmem [shape: f32[1,32], index: 10, kind: input, shape index: {}]
  %s11 = inlined_call_operand.hbm [shape: f32[2,8,8,32], index: 11, kind: output, shape index: {}]
  %s12 = sld [smem:[#allocation0]]
  $region81: #{tpu_custom_call.1} parent=0
    _
  %s14 = ssub.s32 1, %s12
  %s15 = scalar_select 0, %s14, %s12
  $region1: #{tpu_custom_call.1} parent=0
    #allocation3 [shape = 'u8[65536]{0}', space=vmem, size = 0x10000, scoped, tag = 'input window, operand 0']
    #allocation4 [shape = 's32[2]{0}', space=sflag, size = 0x8, scoped, tag = 'scoped memory for tpu_custom_call.1']
    #allocation5 [shape = 's32[2]{0}', space=sflag, size = 0x8, scoped, tag = 'scoped memory for tpu_custom_call.1']
    #allocation6 [shape = 'u8[65536]{0}', space=vmem, size = 0x10000, scoped, tag = 'output window, operand 0']
    %16 = vsyncpa [#allocation4], 0
    %s17 = scalar_lea.sflag [#allocation4], 1
    %18 = vsyncpa %s17, 0
    %19 = vsyncpa [#allocation5], 0
    %s20 = scalar_lea.sflag [#allocation5], 1
    %21 = vsyncpa %s20, 0
    loop: start=0, step=1, limit=4
    $region2: #{tpu_custom_call.1} parent=1 // loop_pre_header
      _
    $region3: #{tpu_custom_call.1} parent=1 // loop_header
      %s23 = sphi 0, %s27
      %p24 = scmp.ge.s32.totalorder %s23, 4
      %s33 = sphi 0, %s35
      %s36 = sphi 0, %s33
      %s37 = sphi 0, %s36
      %s53 = sphi 0, %s37
      %s57 = sphi 0, %s57
      %s59 = sphi 0, %s57
      %s60 = sphi 0, %s59
      %s74 = sphi 0, %s60
      %s78 = sphi 0, %s78
      %s80 = sphi 0, %s78
      %s81 = sphi 0, %s80
      %s95 = sphi 0, %s81
      %s99 = sphi 0, %s99
      %s101 = sphi 0, %s99
      %s102 = sphi 0, %s101
      %s116 = sphi 0, %s102
      %s120 = sphi 0, %s120
      %s122 = sphi 0, %s120
      %s123 = sphi 0, %s122
      %s137 = sphi 0, %s123
      %s141 = sphi 0, %s141
      %s143 = sphi 0, %s141
      %s144 = sphi 0, %s143
      %s158 = sphi 0, %s144
      %s162 = sphi 0, %s162
      %s164 = sphi 0, %s162
      %s165 = sphi 0, %s164
      %s179 = sphi 0, %s165
      %s183 = sphi 0, %s183
      %s185 = sphi 0, %s183
      %s186 = sphi 0, %s185
      %s200 = sphi 0, %s186
      %s204 = sphi 0, %s204
      %s206 = sphi 0, %s204
      %s207 = sphi 0, %s206
      %s221 = sphi 0, %s207
      %s225 = sphi 0, %s225
      %s227 = sphi 0, %s225
      %s228 = sphi 0, %s227
      %s242 = sphi 0, %s228
      %s246 = sphi 0, %s246
      %s248 = sphi 0, %s246
      %s249 = sphi 0, %s248
      %s263 = sphi 0, %s249
      %s269 = sphi 0, %s271
      %s272 = sphi 0, %s269
      %s273 = sphi 0, %s272
      %s289 = sphi 0, %s273
    $region4: #{tpu_custom_call.1} parent=1 // loop_header_branch
      %26 = sbr.rel (%p24) target = $region8
    $region5: #{tpu_custom_call.1} parent=1 // loop_body
      %s28 = ssub.s32 %s23, 1
      %s29 = ssub.s32 %s23, 2
      %s30 = sadd.s32 %s23, 1
      %s31 = ssub.s32 %s23, %s30
      %p32 = scmp.eq.s32.totalorder %s31, 0
      %s34 = sadd.s32 %s33, 1
      %s35 = scalar_select %p32, %s33, %s34
      %p38 = pneg %p32
      %p39 = scmp.eq.s32.totalorder %s23, 1
      %p40 = por %p38, %p39
      %p41 = scmp.ne.s32.totalorder %s33, %s36
      %p42 = scmp.eq.s32.totalorder %s23, 0
      %p43 = por %p41, %p42
      %p44 = scmp.ne.s32.totalorder %s33, %s36
      %p45 = scmp.eq.s32.totalorder %s28, 1
      %p46 = por %p44, %p45
      %p47 = scmp.ne.s32.totalorder %s36, %s37
      %p48 = scmp.eq.s32.totalorder %s28, 0
      %p49 = por %p47, %p48
      %p50 = scmp.ne.s32.totalorder %s36, %s37
      %p51 = scmp.eq.s32.totalorder %s29, 1
      %p52 = por %p50, %p51
      %p54 = scmp.ne.s32.totalorder %s37, %s53
      %p55 = scmp.eq.s32.totalorder %s29, 0
      %p56 = por %p54, %p55
      %s58 = sadd.s32 %s57, 1
      %p61 = scmp.eq.s32.totalorder %s23, 1
      %p62 = scmp.ne.s32.totalorder %s57, %s59
      %p63 = scmp.eq.s32.totalorder %s23, 0
      %p64 = por %p62, %p63
      %p65 = scmp.ne.s32.totalorder %s57, %s59
      %p66 = scmp.eq.s32.totalorder %s28, 1
      %p67 = por %p65, %p66
      %p68 = scmp.ne.s32.totalorder %s59, %s60
      %p69 = scmp.eq.s32.totalorder %s28, 0
      %p70 = por %p68, %p69
      %p71 = scmp.ne.s32.totalorder %s59, %s60
      %p72 = scmp.eq.s32.totalorder %s29, 1
      %p73 = por %p71, %p72
      %p75 = scmp.ne.s32.totalorder %s60, %s74
      %p76 = scmp.eq.s32.totalorder %s29, 0
      %p77 = por %p75, %p76
      %s79 = sadd.s32 %s78, 1
      %p82 = scmp.eq.s32.totalorder %s23, 1
      %p83 = scmp.ne.s32.totalorder %s78, %s80
      %p84 = scmp.eq.s32.totalorder %s23, 0
      %p85 = por %p83, %p84
      %p86 = scmp.ne.s32.totalorder %s78, %s80
      %p87 = scmp.eq.s32.totalorder %s28, 1
      %p88 = por %p86, %p87
      %p89 = scmp.ne.s32.totalorder %s80, %s81
      %p90 = scmp.eq.s32.totalorder %s28, 0
      %p91 = por %p89, %p90
      %p92 = scmp.ne.s32.totalorder %s80, %s81
      %p93 = scmp.eq.s32.totalorder %s29, 1
      %p94 = por %p92, %p93
      %p96 = scmp.ne.s32.totalorder %s81, %s95
      %p97 = scmp.eq.s32.totalorder %s29, 0
      %p98 = por %p96, %p97
      %s100 = sadd.s32 %s99, 1
      %p103 = scmp.eq.s32.totalorder %s23, 1
      %p104 = scmp.ne.s32.totalorder %s99, %s101
      %p105 = scmp.eq.s32.totalorder %s23, 0
      %p106 = por %p104, %p105
      %p107 = scmp.ne.s32.totalorder %s99, %s101
      %p108 = scmp.eq.s32.totalorder %s28, 1
      %p109 = por %p107, %p108
      %p110 = scmp.ne.s32.totalorder %s101, %s102
      %p111 = scmp.eq.s32.totalorder %s28, 0
      %p112 = por %p110, %p111
      %p113 = scmp.ne.s32.totalorder %s101, %s102
      %p114 = scmp.eq.s32.totalorder %s29, 1
      %p115 = por %p113, %p114
      %p117 = scmp.ne.s32.totalorder %s102, %s116
      %p118 = scmp.eq.s32.totalorder %s29, 0
      %p119 = por %p117, %p118
      %s121 = sadd.s32 %s120, 1
      %p124 = scmp.eq.s32.totalorder %s23, 1
      %p125 = scmp.ne.s32.totalorder %s120, %s122
      %p126 = scmp.eq.s32.totalorder %s23, 0
      %p127 = por %p125, %p126
      %p128 = scmp.ne.s32.totalorder %s120, %s122
      %p129 = scmp.eq.s32.totalorder %s28, 1
      %p130 = por %p128, %p129
      %p131 = scmp.ne.s32.totalorder %s122, %s123
      %p132 = scmp.eq.s32.totalorder %s28, 0
      %p133 = por %p131, %p132
      %p134 = scmp.ne.s32.totalorder %s122, %s123
      %p135 = scmp.eq.s32.totalorder %s29, 1
      %p136 = por %p134, %p135
      %p138 = scmp.ne.s32.totalorder %s123, %s137
      %p139 = scmp.eq.s32.totalorder %s29, 0
      %p140 = por %p138, %p139
      %s142 = sadd.s32 %s141, 1
      %p145 = scmp.eq.s32.totalorder %s23, 1
      %p146 = scmp.ne.s32.totalorder %s141, %s143
      %p147 = scmp.eq.s32.totalorder %s23, 0
      %p148 = por %p146, %p147
      %p149 = scmp.ne.s32.totalorder %s141, %s143
      %p150 = scmp.eq.s32.totalorder %s28, 1
      %p151 = por %p149, %p150
      %p152 = scmp.ne.s32.totalorder %s143, %s144
      %p153 = scmp.eq.s32.totalorder %s28, 0
      %p154 = por %p152, %p153
      %p155 = scmp.ne.s32.totalorder %s143, %s144
      %p156 = scmp.eq.s32.totalorder %s29, 1
      %p157 = por %p155, %p156
      %p159 = scmp.ne.s32.totalorder %s144, %s158
      %p160 = scmp.eq.s32.totalorder %s29, 0
      %p161 = por %p159, %p160
      %s163 = sadd.s32 %s162, 1
      %p166 = scmp.eq.s32.totalorder %s23, 1
      %p167 = scmp.ne.s32.totalorder %s162, %s164
      %p168 = scmp.eq.s32.totalorder %s23, 0
      %p169 = por %p167, %p168
      %p170 = scmp.ne.s32.totalorder %s162, %s164
      %p171 = scmp.eq.s32.totalorder %s28, 1
      %p172 = por %p170, %p171
      %p173 = scmp.ne.s32.totalorder %s164, %s165
      %p174 = scmp.eq.s32.totalorder %s28, 0
      %p175 = por %p173, %p174
      %p176 = scmp.ne.s32.totalorder %s164, %s165
      %p177 = scmp.eq.s32.totalorder %s29, 1
      %p178 = por %p176, %p177
      %p180 = scmp.ne.s32.totalorder %s165, %s179
      %p181 = scmp.eq.s32.totalorder %s29, 0
      %p182 = por %p180, %p181
      %s184 = sadd.s32 %s183, 1
      %p187 = scmp.eq.s32.totalorder %s23, 1
      %p188 = scmp.ne.s32.totalorder %s183, %s185
      %p189 = scmp.eq.s32.totalorder %s23, 0
      %p190 = por %p188, %p189
      %p191 = scmp.ne.s32.totalorder %s183, %s185
      %p192 = scmp.eq.s32.totalorder %s28, 1
      %p193 = por %p191, %p192
      %p194 = scmp.ne.s32.totalorder %s185, %s186
      %p195 = scmp.eq.s32.totalorder %s28, 0
      %p196 = por %p194, %p195
      %p197 = scmp.ne.s32.totalorder %s185, %s186
      %p198 = scmp.eq.s32.totalorder %s29, 1
      %p199 = por %p197, %p198
      %p201 = scmp.ne.s32.totalorder %s186, %s200
      %p202 = scmp.eq.s32.totalorder %s29, 0
      %p203 = por %p201, %p202
      %s205 = sadd.s32 %s204, 1
      %p208 = scmp.eq.s32.totalorder %s23, 1
      %p209 = scmp.ne.s32.totalorder %s204, %s206
      %p210 = scmp.eq.s32.totalorder %s23, 0
      %p211 = por %p209, %p210
      %p212 = scmp.ne.s32.totalorder %s204, %s206
      %p213 = scmp.eq.s32.totalorder %s28, 1
      %p214 = por %p212, %p213
      %p215 = scmp.ne.s32.totalorder %s206, %s207
      %p216 = scmp.eq.s32.totalorder %s28, 0
      %p217 = por %p215, %p216
      %p218 = scmp.ne.s32.totalorder %s206, %s207
      %p219 = scmp.eq.s32.totalorder %s29, 1
      %p220 = por %p218, %p219
      %p222 = scmp.ne.s32.totalorder %s207, %s221
      %p223 = scmp.eq.s32.totalorder %s29, 0
      %p224 = por %p222, %p223
      %s226 = sadd.s32 %s225, 1
      %p229 = scmp.eq.s32.totalorder %s23, 1
      %p230 = scmp.ne.s32.totalorder %s225, %s227
      %p231 = scmp.eq.s32.totalorder %s23, 0
      %p232 = por %p230, %p231
      %p233 = scmp.ne.s32.totalorder %s225, %s227
      %p234 = scmp.eq.s32.totalorder %s28, 1
      %p235 = por %p233, %p234
      %p236 = scmp.ne.s32.totalorder %s227, %s228
      %p237 = scmp.eq.s32.totalorder %s28, 0
      %p238 = por %p236, %p237
      %p239 = scmp.ne.s32.totalorder %s227, %s228
      %p240 = scmp.eq.s32.totalorder %s29, 1
      %p241 = por %p239, %p240
      %p243 = scmp.ne.s32.totalorder %s228, %s242
      %p244 = scmp.eq.s32.totalorder %s29, 0
      %p245 = por %p243, %p244
      %s247 = sadd.s32 %s246, 1
      %p250 = scmp.eq.s32.totalorder %s23, 1
      %p251 = scmp.ne.s32.totalorder %s246, %s248
      %p252 = scmp.eq.s32.totalorder %s23, 0
      %p253 = por %p251, %p252
      %p254 = scmp.ne.s32.totalorder %s246, %s248
      %p255 = scmp.eq.s32.totalorder %s28, 1
      %p256 = por %p254, %p255
      %p257 = scmp.ne.s32.totalorder %s248, %s249
      %p258 = scmp.eq.s32.totalorder %s28, 0
      %p259 = por %p257, %p258
      %p260 = scmp.ne.s32.totalorder %s248, %s249
      %p261 = scmp.eq.s32.totalorder %s29, 1
      %p262 = por %p260, %p261
      %p264 = scmp.ne.s32.totalorder %s249, %s263
      %p265 = scmp.eq.s32.totalorder %s29, 0
      %p266 = por %p264, %p265
      %s267 = ssub.s32 %s23, %s30
      %p268 = scmp.eq.s32.totalorder %s267, 0
      %s270 = sadd.s32 %s269, 1
      %s271 = scalar_select %p268, %s269, %s270
      %p274 = pneg %p268
      %p275 = scmp.eq.s32.totalorder %s23, 1
      %p276 = por %p274, %p275
      %p277 = scmp.ne.s32.totalorder %s269, %s272
      %p278 = scmp.eq.s32.totalorder %s23, 0
      %p279 = por %p277, %p278
      %p280 = scmp.ne.s32.totalorder %s269, %s272
      %p281 = scmp.eq.s32.totalorder %s28, 1
      %p282 = por %p280, %p281
      %p283 = scmp.ne.s32.totalorder %s272, %s273
      %p284 = scmp.eq.s32.totalorder %s28, 0
      %p285 = por %p283, %p284
      %p286 = scmp.ne.s32.totalorder %s272, %s273
      %p287 = scmp.eq.s32.totalorder %s29, 1
      %p288 = por %p286, %p287
      %p290 = scmp.ne.s32.totalorder %s273, %s289
      %p291 = scmp.eq.s32.totalorder %s29, 0
      %p292 = por %p290, %p291
      %p293 = scmp.le.s32.totalorder 1, %s23
      %p294 = scmp.lt.s32.totalorder %s23, 3
      %p295 = pnand %p293, %p294
      %p296 = pneg %p295
      // Predicated region
      $region9: #{tpu_custom_call.1} parent=5 // pred_check
        _
      $region10: #{tpu_custom_call.1} parent=5 // pred_check_branch
        %298 = sbr.rel (%p295) target = $region12
      $region11: #{tpu_custom_call.1} parent=5 // pred_region
        %s299 = ssub.s32 %s23, 1
        // Predicated region
        $region13: #{tpu_custom_call.1} parent=11 // pred_check
          %p300 = pneg %p70
        $region14: #{tpu_custom_call.1} parent=11 // pred_check_branch
          %302 = sbr.rel (%p300) target = $region16
        $region15: #{tpu_custom_call.1} parent=11 // pred_region
          _
        $region16: #{tpu_custom_call.1} parent=11 // pred_fallthru
          _
        // Predicated region
        $region17: #{tpu_custom_call.1} parent=11 // pred_check
          %p303 = pneg %p91
        $region18: #{tpu_custom_call.1} parent=11 // pred_check_branch
          %305 = sbr.rel (%p303) target = $region20
        $region19: #{tpu_custom_call.1} parent=11 // pred_region
          _
        $region20: #{tpu_custom_call.1} parent=11 // pred_fallthru
          _
        // Predicated region
        $region21: #{tpu_custom_call.1} parent=11 // pred_check
          %p306 = pneg %p112
        $region22: #{tpu_custom_call.1} parent=11 // pred_check_branch
          %308 = sbr.rel (%p306) target = $region24
        $region23: #{tpu_custom_call.1} parent=11 // pred_region
          _
        $region24: #{tpu_custom_call.1} parent=11 // pred_fallthru
          _
        // Predicated region
        $region25: #{tpu_custom_call.1} parent=11 // pred_check
          %p309 = pneg %p133
        $region26: #{tpu_custom_call.1} parent=11 // pred_check_branch
          %311 = sbr.rel (%p309) target = $region28
        $region27: #{tpu_custom_call.1} parent=11 // pred_region
          _
        $region28: #{tpu_custom_call.1} parent=11 // pred_fallthru
          _
        // Predicated region
        $region29: #{tpu_custom_call.1} parent=11 // pred_check
          %p312 = pneg %p154
        $region30: #{tpu_custom_call.1} parent=11 // pred_check_branch
          %314 = sbr.rel (%p312) target = $region32
        $region31: #{tpu_custom_call.1} parent=11 // pred_region
          _
        $region32: #{tpu_custom_call.1} parent=11 // pred_fallthru
          _
        // Predicated region
        $region33: #{tpu_custom_call.1} parent=11 // pred_check
          %p315 = pneg %p175
        $region34: #{tpu_custom_call.1} parent=11 // pred_check_branch
          %317 = sbr.rel (%p315) target = $region36
        $region35: #{tpu_custom_call.1} parent=11 // pred_region
          _
        $region36: #{tpu_custom_call.1} parent=11 // pred_fallthru
          _
        // Predicated region
        $region37: #{tpu_custom_call.1} parent=11 // pred_check
          %p318 = pneg %p196
        $region38: #{tpu_custom_call.1} parent=11 // pred_check_branch
          %320 = sbr.rel (%p318) target = $region40
        $region39: #{tpu_custom_call.1} parent=11 // pred_region
          _
        $region40: #{tpu_custom_call.1} parent=11 // pred_fallthru
          _
        // Predicated region
        $region41: #{tpu_custom_call.1} parent=11 // pred_check
          %p321 = pneg %p217
        $region42: #{tpu_custom_call.1} parent=11 // pred_check_branch
          %323 = sbr.rel (%p321) target = $region44
        $region43: #{tpu_custom_call.1} parent=11 // pred_region
          _
        $region44: #{tpu_custom_call.1} parent=11 // pred_fallthru
          _
        // Predicated region
        $region45: #{tpu_custom_call.1} parent=11 // pred_check
          %p324 = pneg %p238
        $region46: #{tpu_custom_call.1} parent=11 // pred_check_branch
          %326 = sbr.rel (%p324) target = $region48
        $region47: #{tpu_custom_call.1} parent=11 // pred_region
          _
        $region48: #{tpu_custom_call.1} parent=11 // pred_fallthru
          _
        // Predicated region
        $region49: #{tpu_custom_call.1} parent=11 // pred_check
          %p327 = pneg %p259
        $region50: #{tpu_custom_call.1} parent=11 // pred_check_branch
          %329 = sbr.rel (%p327) target = $region52
        $region51: #{tpu_custom_call.1} parent=11 // pred_region
          _
        $region52: #{tpu_custom_call.1} parent=11 // pred_fallthru
          _
      $region12: #{tpu_custom_call.1} parent=5 // pred_fallthru
        _
      %p330 = scmp.lt.s32.totalorder %s23, 2
      // Predicated region
      $region53: #{tpu_custom_call.1} parent=5 // pred_check
        %p331 = pneg %p330
      $region54: #{tpu_custom_call.1} parent=5 // pred_check_branch
        %333 = sbr.rel (%p331) target = $region56
      $region55: #{tpu_custom_call.1} parent=5 // pred_region
        // Predicated region
        $region57: #{tpu_custom_call.1} parent=55 // pred_check
          %p334 = pneg %p43
        $region58: #{tpu_custom_call.1} parent=55 // pred_check_branch
          %336 = sbr.rel (%p334) target = $region60
        $region59: #{tpu_custom_call.1} parent=55 // pred_region
          %s337 = sand.u32 %s33, 1
          %s338 = scalar_lea.sflag [#allocation4], %s337
          %s339 = sand.u32 %s33, 1
          %s340 = smul.addr %s339, 64
          %s341 = scalar_lea.vmem [#allocation3], %s340
          %s343 = ssub.s32 1024, 1024
          %344 = vsyncadd %s338, %s343
          %s345 = smul.addr %s23, 8
          %s346 = smul.addr %s345, 128
          %s347 = scalar_lea.hbm %s0, %s346
          %s348 = sshll.u32 %s341, 4
          %s349 = int_to_ptr.vmem [resolvable:$true] %s348
          %354 = dma.hbm_to_vmem [thread:$0]  %s347, 1024, %s349, %s338, 128, 128, 8
        $region60: #{tpu_custom_call.1} parent=55 // pred_fallthru
          _
      $region56: #{tpu_custom_call.1} parent=5 // pred_fallthru
        _
      %p355 = scmp.le.s32.totalorder 1, %s23
      %p356 = scmp.lt.s32.totalorder %s23, 3
      %p357 = pnand %p355, %p356
      %p358 = pneg %p357
      // Predicated region
      $region61: #{tpu_custom_call.1} parent=5 // pred_check
        _
      $region62: #{tpu_custom_call.1} parent=5 // pred_check_branch
        %360 = sbr.rel (%p357) target = $region64
      $region63: #{tpu_custom_call.1} parent=5 // pred_region
        %s361 = ssub.s32 %s23, 1
        %s362 = sand.u32 %s36, 1
        %s363 = scalar_lea.sflag [#allocation4], %s362
        %s364 = sand.u32 %s36, 1
        %s365 = smul.addr %s364, 64
        %s366 = scalar_lea.vmem [#allocation3], %s365
        // Predicated region
        $region65: #{tpu_custom_call.1} parent=63 // pred_check
          %p367 = pneg %p49
        $region66: #{tpu_custom_call.1} parent=63 // pred_check_branch
          %369 = sbr.rel (%p367) target = $region68
        $region67: #{tpu_custom_call.1} parent=63 // pred_region
          %370 = dma.done %s363, 1024
        $region68: #{tpu_custom_call.1} parent=63 // pred_fallthru
          _
        %s371 = sand.u32 %s36, 1
        %s372 = scalar_lea.sflag [#allocation4], %s371
        %s373 = sand.u32 %s36, 1
        %s374 = smul.addr %s373, 64
        %s375 = scalar_lea.vmem [#allocation3], %s374
        %p376 = pneg %p49
        %p377 = pneg %p46
        %p378 = pneg %p70
        %p379 = pneg %p67
        %p380 = pneg %p91
        %p381 = pneg %p88
        %p382 = pneg %p112
        %p383 = pneg %p109
        %p384 = pneg %p133
        %p385 = pneg %p130
        %p386 = pneg %p154
        %p387 = pneg %p151
        %p388 = pneg %p175
        %p389 = pneg %p172
        %p390 = pneg %p196
        %p391 = pneg %p193
        %p392 = pneg %p217
        %p393 = pneg %p214
        %p394 = pneg %p238
        %p395 = pneg %p235
        %p396 = pneg %p259
        %p397 = pneg %p256
        %p398 = pneg %p285
        %p399 = pneg %p282
        %s400 = sand.u32 %s272, 1
        %s401 = scalar_lea.sflag [#allocation5], %s400
        %s402 = sand.u32 %s272, 1
        %s403 = smul.addr %s402, 64
        %s404 = scalar_lea.vmem [#allocation6], %s403
        %vm407 = vcmask 261120
        %408 = vst.msk [vmem:[#allocation2] sm:$0xff] %vm407, 0.0
        %vm409 = vcmask 259072
        %410 = vst.msk [vmem:[#allocation2 + $0x8] sm:$0x3f] %vm409, 0.0
        %411 = vst.msk [vmem:[#allocation2 + $0x10] sm:$0xff] %vm407, 0.0
        %412 = vst.msk [vmem:[#allocation2 + $0x18] sm:$0x3f] %vm409, 0.0
        %413 = vst.msk [vmem:[#allocation2 + $0x20] sm:$0xff] %vm407, 0.0
        %414 = vst.msk [vmem:[#allocation2 + $0x28] sm:$0x3f] %vm409, 0.0
        %s415 = scalar_lea.vmem [#allocation2], 176
        %416 = vst.msk [vmem:[%s415] sm:$0xff] %vm407, 0.0
        %417 = vst.msk [vmem:[%s415 + $0x8] sm:$0x3f] %vm409, 0.0
        %418 = vst.msk [vmem:[%s415 + $0x10] sm:$0xff] %vm407, 0.0
        %419 = vst.msk [vmem:[%s415 + $0x18] sm:$0x3f] %vm409, 0.0
        %420 = vst.msk [vmem:[%s415 + $0x20] sm:$0xff] %vm407, 0.0
        %421 = vst.msk [vmem:[%s415 + $0x28] sm:$0x3f] %vm409, 0.0
        %s422 = scalar_lea.vmem [#allocation2], 48
        %vm423 = vcmask 256000
        %424 = vst.msk [vmem:[%s422] sm:$0x7] %vm423, 0.0
        %425 = vst.msk [vmem:[%s422 + $0x10] sm:$0x7] %vm423, 0.0
        %426 = vst.msk [vmem:[%s422 + $0x20] sm:$0x7] %vm423, 0.0
        %427 = vst.msk [vmem:[%s422 + $0x30] sm:$0x7] %vm423, 0.0
        %428 = vst.msk [vmem:[%s422 + $0x40] sm:$0x7] %vm423, 0.0
        %429 = vst.msk [vmem:[%s422 + $0x50] sm:$0x7] %vm423, 0.0
        %430 = vst.msk [vmem:[%s422 + $0x60] sm:$0x7] %vm423, 0.0
        %431 = vst.msk [vmem:[%s422 + $0x70] sm:$0x7] %vm423, 0.0
        %432 = vst.msk [vmem:[%s422 + $0xb] sm:$0x7] %vm423, 0.0
        %433 = vst.msk [vmem:[%s422 + $0x1b] sm:$0x7] %vm423, 0.0
        %434 = vst.msk [vmem:[%s422 + $0x2b] sm:$0x7] %vm423, 0.0
        %435 = vst.msk [vmem:[%s422 + $0x3b] sm:$0x7] %vm423, 0.0
        %436 = vst.msk [vmem:[%s422 + $0x4b] sm:$0x7] %vm423, 0.0
        %437 = vst.msk [vmem:[%s422 + $0x5b] sm:$0x7] %vm423, 0.0
        %438 = vst.msk [vmem:[%s422 + $0x6b] sm:$0x7] %vm423, 0.0
        %439 = vst.msk [vmem:[%s422 + $0x7b] sm:$0x7] %vm423, 0.0
        %v440 = vld [vmem:[%s366] sm:$0xff]
        %v441 = vld [vmem:[%s366 + $0x8] sm:$0xff]
        %v442 = vld [vmem:[%s366 + $0x10] sm:$0xff]
        %v443 = vld [vmem:[%s366 + $0x18] sm:$0xff]
        %v444 = vld [vmem:[%s366 + $0x20] sm:$0xff]
        %v445 = vld [vmem:[%s366 + $0x28] sm:$0xff]
        %v446 = vld [vmem:[%s366 + $0x30] sm:$0xff]
        %v447 = vld [vmem:[%s366 + $0x38] sm:$0xff]
        %448 = vst.msk [vmem:[%s422 + $0x3] sm:$0xff] %vm407, %v440
        %449 = vst.msk [vmem:[%s422 + $0x13] sm:$0xff] %vm407, %v441
        %450 = vst.msk [vmem:[%s422 + $0x23] sm:$0xff] %vm407, %v442
        %451 = vst.msk [vmem:[%s422 + $0x33] sm:$0xff] %vm407, %v443
        %452 = vst.msk [vmem:[%s422 + $0x43] sm:$0xff] %vm407, %v444
        %453 = vst.msk [vmem:[%s422 + $0x53] sm:$0xff] %vm407, %v445
        %454 = vst.msk [vmem:[%s422 + $0x63] sm:$0xff] %vm407, %v446
        %455 = vst.msk [vmem:[%s422 + $0x73] sm:$0xff] %vm407, %v447
        %v456 = vld [vmem:[%s1] sm:$0x7f]
        %v457 = vld [vmem:[%s1 + $0x8] sm:$0x7f]
        %v458 = vld [vmem:[%s1 + $0x10] sm:$0x7f]
        %v459 = vld [vmem:[%s1 + $0x18] sm:$0x7f]
        %v460 = vld [vmem:[%s1 + $0x20] sm:$0x7f]
        %v461 = vld [vmem:[%s1 + $0x28] sm:$0x7f]
        %v462 = vld [vmem:[%s1 + $0x30] sm:$0x7f]
        %v463 = vpack.c.bf16 %v456, %v456
        %v464 = vpack.c.bf16 %v457, %v457
        %v465 = vpack.c.bf16 %v458, %v458
        %v466 = vpack.c.bf16 %v459, %v459
        %v467 = vpack.c.bf16 %v460, %v460
        %v468 = vpack.c.bf16 %v461, %v461
        %v469 = vpack.c.bf16 %v462, %v462
        %v470 = vld [vmem:[%s2] sm:$0x1]
        %v471 = vld [vmem:[#allocation2] sm:$0xff]
        %v472 = vld [vmem:[#allocation2 + $0x10] sm:$0xff]
        %v473 = vld [vmem:[#allocation2 + $0x20] sm:$0xff]
        %v474 = vld [vmem:[#allocation2 + $0x30] sm:$0xff]
        %v475 = vld [vmem:[#allocation2 + $0x40] sm:$0xff]
        %v476 = vld [vmem:[#allocation2 + $0x50] sm:$0xff]
        %v477 = vld [vmem:[#allocation2 + $0x60] sm:$0xff]
        %v478 = vld [vmem:[#allocation2 + $0x70] sm:$0xff]
        %v479 = vld [vmem:[#allocation2 + $0x80] sm:$0xff]
        %v480 = vld [vmem:[#allocation2 + $0x90] sm:$0xff]
        %v481 = vld [vmem:[#allocation2 + $0xa0] sm:$0xff]
        %v482 = vld [vmem:[#allocation2 + $0xb0] sm:$0xff]
        %v483 = vld [vmem:[#allocation2 + $0xc0] sm:$0xff]
        %v484 = vld [vmem:[#allocation2 + $0xd0] sm:$0xff]
        %v485 = vpack.c.bf16 %v471, %v471
        %v486 = vpack.c.bf16 %v472, %v472
        %v487 = vpack.c.bf16 %v473, %v473
        %v488 = vpack.c.bf16 %v474, %v474
        %v489 = vpack.c.bf16 %v475, %v475
        %v490 = vpack.c.bf16 %v476, %v476
        %v491 = vpack.c.bf16 %v477, %v477
        %v492 = vpack.c.bf16 %v478, %v478
        %v493 = vpack.c.bf16 %v479, %v479
        %v494 = vpack.c.bf16 %v480, %v480
        %v495 = vpack.c.bf16 %v481, %v481
        %v496 = vpack.c.bf16 %v482, %v482
        %v497 = vpack.c.bf16 %v483, %v483
        %v498 = vpack.c.bf16 %v484, %v484
        %v500 = vpack.i.b16 %v463, %v463
        %v502 = vlaneseq
        %v503 = vshrl.u32 %v502, 7
        %v504 = vsub.s32 0, %v503
        %v505 = vrot.slane %v500, %v504
        %v506 = vmul.bf16 %v485, %v505
        %v507 = vmul.bf16 %v486, %v505
        %v508 = vmul.bf16 %v487, %v505
        %v509 = vmul.bf16 %v488, %v505
        %v510 = vmul.bf16 %v489, %v505
        %v511 = vmul.bf16 %v490, %v505
        %v512 = vmul.bf16 %v491, %v505
        %v513 = vmul.bf16 %v492, %v505
        %v515 = vpack.i.b16 %v464, %v464
        %v517 = vlaneseq
        %v518 = vshrl.u32 %v517, 7
        %v519 = vsub.s32 0, %v518
        %v520 = vrot.slane %v515, %v519
        %v521 = vmul.bf16 %v486, %v520
        %v522 = vmul.bf16 %v487, %v520
        %v523 = vmul.bf16 %v488, %v520
        %v524 = vmul.bf16 %v489, %v520
        %v525 = vmul.bf16 %v490, %v520
        %v526 = vmul.bf16 %v491, %v520
        %v527 = vmul.bf16 %v492, %v520
        %v528 = vmul.bf16 %v493, %v520
        %v529 = vadd.bf16 %v506, %v521
        %v530 = vadd.bf16 %v507, %v522
        %v531 = vadd.bf16 %v508, %v523
        %v532 = vadd.bf16 %v509, %v524
        %v533 = vadd.bf16 %v510, %v525
        %v534 = vadd.bf16 %v511, %v526
        %v535 = vadd.bf16 %v512, %v527
        %v536 = vadd.bf16 %v513, %v528
        %v538 = vpack.i.b16 %v465, %v465
        %v540 = vlaneseq
        %v541 = vshrl.u32 %v540, 7
        %v542 = vsub.s32 0, %v541
        %v543 = vrot.slane %v538, %v542
        %v544 = vmul.bf16 %v487, %v543
        %v545 = vmul.bf16 %v488, %v543
        %v546 = vmul.bf16 %v489, %v543
        %v547 = vmul.bf16 %v490, %v543
        %v548 = vmul.bf16 %v491, %v543
        %v549 = vmul.bf16 %v492, %v543
        %v550 = vmul.bf16 %v493, %v543
        %v551 = vmul.bf16 %v494, %v543
        %v552 = vadd.bf16 %v529, %v544
        %v553 = vadd.bf16 %v530, %v545
        %v554 = vadd.bf16 %v531, %v546
        %v555 = vadd.bf16 %v532, %v547
        %v556 = vadd.bf16 %v533, %v548
        %v557 = vadd.bf16 %v534, %v549
        %v558 = vadd.bf16 %v535, %v550
        %v559 = vadd.bf16 %v536, %v551
        %v561 = vpack.i.b16 %v466, %v466
        %v563 = vlaneseq
        %v564 = vshrl.u32 %v563, 7
        %v565 = vsub.s32 0, %v564
        %v566 = vrot.slane %v561, %v565
        %v567 = vmul.bf16 %v488, %v566
        %v568 = vmul.bf16 %v489, %v566
        %v569 = vmul.bf16 %v490, %v566
        %v570 = vmul.bf16 %v491, %v566
        %v571 = vmul.bf16 %v492, %v566
        %v572 = vmul.bf16 %v493, %v566
        %v573 = vmul.bf16 %v494, %v566
        %v574 = vmul.bf16 %v495, %v566
        %v575 = vadd.bf16 %v552, %v567
        %v576 = vadd.bf16 %v553, %v568
        %v577 = vadd.bf16 %v554, %v569
        %v578 = vadd.bf16 %v555, %v570
        %v579 = vadd.bf16 %v556, %v571
        %v580 = vadd.bf16 %v557, %v572
        %v581 = vadd.bf16 %v558, %v573
        %v582 = vadd.bf16 %v559, %v574
        %v584 = vpack.i.b16 %v467, %v467
        %v586 = vlaneseq
        %v587 = vshrl.u32 %v586, 7
        %v588 = vsub.s32 0, %v587
        %v589 = vrot.slane %v584, %v588
        %v590 = vmul.bf16 %v489, %v589
        %v591 = vmul.bf16 %v490, %v589
        %v592 = vmul.bf16 %v491, %v589
        %v593 = vmul.bf16 %v492, %v589
        %v594 = vmul.bf16 %v493, %v589
        %v595 = vmul.bf16 %v494, %v589
        %v596 = vmul.bf16 %v495, %v589
        %v597 = vmul.bf16 %v496, %v589
        %v598 = vadd.bf16 %v575, %v590
        %v599 = vadd.bf16 %v576, %v591
        %v600 = vadd.bf16 %v577, %v592
        %v601 = vadd.bf16 %v578, %v593
        %v602 = vadd.bf16 %v579, %v594
        %v603 = vadd.bf16 %v580, %v595
        %v604 = vadd.bf16 %v581, %v596
        %v605 = vadd.bf16 %v582, %v597
        %v607 = vpack.i.b16 %v468, %v468
        %v609 = vlaneseq
        %v610 = vshrl.u32 %v609, 7
        %v611 = vsub.s32 0, %v610
        %v612 = vrot.slane %v607, %v611
        %v613 = vmul.bf16 %v490, %v612
        %v614 = vmul.bf16 %v491, %v612
        %v615 = vmul.bf16 %v492, %v612
        %v616 = vmul.bf16 %v493, %v612
        %v617 = vmul.bf16 %v494, %v612
        %v618 = vmul.bf16 %v495, %v612
        %v619 = vmul.bf16 %v496, %v612
        %v620 = vmul.bf16 %v497, %v612
        %v621 = vadd.bf16 %v598, %v613
        %v622 = vadd.bf16 %v599, %v614
        %v623 = vadd.bf16 %v600, %v615
        %v624 = vadd.bf16 %v601, %v616
        %v625 = vadd.bf16 %v602, %v617
        %v626 = vadd.bf16 %v603, %v618
        %v627 = vadd.bf16 %v604, %v619
        %v628 = vadd.bf16 %v605, %v620
        %v630 = vpack.i.b16 %v469, %v469
        %v632 = vlaneseq
        %v633 = vshrl.u32 %v632, 7
        %v634 = vsub.s32 0, %v633
        %v635 = vrot.slane %v630, %v634
        %v636 = vmul.bf16 %v491, %v635
        %v637 = vmul.bf16 %v492, %v635
        %v638 = vmul.bf16 %v493, %v635
        %v639 = vmul.bf16 %v494, %v635
        %v640 = vmul.bf16 %v495, %v635
        %v641 = vmul.bf16 %v496, %v635
        %v642 = vmul.bf16 %v497, %v635
        %v643 = vmul.bf16 %v498, %v635
        %v644 = vadd.bf16 %v621, %v636
        %v645 = vadd.bf16 %v622, %v637
        %v646 = vadd.bf16 %v623, %v638
        %v647 = vadd.bf16 %v624, %v639
        %v648 = vadd.bf16 %v625, %v640
        %v649 = vadd.bf16 %v626, %v641
        %v650 = vadd.bf16 %v627, %v642
        %v651 = vadd.bf16 %v628, %v643
        %v652 = vunpack.c.l.bf16 %v644
        %v653 = vunpack.c.l.bf16 %v645
        %v654 = vunpack.c.l.bf16 %v646
        %v655 = vunpack.c.l.bf16 %v647
        %v656 = vunpack.c.l.bf16 %v648
        %v657 = vunpack.c.l.bf16 %v649
        %v658 = vunpack.c.l.bf16 %v650
        %v659 = vunpack.c.l.bf16 %v651
        %v661 = vlaneseq
        %v662 = vshrl.u32 %v661, 7
        %v663 = vsub.s32 0, %v662
        %v664 = vrot.slane %v470, %v663
        %v666 = vadd.f32 %v652, %v664
        %v667 = vadd.f32 %v653, %v664
        %v668 = vadd.f32 %v654, %v664
        %v669 = vadd.f32 %v655, %v664
        %v670 = vadd.f32 %v656, %v664
        %v671 = vadd.f32 %v657, %v664
        %v672 = vadd.f32 %v658, %v664
        %v673 = vadd.f32 %v659, %v664
        %v674 = vld [vmem:[#allocation2 + $0x1] sm:$0xff]
        %v675 = vld [vmem:[#allocation2 + $0x11] sm:$0xff]
        %v676 = vld [vmem:[#allocation2 + $0x21] sm:$0xff]
        %v677 = vld [vmem:[#allocation2 + $0x31] sm:$0xff]
        %v678 = vld [vmem:[#allocation2 + $0x41] sm:$0xff]
        %v679 = vld [vmem:[#allocation2 + $0x51] sm:$0xff]
        %v680 = vld [vmem:[#allocation2 + $0x61] sm:$0xff]
        %v681 = vld [vmem:[#allocation2 + $0x71] sm:$0xff]
        %v682 = vld [vmem:[#allocation2 + $0x81] sm:$0xff]
        %v683 = vld [vmem:[#allocation2 + $0x91] sm:$0xff]
        %v684 = vld [vmem:[#allocation2 + $0xa1] sm:$0xff]
        %v685 = vld [vmem:[#allocation2 + $0xb1] sm:$0xff]
        %v686 = vld [vmem:[#allocation2 + $0xc1] sm:$0xff]
        %v687 = vld [vmem:[#allocation2 + $0xd1] sm:$0xff]
        %v688 = vpack.c.bf16 %v674, %v674
        %v689 = vpack.c.bf16 %v675, %v675
        %v690 = vpack.c.bf16 %v676, %v676
        %v691 = vpack.c.bf16 %v677, %v677
        %v692 = vpack.c.bf16 %v678, %v678
        %v693 = vpack.c.bf16 %v679, %v679
        %v694 = vpack.c.bf16 %v680, %v680
        %v695 = vpack.c.bf16 %v681, %v681
        %v696 = vpack.c.bf16 %v682, %v682
        %v697 = vpack.c.bf16 %v683, %v683
        %v698 = vpack.c.bf16 %v684, %v684
        %v699 = vpack.c.bf16 %v685, %v685
        %v700 = vpack.c.bf16 %v686, %v686
        %v701 = vpack.c.bf16 %v687, %v687
        %v702 = vshrl.u32 %v463, 16
        %v703 = vpack.i.b16 %v702, %v702
        %v705 = vlaneseq
        %v706 = vshrl.u32 %v705, 7
        %v707 = vsub.s32 0, %v706
        %v708 = vrot.slane %v703, %v707
        %v709 = vmul.bf16 %v688, %v708
        %v710 = vmul.bf16 %v689, %v708
        %v711 = vmul.bf16 %v690, %v708
        %v712 = vmul.bf16 %v691, %v708
        %v713 = vmul.bf16 %v692, %v708
        %v714 = vmul.bf16 %v693, %v708
        %v715 = vmul.bf16 %v694, %v708
        %v716 = vmul.bf16 %v695, %v708
        %v717 = vshrl.u32 %v464, 16
        %v718 = vpack.i.b16 %v717, %v717
        %v720 = vlaneseq
        %v721 = vshrl.u32 %v720, 7
        %v722 = vsub.s32 0, %v721
        %v723 = vrot.slane %v718, %v722
        %v724 = vmul.bf16 %v689, %v723
        %v725 = vmul.bf16 %v690, %v723
        %v726 = vmul.bf16 %v691, %v723
        %v727 = vmul.bf16 %v692, %v723
        %v728 = vmul.bf16 %v693, %v723
        %v729 = vmul.bf16 %v694, %v723
        %v730 = vmul.bf16 %v695, %v723
        %v731 = vmul.bf16 %v696, %v723
        %v732 = vadd.bf16 %v709, %v724
        %v733 = vadd.bf16 %v710, %v725
        %v734 = vadd.bf16 %v711, %v726
        %v735 = vadd.bf16 %v712, %v727
        %v736 = vadd.bf16 %v713, %v728
        %v737 = vadd.bf16 %v714, %v729
        %v738 = vadd.bf16 %v715, %v730
        %v739 = vadd.bf16 %v716, %v731
        %v740 = vshrl.u32 %v465, 16
        %v741 = vpack.i.b16 %v740, %v740
        %v743 = vlaneseq
        %v744 = vshrl.u32 %v743, 7
        %v745 = vsub.s32 0, %v744
        %v746 = vrot.slane %v741, %v745
        %v747 = vmul.bf16 %v690, %v746
        %v748 = vmul.bf16 %v691, %v746
        %v749 = vmul.bf16 %v692, %v746
        %v750 = vmul.bf16 %v693, %v746
        %v751 = vmul.bf16 %v694, %v746
        %v752 = vmul.bf16 %v695, %v746
        %v753 = vmul.bf16 %v696, %v746
        %v754 = vmul.bf16 %v697, %v746
        %v755 = vadd.bf16 %v732, %v747
        %v756 = vadd.bf16 %v733, %v748
        %v757 = vadd.bf16 %v734, %v749
        %v758 = vadd.bf16 %v735, %v750
        %v759 = vadd.bf16 %v736, %v751
        %v760 = vadd.bf16 %v737, %v752
        %v761 = vadd.bf16 %v738, %v753
        %v762 = vadd.bf16 %v739, %v754
        %v763 = vshrl.u32 %v466, 16
        %v764 = vpack.i.b16 %v763, %v763
        %v766 = vlaneseq
        %v767 = vshrl.u32 %v766, 7
        %v768 = vsub.s32 0, %v767
        %v769 = vrot.slane %v764, %v768
        %v770 = vmul.bf16 %v691, %v769
        %v771 = vmul.bf16 %v692, %v769
        %v772 = vmul.bf16 %v693, %v769
        %v773 = vmul.bf16 %v694, %v769
        %v774 = vmul.bf16 %v695, %v769
        %v775 = vmul.bf16 %v696, %v769
        %v776 = vmul.bf16 %v697, %v769
        %v777 = vmul.bf16 %v698, %v769
        %v778 = vadd.bf16 %v755, %v770
        %v779 = vadd.bf16 %v756, %v771
        %v780 = vadd.bf16 %v757, %v772
        %v781 = vadd.bf16 %v758, %v773
        %v782 = vadd.bf16 %v759, %v774
        %v783 = vadd.bf16 %v760, %v775
        %v784 = vadd.bf16 %v761, %v776
        %v785 = vadd.bf16 %v762, %v777
        %v786 = vshrl.u32 %v467, 16
        %v787 = vpack.i.b16 %v786, %v786
        %v789 = vlaneseq
        %v790 = vshrl.u32 %v789, 7
        %v791 = vsub.s32 0, %v790
        %v792 = vrot.slane %v787, %v791
        %v793 = vmul.bf16 %v692, %v792
        %v794 = vmul.bf16 %v693, %v792
        %v795 = vmul.bf16 %v694, %v792
        %v796 = vmul.bf16 %v695, %v792
        %v797 = vmul.bf16 %v696, %v792
        %v798 = vmul.bf16 %v697, %v792
        %v799 = vmul.bf16 %v698, %v792
        %v800 = vmul.bf16 %v699, %v792
        %v801 = vadd.bf16 %v778, %v793
        %v802 = vadd.bf16 %v779, %v794
        %v803 = vadd.bf16 %v780, %v795
        %v804 = vadd.bf16 %v781, %v796
        %v805 = vadd.bf16 %v782, %v797
        %v806 = vadd.bf16 %v783, %v798
        %v807 = vadd.bf16 %v784, %v799
        %v808 = vadd.bf16 %v785, %v800
        %v809 = vshrl.u32 %v468, 16
        %v810 = vpack.i.b16 %v809, %v809
        %v812 = vlaneseq
        %v813 = vshrl.u32 %v812, 7
        %v814 = vsub.s32 0, %v813
        %v815 = vrot.slane %v810, %v814
        %v816 = vmul.bf16 %v693, %v815
        %v817 = vmul.bf16 %v694, %v815
        %v818 = vmul.bf16 %v695, %v815
        %v819 = vmul.bf16 %v696, %v815
        %v820 = vmul.bf16 %v697, %v815
        %v821 = vmul.bf16 %v698, %v815
        %v822 = vmul.bf16 %v699, %v815
        %v823 = vmul.bf16 %v700, %v815
        %v824 = vadd.bf16 %v801, %v816
        %v825 = vadd.bf16 %v802, %v817
        %v826 = vadd.bf16 %v803, %v818
        %v827 = vadd.bf16 %v804, %v819
        %v828 = vadd.bf16 %v805, %v820
        %v829 = vadd.bf16 %v806, %v821
        %v830 = vadd.bf16 %v807, %v822
        %v831 = vadd.bf16 %v808, %v823
        %v832 = vshrl.u32 %v469, 16
        %v833 = vpack.i.b16 %v832, %v832
        %v835 = vlaneseq
        %v836 = vshrl.u32 %v835, 7
        %v837 = vsub.s32 0, %v836
        %v838 = vrot.slane %v833, %v837
        %v839 = vmul.bf16 %v694, %v838
        %v840 = vmul.bf16 %v695, %v838
        %v841 = vmul.bf16 %v696, %v838
        %v842 = vmul.bf16 %v697, %v838
        %v843 = vmul.bf16 %v698, %v838
        %v844 = vmul.bf16 %v699, %v838
        %v845 = vmul.bf16 %v700, %v838
        %v846 = vmul.bf16 %v701, %v838
        %v847 = vadd.bf16 %v824, %v839
        %v848 = vadd.bf16 %v825, %v840
        %v849 = vadd.bf16 %v826, %v841
        %v850 = vadd.bf16 %v827, %v842
        %v851 = vadd.bf16 %v828, %v843
        %v852 = vadd.bf16 %v829, %v844
        %v853 = vadd.bf16 %v830, %v845
        %v854 = vadd.bf16 %v831, %v846
        %v855 = vunpack.c.l.bf16 %v847
        %v856 = vunpack.c.l.bf16 %v848
        %v857 = vunpack.c.l.bf16 %v849
        %v858 = vunpack.c.l.bf16 %v850
        %v859 = vunpack.c.l.bf16 %v851
        %v860 = vunpack.c.l.bf16 %v852
        %v861 = vunpack.c.l.bf16 %v853
        %v862 = vunpack.c.l.bf16 %v854
        %v863 = vadd.f32 %v666, %v855
        %v864 = vadd.f32 %v667, %v856
        %v865 = vadd.f32 %v668, %v857
        %v866 = vadd.f32 %v669, %v858
        %v867 = vadd.f32 %v670, %v859
        %v868 = vadd.f32 %v671, %v860
        %v869 = vadd.f32 %v672, %v861
        %v870 = vadd.f32 %v673, %v862
        %v871 = vld [vmem:[#allocation2 + $0x2] sm:$0xff]
        %v872 = vld [vmem:[#allocation2 + $0x12] sm:$0xff]
        %v873 = vld [vmem:[#allocation2 + $0x22] sm:$0xff]
        %v874 = vld [vmem:[#allocation2 + $0x32] sm:$0xff]
        %v875 = vld [vmem:[#allocation2 + $0x42] sm:$0xff]
        %v876 = vld [vmem:[#allocation2 + $0x52] sm:$0xff]
        %v877 = vld [vmem:[#allocation2 + $0x62] sm:$0xff]
        %v878 = vld [vmem:[#allocation2 + $0x72] sm:$0xff]
        %v879 = vld [vmem:[#allocation2 + $0x82] sm:$0xff]
        %v880 = vld [vmem:[#allocation2 + $0x92] sm:$0xff]
        %v881 = vld [vmem:[#allocation2 + $0xa2] sm:$0xff]
        %v882 = vld [vmem:[#allocation2 + $0xb2] sm:$0xff]
        %v883 = vld [vmem:[#allocation2 + $0xc2] sm:$0xff]
        %v884 = vld [vmem:[#allocation2 + $0xd2] sm:$0xff]
        %v885 = vpack.c.bf16 %v871, %v871
        %v886 = vpack.c.bf16 %v872, %v872
        %v887 = vpack.c.bf16 %v873, %v873
        %v888 = vpack.c.bf16 %v874, %v874
        %v889 = vpack.c.bf16 %v875, %v875
        %v890 = vpack.c.bf16 %v876, %v876
        %v891 = vpack.c.bf16 %v877, %v877
        %v892 = vpack.c.bf16 %v878, %v878
        %v893 = vpack.c.bf16 %v879, %v879
        %v894 = vpack.c.bf16 %v880, %v880
        %v895 = vpack.c.bf16 %v881, %v881
        %v896 = vpack.c.bf16 %v882, %v882
        %v897 = vpack.c.bf16 %v883, %v883
        %v898 = vpack.c.bf16 %v884, %v884
        %v899 = vlaneseq
        %v900 = vshrl.u32 %v899, 7
        %v901 = vsub.s32 1, %v900
        %v902 = vrot.slane %v500, %v901
        %v903 = vmul.bf16 %v885, %v902
        %v904 = vmul.bf16 %v886, %v902
        %v905 = vmul.bf16 %v887, %v902
        %v906 = vmul.bf16 %v888, %v902
        %v907 = vmul.bf16 %v889, %v902
        %v908 = vmul.bf16 %v890, %v902
        %v909 = vmul.bf16 %v891, %v902
        %v910 = vmul.bf16 %v892, %v902
        %v911 = vlaneseq
        %v912 = vshrl.u32 %v911, 7
        %v913 = vsub.s32 1, %v912
        %v914 = vrot.slane %v515, %v913
        %v915 = vmul.bf16 %v886, %v914
        %v916 = vmul.bf16 %v887, %v914
        %v917 = vmul.bf16 %v888, %v914
        %v918 = vmul.bf16 %v889, %v914
        %v919 = vmul.bf16 %v890, %v914
        %v920 = vmul.bf16 %v891, %v914
        %v921 = vmul.bf16 %v892, %v914
        %v922 = vmul.bf16 %v893, %v914
        %v923 = vadd.bf16 %v903, %v915
        %v924 = vadd.bf16 %v904, %v916
        %v925 = vadd.bf16 %v905, %v917
        %v926 = vadd.bf16 %v906, %v918
        %v927 = vadd.bf16 %v907, %v919
        %v928 = vadd.bf16 %v908, %v920
        %v929 = vadd.bf16 %v909, %v921
        %v930 = vadd.bf16 %v910, %v922
        %v931 = vlaneseq
        %v932 = vshrl.u32 %v931, 7
        %v933 = vsub.s32 1, %v932
        %v934 = vrot.slane %v538, %v933
        %v935 = vmul.bf16 %v887, %v934
        %v936 = vmul.bf16 %v888, %v934
        %v937 = vmul.bf16 %v889, %v934
        %v938 = vmul.bf16 %v890, %v934
        %v939 = vmul.bf16 %v891, %v934
        %v940 = vmul.bf16 %v892, %v934
        %v941 = vmul.bf16 %v893, %v934
        %v942 = vmul.bf16 %v894, %v934
        %v943 = vadd.bf16 %v923, %v935
        %v944 = vadd.bf16 %v924, %v936
        %v945 = vadd.bf16 %v925, %v937
        %v946 = vadd.bf16 %v926, %v938
        %v947 = vadd.bf16 %v927, %v939
        %v948 = vadd.bf16 %v928, %v940
        %v949 = vadd.bf16 %v929, %v941
        %v950 = vadd.bf16 %v930, %v942
        %v951 = vlaneseq
        %v952 = vshrl.u32 %v951, 7
        %v953 = vsub.s32 1, %v952
        %v954 = vrot.slane %v561, %v953
        %v955 = vmul.bf16 %v888, %v954
        %v956 = vmul.bf16 %v889, %v954
        %v957 = vmul.bf16 %v890, %v954
        %v958 = vmul.bf16 %v891, %v954
        %v959 = vmul.bf16 %v892, %v954
        %v960 = vmul.bf16 %v893, %v954
        %v961 = vmul.bf16 %v894, %v954
        %v962 = vmul.bf16 %v895, %v954
        %v963 = vadd.bf16 %v943, %v955
        %v964 = vadd.bf16 %v944, %v956
        %v965 = vadd.bf16 %v945, %v957
        %v966 = vadd.bf16 %v946, %v958
        %v967 = vadd.bf16 %v947, %v959
        %v968 = vadd.bf16 %v948, %v960
        %v969 = vadd.bf16 %v949, %v961
        %v970 = vadd.bf16 %v950, %v962
        %v971 = vlaneseq
        %v972 = vshrl.u32 %v971, 7
        %v973 = vsub.s32 1, %v972
        %v974 = vrot.slane %v584, %v973
        %v975 = vmul.bf16 %v889, %v974
        %v976 = vmul.bf16 %v890, %v974
        %v977 = vmul.bf16 %v891, %v974
        %v978 = vmul.bf16 %v892, %v974
        %v979 = vmul.bf16 %v893, %v974
        %v980 = vmul.bf16 %v894, %v974
        %v981 = vmul.bf16 %v895, %v974
        %v982 = vmul.bf16 %v896, %v974
        %v983 = vadd.bf16 %v963, %v975
        %v984 = vadd.bf16 %v964, %v976
        %v985 = vadd.bf16 %v965, %v977
        %v986 = vadd.bf16 %v966, %v978
        %v987 = vadd.bf16 %v967, %v979
        %v988 = vadd.bf16 %v968, %v980
        %v989 = vadd.bf16 %v969, %v981
        %v990 = vadd.bf16 %v970, %v982
        %v991 = vlaneseq
        %v992 = vshrl.u32 %v991, 7
        %v993 = vsub.s32 1, %v992
        %v994 = vrot.slane %v607, %v993
        %v995 = vmul.bf16 %v890, %v994
        %v996 = vmul.bf16 %v891, %v994
        %v997 = vmul.bf16 %v892, %v994
        %v998 = vmul.bf16 %v893, %v994
        %v999 = vmul.bf16 %v894, %v994
        %v1000 = vmul.bf16 %v895, %v994
        %v1001 = vmul.bf16 %v896, %v994
        %v1002 = vmul.bf16 %v897, %v994
        %v1003 = vadd.bf16 %v983, %v995
        %v1004 = vadd.bf16 %v984, %v996
        %v1005 = vadd.bf16 %v985, %v997
        %v1006 = vadd.bf16 %v986, %v998
        %v1007 = vadd.bf16 %v987, %v999
        %v1008 = vadd.bf16 %v988, %v1000
        %v1009 = vadd.bf16 %v989, %v1001
        %v1010 = vadd.bf16 %v990, %v1002
        %v1011 = vlaneseq
        %v1012 = vshrl.u32 %v1011, 7
        %v1013 = vsub.s32 1, %v1012
        %v1014 = vrot.slane %v630, %v1013
        %v1015 = vmul.bf16 %v891, %v1014
        %v1016 = vmul.bf16 %v892, %v1014
        %v1017 = vmul.bf16 %v893, %v1014
        %v1018 = vmul.bf16 %v894, %v1014
        %v1019 = vmul.bf16 %v895, %v1014
        %v1020 = vmul.bf16 %v896, %v1014
        %v1021 = vmul.bf16 %v897, %v1014
        %v1022 = vmul.bf16 %v898, %v1014
        %v1023 = vadd.bf16 %v1003, %v1015
        %v1024 = vadd.bf16 %v1004, %v1016
        %v1025 = vadd.bf16 %v1005, %v1017
        %v1026 = vadd.bf16 %v1006, %v1018
        %v1027 = vadd.bf16 %v1007, %v1019
        %v1028 = vadd.bf16 %v1008, %v1020
        %v1029 = vadd.bf16 %v1009, %v1021
        %v1030 = vadd.bf16 %v1010, %v1022
        %v1031 = vunpack.c.l.bf16 %v1023
        %v1032 = vunpack.c.l.bf16 %v1024
        %v1033 = vunpack.c.l.bf16 %v1025
        %v1034 = vunpack.c.l.bf16 %v1026
        %v1035 = vunpack.c.l.bf16 %v1027
        %v1036 = vunpack.c.l.bf16 %v1028
        %v1037 = vunpack.c.l.bf16 %v1029
        %v1038 = vunpack.c.l.bf16 %v1030
        %v1039 = vadd.f32 %v863, %v1031
        %v1040 = vadd.f32 %v864, %v1032
        %v1041 = vadd.f32 %v865, %v1033
        %v1042 = vadd.f32 %v866, %v1034
        %v1043 = vadd.f32 %v867, %v1035
        %v1044 = vadd.f32 %v868, %v1036
        %v1045 = vadd.f32 %v869, %v1037
        %v1046 = vadd.f32 %v870, %v1038
        %v1047 = vld [vmem:[#allocation2 + $0x3] sm:$0xff]
        %v1048 = vld [vmem:[#allocation2 + $0x13] sm:$0xff]
        %v1049 = vld [vmem:[#allocation2 + $0x23] sm:$0xff]
        %v1050 = vld [vmem:[#allocation2 + $0x33] sm:$0xff]
        %v1051 = vld [vmem:[#allocation2 + $0x43] sm:$0xff]
        %v1052 = vld [vmem:[#allocation2 + $0x53] sm:$0xff]
        %v1053 = vld [vmem:[#allocation2 + $0x63] sm:$0xff]
        %v1054 = vld [vmem:[#allocation2 + $0x73] sm:$0xff]
        %v1055 = vld [vmem:[#allocation2 + $0x83] sm:$0xff]
        %v1056 = vld [vmem:[#allocation2 + $0x93] sm:$0xff]
        %v1057 = vld [vmem:[#allocation2 + $0xa3] sm:$0xff]
        %v1058 = vld [vmem:[#allocation2 + $0xb3] sm:$0xff]
        %v1059 = vld [vmem:[#allocation2 + $0xc3] sm:$0xff]
        %v1060 = vld [vmem:[#allocation2 + $0xd3] sm:$0xff]
        %v1061 = vpack.c.bf16 %v1047, %v1047
        %v1062 = vpack.c.bf16 %v1048, %v1048
        %v1063 = vpack.c.bf16 %v1049, %v1049
        %v1064 = vpack.c.bf16 %v1050, %v1050
        %v1065 = vpack.c.bf16 %v1051, %v1051
        %v1066 = vpack.c.bf16 %v1052, %v1052
        %v1067 = vpack.c.bf16 %v1053, %v1053
        %v1068 = vpack.c.bf16 %v1054, %v1054
        %v1069 = vpack.c.bf16 %v1055, %v1055
        %v1070 = vpack.c.bf16 %v1056, %v1056
        %v1071 = vpack.c.bf16 %v1057, %v1057
        %v1072 = vpack.c.bf16 %v1058, %v1058
        %v1073 = vpack.c.bf16 %v1059, %v1059
        %v1074 = vpack.c.bf16 %v1060, %v1060
        %v1075 = vlaneseq
        %v1076 = vshrl.u32 %v1075, 7
        %v1077 = vsub.s32 1, %v1076
        %v1078 = vrot.slane %v703, %v1077
        %v1079 = vmul.bf16 %v1061, %v1078
        %v1080 = vmul.bf16 %v1062, %v1078
        %v1081 = vmul.bf16 %v1063, %v1078
        %v1082 = vmul.bf16 %v1064, %v1078
        %v1083 = vmul.bf16 %v1065, %v1078
        %v1084 = vmul.bf16 %v1066, %v1078
        %v1085 = vmul.bf16 %v1067, %v1078
        %v1086 = vmul.bf16 %v1068, %v1078
        %v1087 = vlaneseq
        %v1088 = vshrl.u32 %v1087, 7
        %v1089 = vsub.s32 1, %v1088
        %v1090 = vrot.slane %v718, %v1089
        %v1091 = vmul.bf16 %v1062, %v1090
        %v1092 = vmul.bf16 %v1063, %v1090
        %v1093 = vmul.bf16 %v1064, %v1090
        %v1094 = vmul.bf16 %v1065, %v1090
        %v1095 = vmul.bf16 %v1066, %v1090
        %v1096 = vmul.bf16 %v1067, %v1090
        %v1097 = vmul.bf16 %v1068, %v1090
        %v1098 = vmul.bf16 %v1069, %v1090
        %v1099 = vadd.bf16 %v1079, %v1091
        %v1100 = vadd.bf16 %v1080, %v1092
        %v1101 = vadd.bf16 %v1081, %v1093
        %v1102 = vadd.bf16 %v1082, %v1094
        %v1103 = vadd.bf16 %v1083, %v1095
        %v1104 = vadd.bf16 %v1084, %v1096
        %v1105 = vadd.bf16 %v1085, %v1097
        %v1106 = vadd.bf16 %v1086, %v1098
        %v1107 = vlaneseq
        %v1108 = vshrl.u32 %v1107, 7
        %v1109 = vsub.s32 1, %v1108
        %v1110 = vrot.slane %v741, %v1109
        %v1111 = vmul.bf16 %v1063, %v1110
        %v1112 = vmul.bf16 %v1064, %v1110
        %v1113 = vmul.bf16 %v1065, %v1110
        %v1114 = vmul.bf16 %v1066, %v1110
        %v1115 = vmul.bf16 %v1067, %v1110
        %v1116 = vmul.bf16 %v1068, %v1110
        %v1117 = vmul.bf16 %v1069, %v1110
        %v1118 = vmul.bf16 %v1070, %v1110
        %v1119 = vadd.bf16 %v1099, %v1111
        %v1120 = vadd.bf16 %v1100, %v1112
        %v1121 = vadd.bf16 %v1101, %v1113
        %v1122 = vadd.bf16 %v1102, %v1114
        %v1123 = vadd.bf16 %v1103, %v1115
        %v1124 = vadd.bf16 %v1104, %v1116
        %v1125 = vadd.bf16 %v1105, %v1117
        %v1126 = vadd.bf16 %v1106, %v1118
        %v1127 = vlaneseq
        %v1128 = vshrl.u32 %v1127, 7
        %v1129 = vsub.s32 1, %v1128
        %v1130 = vrot.slane %v764, %v1129
        %v1131 = vmul.bf16 %v1064, %v1130
        %v1132 = vmul.bf16 %v1065, %v1130
        %v1133 = vmul.bf16 %v1066, %v1130
        %v1134 = vmul.bf16 %v1067, %v1130
        %v1135 = vmul.bf16 %v1068, %v1130
        %v1136 = vmul.bf16 %v1069, %v1130
        %v1137 = vmul.bf16 %v1070, %v1130
        %v1138 = vmul.bf16 %v1071, %v1130
        %v1139 = vadd.bf16 %v1119, %v1131
        %v1140 = vadd.bf16 %v1120, %v1132
        %v1141 = vadd.bf16 %v1121, %v1133
        %v1142 = vadd.bf16 %v1122, %v1134
        %v1143 = vadd.bf16 %v1123, %v1135
        %v1144 = vadd.bf16 %v1124, %v1136
        %v1145 = vadd.bf16 %v1125, %v1137
        %v1146 = vadd.bf16 %v1126, %v1138
        %v1147 = vlaneseq
        %v1148 = vshrl.u32 %v1147, 7
        %v1149 = vsub.s32 1, %v1148
        %v1150 = vrot.slane %v787, %v1149
        %v1151 = vmul.bf16 %v1065, %v1150
        %v1152 = vmul.bf16 %v1066, %v1150
        %v1153 = vmul.bf16 %v1067, %v1150
        %v1154 = vmul.bf16 %v1068, %v1150
        %v1155 = vmul.bf16 %v1069, %v1150
        %v1156 = vmul.bf16 %v1070, %v1150
        %v1157 = vmul.bf16 %v1071, %v1150
        %v1158 = vmul.bf16 %v1072, %v1150
        %v1159 = vadd.bf16 %v1139, %v1151
        %v1160 = vadd.bf16 %v1140, %v1152
        %v1161 = vadd.bf16 %v1141, %v1153
        %v1162 = vadd.bf16 %v1142, %v1154
        %v1163 = vadd.bf16 %v1143, %v1155
        %v1164 = vadd.bf16 %v1144, %v1156
        %v1165 = vadd.bf16 %v1145, %v1157
        %v1166 = vadd.bf16 %v1146, %v1158
        %v1167 = vlaneseq
        %v1168 = vshrl.u32 %v1167, 7
        %v1169 = vsub.s32 1, %v1168
        %v1170 = vrot.slane %v810, %v1169
        %v1171 = vmul.bf16 %v1066, %v1170
        %v1172 = vmul.bf16 %v1067, %v1170
        %v1173 = vmul.bf16 %v1068, %v1170
        %v1174 = vmul.bf16 %v1069, %v1170
        %v1175 = vmul.bf16 %v1070, %v1170
        %v1176 = vmul.bf16 %v1071, %v1170
        %v1177 = vmul.bf16 %v1072, %v1170
        %v1178 = vmul.bf16 %v1073, %v1170
        %v1179 = vadd.bf16 %v1159, %v1171
        %v1180 = vadd.bf16 %v1160, %v1172
        %v1181 = vadd.bf16 %v1161, %v1173
        %v1182 = vadd.bf16 %v1162, %v1174
        %v1183 = vadd.bf16 %v1163, %v1175
        %v1184 = vadd.bf16 %v1164, %v1176
        %v1185 = vadd.bf16 %v1165, %v1177
        %v1186 = vadd.bf16 %v1166, %v1178
        %v1187 = vlaneseq
        %v1188 = vshrl.u32 %v1187, 7
        %v1189 = vsub.s32 1, %v1188
        %v1190 = vrot.slane %v833, %v1189
        %v1191 = vmul.bf16 %v1067, %v1190
        %v1192 = vmul.bf16 %v1068, %v1190
        %v1193 = vmul.bf16 %v1069, %v1190
        %v1194 = vmul.bf16 %v1070, %v1190
        %v1195 = vmul.bf16 %v1071, %v1190
        %v1196 = vmul.bf16 %v1072, %v1190
        %v1197 = vmul.bf16 %v1073, %v1190
        %v1198 = vmul.bf16 %v1074, %v1190
        %v1199 = vadd.bf16 %v1179, %v1191
        %v1200 = vadd.bf16 %v1180, %v1192
        %v1201 = vadd.bf16 %v1181, %v1193
        %v1202 = vadd.bf16 %v1182, %v1194
        %v1203 = vadd.bf16 %v1183, %v1195
        %v1204 = vadd.bf16 %v1184, %v1196
        %v1205 = vadd.bf16 %v1185, %v1197
        %v1206 = vadd.bf16 %v1186, %v1198
        %v1207 = vunpack.c.l.bf16 %v1199
        %v1208 = vunpack.c.l.bf16 %v1200
        %v1209 = vunpack.c.l.bf16 %v1201
        %v1210 = vunpack.c.l.bf16 %v1202
        %v1211 = vunpack.c.l.bf16 %v1203
        %v1212 = vunpack.c.l.bf16 %v1204
        %v1213 = vunpack.c.l.bf16 %v1205
        %v1214 = vunpack.c.l.bf16 %v1206
        %v1215 = vadd.f32 %v1039, %v1207
        %v1216 = vadd.f32 %v1040, %v1208
        %v1217 = vadd.f32 %v1041, %v1209
        %v1218 = vadd.f32 %v1042, %v1210
        %v1219 = vadd.f32 %v1043, %v1211
        %v1220 = vadd.f32 %v1044, %v1212
        %v1221 = vadd.f32 %v1045, %v1213
        %v1222 = vadd.f32 %v1046, %v1214
        %v1223 = vld [vmem:[#allocation2 + $0x4] sm:$0xff]
        %v1224 = vld [vmem:[#allocation2 + $0x14] sm:$0xff]
        %v1225 = vld [vmem:[#allocation2 + $0x24] sm:$0xff]
        %v1226 = vld [vmem:[#allocation2 + $0x34] sm:$0xff]
        %v1227 = vld [vmem:[#allocation2 + $0x44] sm:$0xff]
        %v1228 = vld [vmem:[#allocation2 + $0x54] sm:$0xff]
        %v1229 = vld [vmem:[#allocation2 + $0x64] sm:$0xff]
        %v1230 = vld [vmem:[#allocation2 + $0x74] sm:$0xff]
        %v1231 = vld [vmem:[#allocation2 + $0x84] sm:$0xff]
        %v1232 = vld [vmem:[#allocation2 + $0x94] sm:$0xff]
        %v1233 = vld [vmem:[#allocation2 + $0xa4] sm:$0xff]
        %v1234 = vld [vmem:[#allocation2 + $0xb4] sm:$0xff]
        %v1235 = vld [vmem:[#allocation2 + $0xc4] sm:$0xff]
        %v1236 = vld [vmem:[#allocation2 + $0xd4] sm:$0xff]
        %v1237 = vpack.c.bf16 %v1223, %v1223
        %v1238 = vpack.c.bf16 %v1224, %v1224
        %v1239 = vpack.c.bf16 %v1225, %v1225
        %v1240 = vpack.c.bf16 %v1226, %v1226
        %v1241 = vpack.c.bf16 %v1227, %v1227
        %v1242 = vpack.c.bf16 %v1228, %v1228
        %v1243 = vpack.c.bf16 %v1229, %v1229
        %v1244 = vpack.c.bf16 %v1230, %v1230
        %v1245 = vpack.c.bf16 %v1231, %v1231
        %v1246 = vpack.c.bf16 %v1232, %v1232
        %v1247 = vpack.c.bf16 %v1233, %v1233
        %v1248 = vpack.c.bf16 %v1234, %v1234
        %v1249 = vpack.c.bf16 %v1235, %v1235
        %v1250 = vpack.c.bf16 %v1236, %v1236
        %v1251 = vlaneseq
        %v1252 = vshrl.u32 %v1251, 7
        %v1253 = vsub.s32 2, %v1252
        %v1254 = vrot.slane %v500, %v1253
        %v1255 = vmul.bf16 %v1237, %v1254
        %v1256 = vmul.bf16 %v1238, %v1254
        %v1257 = vmul.bf16 %v1239, %v1254
        %v1258 = vmul.bf16 %v1240, %v1254
        %v1259 = vmul.bf16 %v1241, %v1254
        %v1260 = vmul.bf16 %v1242, %v1254
        %v1261 = vmul.bf16 %v1243, %v1254
        %v1262 = vmul.bf16 %v1244, %v1254
        %v1263 = vlaneseq
        %v1264 = vshrl.u32 %v1263, 7
        %v1265 = vsub.s32 2, %v1264
        %v1266 = vrot.slane %v515, %v1265
        %v1267 = vmul.bf16 %v1238, %v1266
        %v1268 = vmul.bf16 %v1239, %v1266
        %v1269 = vmul.bf16 %v1240, %v1266
        %v1270 = vmul.bf16 %v1241, %v1266
        %v1271 = vmul.bf16 %v1242, %v1266
        %v1272 = vmul.bf16 %v1243, %v1266
        %v1273 = vmul.bf16 %v1244, %v1266
        %v1274 = vmul.bf16 %v1245, %v1266
        %v1275 = vadd.bf16 %v1255, %v1267
        %v1276 = vadd.bf16 %v1256, %v1268
        %v1277 = vadd.bf16 %v1257, %v1269
        %v1278 = vadd.bf16 %v1258, %v1270
        %v1279 = vadd.bf16 %v1259, %v1271
        %v1280 = vadd.bf16 %v1260, %v1272
        %v1281 = vadd.bf16 %v1261, %v1273
        %v1282 = vadd.bf16 %v1262, %v1274
        %v1283 = vlaneseq
        %v1284 = vshrl.u32 %v1283, 7
        %v1285 = vsub.s32 2, %v1284
        %v1286 = vrot.slane %v538, %v1285
        %v1287 = vmul.bf16 %v1239, %v1286
        %v1288 = vmul.bf16 %v1240, %v1286
        %v1289 = vmul.bf16 %v1241, %v1286
        %v1290 = vmul.bf16 %v1242, %v1286
        %v1291 = vmul.bf16 %v1243, %v1286
        %v1292 = vmul.bf16 %v1244, %v1286
        %v1293 = vmul.bf16 %v1245, %v1286
        %v1294 = vmul.bf16 %v1246, %v1286
        %v1295 = vadd.bf16 %v1275, %v1287
        %v1296 = vadd.bf16 %v1276, %v1288
        %v1297 = vadd.bf16 %v1277, %v1289
        %v1298 = vadd.bf16 %v1278, %v1290
        %v1299 = vadd.bf16 %v1279, %v1291
        %v1300 = vadd.bf16 %v1280, %v1292
        %v1301 = vadd.bf16 %v1281, %v1293
        %v1302 = vadd.bf16 %v1282, %v1294
        %v1303 = vlaneseq
        %v1304 = vshrl.u32 %v1303, 7
        %v1305 = vsub.s32 2, %v1304
        %v1306 = vrot.slane %v561, %v1305
        %v1307 = vmul.bf16 %v1240, %v1306
        %v1308 = vmul.bf16 %v1241, %v1306
        %v1309 = vmul.bf16 %v1242, %v1306
        %v1310 = vmul.bf16 %v1243, %v1306
        %v1311 = vmul.bf16 %v1244, %v1306
        %v1312 = vmul.bf16 %v1245, %v1306
        %v1313 = vmul.bf16 %v1246, %v1306
        %v1314 = vmul.bf16 %v1247, %v1306
        %v1315 = vadd.bf16 %v1295, %v1307
        %v1316 = vadd.bf16 %v1296, %v1308
        %v1317 = vadd.bf16 %v1297, %v1309
        %v1318 = vadd.bf16 %v1298, %v1310
        %v1319 = vadd.bf16 %v1299, %v1311
        %v1320 = vadd.bf16 %v1300, %v1312
        %v1321 = vadd.bf16 %v1301, %v1313
        %v1322 = vadd.bf16 %v1302, %v1314
        %v1323 = vlaneseq
        %v1324 = vshrl.u32 %v1323, 7
        %v1325 = vsub.s32 2, %v1324
        %v1326 = vrot.slane %v584, %v1325
        %v1327 = vmul.bf16 %v1241, %v1326
        %v1328 = vmul.bf16 %v1242, %v1326
        %v1329 = vmul.bf16 %v1243, %v1326
        %v1330 = vmul.bf16 %v1244, %v1326
        %v1331 = vmul.bf16 %v1245, %v1326
        %v1332 = vmul.bf16 %v1246, %v1326
        %v1333 = vmul.bf16 %v1247, %v1326
        %v1334 = vmul.bf16 %v1248, %v1326
        %v1335 = vadd.bf16 %v1315, %v1327
        %v1336 = vadd.bf16 %v1316, %v1328
        %v1337 = vadd.bf16 %v1317, %v1329
        %v1338 = vadd.bf16 %v1318, %v1330
        %v1339 = vadd.bf16 %v1319, %v1331
        %v1340 = vadd.bf16 %v1320, %v1332
        %v1341 = vadd.bf16 %v1321, %v1333
        %v1342 = vadd.bf16 %v1322, %v1334
        %v1343 = vlaneseq
        %v1344 = vshrl.u32 %v1343, 7
        %v1345 = vsub.s32 2, %v1344
        %v1346 = vrot.slane %v607, %v1345
        %v1347 = vmul.bf16 %v1242, %v1346
        %v1348 = vmul.bf16 %v1243, %v1346
        %v1349 = vmul.bf16 %v1244, %v1346
        %v1350 = vmul.bf16 %v1245, %v1346
        %v1351 = vmul.bf16 %v1246, %v1346
        %v1352 = vmul.bf16 %v1247, %v1346
        %v1353 = vmul.bf16 %v1248, %v1346
        %v1354 = vmul.bf16 %v1249, %v1346
        %v1355 = vadd.bf16 %v1335, %v1347
        %v1356 = vadd.bf16 %v1336, %v1348
        %v1357 = vadd.bf16 %v1337, %v1349
        %v1358 = vadd.bf16 %v1338, %v1350
        %v1359 = vadd.bf16 %v1339, %v1351
        %v1360 = vadd.bf16 %v1340, %v1352
        %v1361 = vadd.bf16 %v1341, %v1353
        %v1362 = vadd.bf16 %v1342, %v1354
        %v1363 = vlaneseq
        %v1364 = vshrl.u32 %v1363, 7
        %v1365 = vsub.s32 2, %v1364
        %v1366 = vrot.slane %v630, %v1365
        %v1367 = vmul.bf16 %v1243, %v1366
        %v1368 = vmul.bf16 %v1244, %v1366
        %v1369 = vmul.bf16 %v1245, %v1366
        %v1370 = vmul.bf16 %v1246, %v1366
        %v1371 = vmul.bf16 %v1247, %v1366
        %v1372 = vmul.bf16 %v1248, %v1366
        %v1373 = vmul.bf16 %v1249, %v1366
        %v1374 = vmul.bf16 %v1250, %v1366
        %v1375 = vadd.bf16 %v1355, %v1367
        %v1376 = vadd.bf16 %v1356, %v1368
        %v1377 = vadd.bf16 %v1357, %v1369
        %v1378 = vadd.bf16 %v1358, %v1370
        %v1379 = vadd.bf16 %v1359, %v1371
        %v1380 = vadd.bf16 %v1360, %v1372
        %v1381 = vadd.bf16 %v1361, %v1373
        %v1382 = vadd.bf16 %v1362, %v1374
        %v1383 = vunpack.c.l.bf16 %v1375
        %v1384 = vunpack.c.l.bf16 %v1376
        %v1385 = vunpack.c.l.bf16 %v1377
        %v1386 = vunpack.c.l.bf16 %v1378
        %v1387 = vunpack.c.l.bf16 %v1379
        %v1388 = vunpack.c.l.bf16 %v1380
        %v1389 = vunpack.c.l.bf16 %v1381
        %v1390 = vunpack.c.l.bf16 %v1382
        %v1391 = vadd.f32 %v1215, %v1383
        %v1392 = vadd.f32 %v1216, %v1384
        %v1393 = vadd.f32 %v1217, %v1385
        %v1394 = vadd.f32 %v1218, %v1386
        %v1395 = vadd.f32 %v1219, %v1387
        %v1396 = vadd.f32 %v1220, %v1388
        %v1397 = vadd.f32 %v1221, %v1389
        %v1398 = vadd.f32 %v1222, %v1390
        %v1399 = vld [vmem:[#allocation2 + $0x5] sm:$0xff]
        %v1400 = vld [vmem:[#allocation2 + $0x15] sm:$0xff]
        %v1401 = vld [vmem:[#allocation2 + $0x25] sm:$0xff]
        %v1402 = vld [vmem:[#allocation2 + $0x35] sm:$0xff]
        %v1403 = vld [vmem:[#allocation2 + $0x45] sm:$0xff]
        %v1404 = vld [vmem:[#allocation2 + $0x55] sm:$0xff]
        %v1405 = vld [vmem:[#allocation2 + $0x65] sm:$0xff]
        %v1406 = vld [vmem:[#allocation2 + $0x75] sm:$0xff]
        %v1407 = vld [vmem:[#allocation2 + $0x85] sm:$0xff]
        %v1408 = vld [vmem:[#allocation2 + $0x95] sm:$0xff]
        %v1409 = vld [vmem:[#allocation2 + $0xa5] sm:$0xff]
        %v1410 = vld [vmem:[#allocation2 + $0xb5] sm:$0xff]
        %v1411 = vld [vmem:[#allocation2 + $0xc5] sm:$0xff]
        %v1412 = vld [vmem:[#allocation2 + $0xd5] sm:$0xff]
        %v1413 = vpack.c.bf16 %v1399, %v1399
        %v1414 = vpack.c.bf16 %v1400, %v1400
        %v1415 = vpack.c.bf16 %v1401, %v1401
        %v1416 = vpack.c.bf16 %v1402, %v1402
        %v1417 = vpack.c.bf16 %v1403, %v1403
        %v1418 = vpack.c.bf16 %v1404, %v1404
        %v1419 = vpack.c.bf16 %v1405, %v1405
        %v1420 = vpack.c.bf16 %v1406, %v1406
        %v1421 = vpack.c.bf16 %v1407, %v1407
        %v1422 = vpack.c.bf16 %v1408, %v1408
        %v1423 = vpack.c.bf16 %v1409, %v1409
        %v1424 = vpack.c.bf16 %v1410, %v1410
        %v1425 = vpack.c.bf16 %v1411, %v1411
        %v1426 = vpack.c.bf16 %v1412, %v1412
        %v1427 = vlaneseq
        %v1428 = vshrl.u32 %v1427, 7
        %v1429 = vsub.s32 2, %v1428
        %v1430 = vrot.slane %v703, %v1429
        %v1431 = vmul.bf16 %v1413, %v1430
        %v1432 = vmul.bf16 %v1414, %v1430
        %v1433 = vmul.bf16 %v1415, %v1430
        %v1434 = vmul.bf16 %v1416, %v1430
        %v1435 = vmul.bf16 %v1417, %v1430
        %v1436 = vmul.bf16 %v1418, %v1430
        %v1437 = vmul.bf16 %v1419, %v1430
        %v1438 = vmul.bf16 %v1420, %v1430
        %v1439 = vlaneseq
        %v1440 = vshrl.u32 %v1439, 7
        %v1441 = vsub.s32 2, %v1440
        %v1442 = vrot.slane %v718, %v1441
        %v1443 = vmul.bf16 %v1414, %v1442
        %v1444 = vmul.bf16 %v1415, %v1442
        %v1445 = vmul.bf16 %v1416, %v1442
        %v1446 = vmul.bf16 %v1417, %v1442
        %v1447 = vmul.bf16 %v1418, %v1442
        %v1448 = vmul.bf16 %v1419, %v1442
        %v1449 = vmul.bf16 %v1420, %v1442
        %v1450 = vmul.bf16 %v1421, %v1442
        %v1451 = vadd.bf16 %v1431, %v1443
        %v1452 = vadd.bf16 %v1432, %v1444
        %v1453 = vadd.bf16 %v1433, %v1445
        %v1454 = vadd.bf16 %v1434, %v1446
        %v1455 = vadd.bf16 %v1435, %v1447
        %v1456 = vadd.bf16 %v1436, %v1448
        %v1457 = vadd.bf16 %v1437, %v1449
        %v1458 = vadd.bf16 %v1438, %v1450
        %v1459 = vlaneseq
        %v1460 = vshrl.u32 %v1459, 7
        %v1461 = vsub.s32 2, %v1460
        %v1462 = vrot.slane %v741, %v1461
        %v1463 = vmul.bf16 %v1415, %v1462
        %v1464 = vmul.bf16 %v1416, %v1462
        %v1465 = vmul.bf16 %v1417, %v1462
        %v1466 = vmul.bf16 %v1418, %v1462
        %v1467 = vmul.bf16 %v1419, %v1462
        %v1468 = vmul.bf16 %v1420, %v1462
        %v1469 = vmul.bf16 %v1421, %v1462
        %v1470 = vmul.bf16 %v1422, %v1462
        %v1471 = vadd.bf16 %v1451, %v1463
        %v1472 = vadd.bf16 %v1452, %v1464
        %v1473 = vadd.bf16 %v1453, %v1465
        %v1474 = vadd.bf16 %v1454, %v1466
        %v1475 = vadd.bf16 %v1455, %v1467
        %v1476 = vadd.bf16 %v1456, %v1468
        %v1477 = vadd.bf16 %v1457, %v1469
        %v1478 = vadd.bf16 %v1458, %v1470
        %v1479 = vlaneseq
        %v1480 = vshrl.u32 %v1479, 7
        %v1481 = vsub.s32 2, %v1480
        %v1482 = vrot.slane %v764, %v1481
        %v1483 = vmul.bf16 %v1416, %v1482
        %v1484 = vmul.bf16 %v1417, %v1482
        %v1485 = vmul.bf16 %v1418, %v1482
        %v1486 = vmul.bf16 %v1419, %v1482
        %v1487 = vmul.bf16 %v1420, %v1482
        %v1488 = vmul.bf16 %v1421, %v1482
        %v1489 = vmul.bf16 %v1422, %v1482
        %v1490 = vmul.bf16 %v1423, %v1482
        %v1491 = vadd.bf16 %v1471, %v1483
        %v1492 = vadd.bf16 %v1472, %v1484
        %v1493 = vadd.bf16 %v1473, %v1485
        %v1494 = vadd.bf16 %v1474, %v1486
        %v1495 = vadd.bf16 %v1475, %v1487
        %v1496 = vadd.bf16 %v1476, %v1488
        %v1497 = vadd.bf16 %v1477, %v1489
        %v1498 = vadd.bf16 %v1478, %v1490
        %v1499 = vlaneseq
        %v1500 = vshrl.u32 %v1499, 7
        %v1501 = vsub.s32 2, %v1500
        %v1502 = vrot.slane %v787, %v1501
        %v1503 = vmul.bf16 %v1417, %v1502
        %v1504 = vmul.bf16 %v1418, %v1502
        %v1505 = vmul.bf16 %v1419, %v1502
        %v1506 = vmul.bf16 %v1420, %v1502
        %v1507 = vmul.bf16 %v1421, %v1502
        %v1508 = vmul.bf16 %v1422, %v1502
        %v1509 = vmul.bf16 %v1423, %v1502
        %v1510 = vmul.bf16 %v1424, %v1502
        %v1511 = vadd.bf16 %v1491, %v1503
        %v1512 = vadd.bf16 %v1492, %v1504
        %v1513 = vadd.bf16 %v1493, %v1505
        %v1514 = vadd.bf16 %v1494, %v1506
        %v1515 = vadd.bf16 %v1495, %v1507
        %v1516 = vadd.bf16 %v1496, %v1508
        %v1517 = vadd.bf16 %v1497, %v1509
        %v1518 = vadd.bf16 %v1498, %v1510
        %v1519 = vlaneseq
        %v1520 = vshrl.u32 %v1519, 7
        %v1521 = vsub.s32 2, %v1520
        %v1522 = vrot.slane %v810, %v1521
        %v1523 = vmul.bf16 %v1418, %v1522
        %v1524 = vmul.bf16 %v1419, %v1522
        %v1525 = vmul.bf16 %v1420, %v1522
        %v1526 = vmul.bf16 %v1421, %v1522
        %v1527 = vmul.bf16 %v1422, %v1522
        %v1528 = vmul.bf16 %v1423, %v1522
        %v1529 = vmul.bf16 %v1424, %v1522
        %v1530 = vmul.bf16 %v1425, %v1522
        %v1531 = vadd.bf16 %v1511, %v1523
        %v1532 = vadd.bf16 %v1512, %v1524
        %v1533 = vadd.bf16 %v1513, %v1525
        %v1534 = vadd.bf16 %v1514, %v1526
        %v1535 = vadd.bf16 %v1515, %v1527
        %v1536 = vadd.bf16 %v1516, %v1528
        %v1537 = vadd.bf16 %v1517, %v1529
        %v1538 = vadd.bf16 %v1518, %v1530
        %v1539 = vlaneseq
        %v1540 = vshrl.u32 %v1539, 7
        %v1541 = vsub.s32 2, %v1540
        %v1542 = vrot.slane %v833, %v1541
        %v1543 = vmul.bf16 %v1419, %v1542
        %v1544 = vmul.bf16 %v1420, %v1542
        %v1545 = vmul.bf16 %v1421, %v1542
        %v1546 = vmul.bf16 %v1422, %v1542
        %v1547 = vmul.bf16 %v1423, %v1542
        %v1548 = vmul.bf16 %v1424, %v1542
        %v1549 = vmul.bf16 %v1425, %v1542
        %v1550 = vmul.bf16 %v1426, %v1542
        %v1551 = vadd.bf16 %v1531, %v1543
        %v1552 = vadd.bf16 %v1532, %v1544
        %v1553 = vadd.bf16 %v1533, %v1545
        %v1554 = vadd.bf16 %v1534, %v1546
        %v1555 = vadd.bf16 %v1535, %v1547
        %v1556 = vadd.bf16 %v1536, %v1548
        %v1557 = vadd.bf16 %v1537, %v1549
        %v1558 = vadd.bf16 %v1538, %v1550
        %v1559 = vunpack.c.l.bf16 %v1551
        %v1560 = vunpack.c.l.bf16 %v1552
        %v1561 = vunpack.c.l.bf16 %v1553
        %v1562 = vunpack.c.l.bf16 %v1554
        %v1563 = vunpack.c.l.bf16 %v1555
        %v1564 = vunpack.c.l.bf16 %v1556
        %v1565 = vunpack.c.l.bf16 %v1557
        %v1566 = vunpack.c.l.bf16 %v1558
        %v1567 = vadd.f32 %v1391, %v1559
        %v1568 = vadd.f32 %v1392, %v1560
        %v1569 = vadd.f32 %v1393, %v1561
        %v1570 = vadd.f32 %v1394, %v1562
        %v1571 = vadd.f32 %v1395, %v1563
        %v1572 = vadd.f32 %v1396, %v1564
        %v1573 = vadd.f32 %v1397, %v1565
        %v1574 = vadd.f32 %v1398, %v1566
        %v1575 = vld [vmem:[#allocation2 + $0x6] sm:$0xff]
        %v1576 = vld [vmem:[#allocation2 + $0x16] sm:$0xff]
        %v1577 = vld [vmem:[#allocation2 + $0x26] sm:$0xff]
        %v1578 = vld [vmem:[#allocation2 + $0x36] sm:$0xff]
        %v1579 = vld [vmem:[#allocation2 + $0x46] sm:$0xff]
        %v1580 = vld [vmem:[#allocation2 + $0x56] sm:$0xff]
        %v1581 = vld [vmem:[#allocation2 + $0x66] sm:$0xff]
        %v1582 = vld [vmem:[#allocation2 + $0x76] sm:$0xff]
        %v1583 = vld [vmem:[#allocation2 + $0x86] sm:$0xff]
        %v1584 = vld [vmem:[#allocation2 + $0x96] sm:$0xff]
        %v1585 = vld [vmem:[#allocation2 + $0xa6] sm:$0xff]
        %v1586 = vld [vmem:[#allocation2 + $0xb6] sm:$0xff]
        %v1587 = vld [vmem:[#allocation2 + $0xc6] sm:$0xff]
        %v1588 = vld [vmem:[#allocation2 + $0xd6] sm:$0xff]
        %v1589 = vpack.c.bf16 %v1575, %v1575
        %v1590 = vpack.c.bf16 %v1576, %v1576
        %v1591 = vpack.c.bf16 %v1577, %v1577
        %v1592 = vpack.c.bf16 %v1578, %v1578
        %v1593 = vpack.c.bf16 %v1579, %v1579
        %v1594 = vpack.c.bf16 %v1580, %v1580
        %v1595 = vpack.c.bf16 %v1581, %v1581
        %v1596 = vpack.c.bf16 %v1582, %v1582
        %v1597 = vpack.c.bf16 %v1583, %v1583
        %v1598 = vpack.c.bf16 %v1584, %v1584
        %v1599 = vpack.c.bf16 %v1585, %v1585
        %v1600 = vpack.c.bf16 %v1586, %v1586
        %v1601 = vpack.c.bf16 %v1587, %v1587
        %v1602 = vpack.c.bf16 %v1588, %v1588
        %v1603 = vlaneseq
        %v1604 = vshrl.u32 %v1603, 7
        %v1605 = vsub.s32 3, %v1604
        %v1606 = vrot.slane %v500, %v1605
        %v1607 = vmul.bf16 %v1589, %v1606
        %v1608 = vmul.bf16 %v1590, %v1606
        %v1609 = vmul.bf16 %v1591, %v1606
        %v1610 = vmul.bf16 %v1592, %v1606
        %v1611 = vmul.bf16 %v1593, %v1606
        %v1612 = vmul.bf16 %v1594, %v1606
        %v1613 = vmul.bf16 %v1595, %v1606
        %v1614 = vmul.bf16 %v1596, %v1606
        %v1615 = vlaneseq
        %v1616 = vshrl.u32 %v1615, 7
        %v1617 = vsub.s32 3, %v1616
        %v1618 = vrot.slane %v515, %v1617
        %v1619 = vmul.bf16 %v1590, %v1618
        %v1620 = vmul.bf16 %v1591, %v1618
        %v1621 = vmul.bf16 %v1592, %v1618
        %v1622 = vmul.bf16 %v1593, %v1618
        %v1623 = vmul.bf16 %v1594, %v1618
        %v1624 = vmul.bf16 %v1595, %v1618
        %v1625 = vmul.bf16 %v1596, %v1618
        %v1626 = vmul.bf16 %v1597, %v1618
        %v1627 = vadd.bf16 %v1607, %v1619
        %v1628 = vadd.bf16 %v1608, %v1620
        %v1629 = vadd.bf16 %v1609, %v1621
        %v1630 = vadd.bf16 %v1610, %v1622
        %v1631 = vadd.bf16 %v1611, %v1623
        %v1632 = vadd.bf16 %v1612, %v1624
        %v1633 = vadd.bf16 %v1613, %v1625
        %v1634 = vadd.bf16 %v1614, %v1626
        %v1635 = vlaneseq
        %v1636 = vshrl.u32 %v1635, 7
        %v1637 = vsub.s32 3, %v1636
        %v1638 = vrot.slane %v538, %v1637
        %v1639 = vmul.bf16 %v1591, %v1638
        %v1640 = vmul.bf16 %v1592, %v1638
        %v1641 = vmul.bf16 %v1593, %v1638
        %v1642 = vmul.bf16 %v1594, %v1638
        %v1643 = vmul.bf16 %v1595, %v1638
        %v1644 = vmul.bf16 %v1596, %v1638
        %v1645 = vmul.bf16 %v1597, %v1638
        %v1646 = vmul.bf16 %v1598, %v1638
        %v1647 = vadd.bf16 %v1627, %v1639
        %v1648 = vadd.bf16 %v1628, %v1640
        %v1649 = vadd.bf16 %v1629, %v1641
        %v1650 = vadd.bf16 %v1630, %v1642
        %v1651 = vadd.bf16 %v1631, %v1643
        %v1652 = vadd.bf16 %v1632, %v1644
        %v1653 = vadd.bf16 %v1633, %v1645
        %v1654 = vadd.bf16 %v1634, %v1646
        %v1655 = vlaneseq
        %v1656 = vshrl.u32 %v1655, 7
        %v1657 = vsub.s32 3, %v1656
        %v1658 = vrot.slane %v561, %v1657
        %v1659 = vmul.bf16 %v1592, %v1658
        %v1660 = vmul.bf16 %v1593, %v1658
        %v1661 = vmul.bf16 %v1594, %v1658
        %v1662 = vmul.bf16 %v1595, %v1658
        %v1663 = vmul.bf16 %v1596, %v1658
        %v1664 = vmul.bf16 %v1597, %v1658
        %v1665 = vmul.bf16 %v1598, %v1658
        %v1666 = vmul.bf16 %v1599, %v1658
        %v1667 = vadd.bf16 %v1647, %v1659
        %v1668 = vadd.bf16 %v1648, %v1660
        %v1669 = vadd.bf16 %v1649, %v1661
        %v1670 = vadd.bf16 %v1650, %v1662
        %v1671 = vadd.bf16 %v1651, %v1663
        %v1672 = vadd.bf16 %v1652, %v1664
        %v1673 = vadd.bf16 %v1653, %v1665
        %v1674 = vadd.bf16 %v1654, %v1666
        %v1675 = vlaneseq
        %v1676 = vshrl.u32 %v1675, 7
        %v1677 = vsub.s32 3, %v1676
        %v1678 = vrot.slane %v584, %v1677
        %v1679 = vmul.bf16 %v1593, %v1678
        %v1680 = vmul.bf16 %v1594, %v1678
        %v1681 = vmul.bf16 %v1595, %v1678
        %v1682 = vmul.bf16 %v1596, %v1678
        %v1683 = vmul.bf16 %v1597, %v1678
        %v1684 = vmul.bf16 %v1598, %v1678
        %v1685 = vmul.bf16 %v1599, %v1678
        %v1686 = vmul.bf16 %v1600, %v1678
        %v1687 = vadd.bf16 %v1667, %v1679
        %v1688 = vadd.bf16 %v1668, %v1680
        %v1689 = vadd.bf16 %v1669, %v1681
        %v1690 = vadd.bf16 %v1670, %v1682
        %v1691 = vadd.bf16 %v1671, %v1683
        %v1692 = vadd.bf16 %v1672, %v1684
        %v1693 = vadd.bf16 %v1673, %v1685
        %v1694 = vadd.bf16 %v1674, %v1686
        %v1695 = vlaneseq
        %v1696 = vshrl.u32 %v1695, 7
        %v1697 = vsub.s32 3, %v1696
        %v1698 = vrot.slane %v607, %v1697
        %v1699 = vmul.bf16 %v1594, %v1698
        %v1700 = vmul.bf16 %v1595, %v1698
        %v1701 = vmul.bf16 %v1596, %v1698
        %v1702 = vmul.bf16 %v1597, %v1698
        %v1703 = vmul.bf16 %v1598, %v1698
        %v1704 = vmul.bf16 %v1599, %v1698
        %v1705 = vmul.bf16 %v1600, %v1698
        %v1706 = vmul.bf16 %v1601, %v1698
        %v1707 = vadd.bf16 %v1687, %v1699
        %v1708 = vadd.bf16 %v1688, %v1700
        %v1709 = vadd.bf16 %v1689, %v1701
        %v1710 = vadd.bf16 %v1690, %v1702
        %v1711 = vadd.bf16 %v1691, %v1703
        %v1712 = vadd.bf16 %v1692, %v1704
        %v1713 = vadd.bf16 %v1693, %v1705
        %v1714 = vadd.bf16 %v1694, %v1706
        %v1715 = vlaneseq
        %v1716 = vshrl.u32 %v1715, 7
        %v1717 = vsub.s32 3, %v1716
        %v1718 = vrot.slane %v630, %v1717
        %v1719 = vmul.bf16 %v1595, %v1718
        %v1720 = vmul.bf16 %v1596, %v1718
        %v1721 = vmul.bf16 %v1597, %v1718
        %v1722 = vmul.bf16 %v1598, %v1718
        %v1723 = vmul.bf16 %v1599, %v1718
        %v1724 = vmul.bf16 %v1600, %v1718
        %v1725 = vmul.bf16 %v1601, %v1718
        %v1726 = vmul.bf16 %v1602, %v1718
        %v1727 = vadd.bf16 %v1707, %v1719
        %v1728 = vadd.bf16 %v1708, %v1720
        %v1729 = vadd.bf16 %v1709, %v1721
        %v1730 = vadd.bf16 %v1710, %v1722
        %v1731 = vadd.bf16 %v1711, %v1723
        %v1732 = vadd.bf16 %v1712, %v1724
        %v1733 = vadd.bf16 %v1713, %v1725
        %v1734 = vadd.bf16 %v1714, %v1726
        %v1735 = vunpack.c.l.bf16 %v1727
        %v1736 = vunpack.c.l.bf16 %v1728
        %v1737 = vunpack.c.l.bf16 %v1729
        %v1738 = vunpack.c.l.bf16 %v1730
        %v1739 = vunpack.c.l.bf16 %v1731
        %v1740 = vunpack.c.l.bf16 %v1732
        %v1741 = vunpack.c.l.bf16 %v1733
        %v1742 = vunpack.c.l.bf16 %v1734
        %v1743 = vadd.f32 %v1567, %v1735
        %v1744 = vadd.f32 %v1568, %v1736
        %v1745 = vadd.f32 %v1569, %v1737
        %v1746 = vadd.f32 %v1570, %v1738
        %v1747 = vadd.f32 %v1571, %v1739
        %v1748 = vadd.f32 %v1572, %v1740
        %v1749 = vadd.f32 %v1573, %v1741
        %v1750 = vadd.f32 %v1574, %v1742
        %v1751 = vsel %vm407, %v1743, 0.0
        %1752 = vadd.xlane.f32.xlu0 %v1751
        %v1753 = vpop.xlane.xlu0 %1752
        %v1754 = vsel %vm407, %v1744, 0.0
        %1755 = vadd.xlane.f32.xlu0 %v1754
        %v1756 = vpop.xlane.xlu0 %1755
        %v1757 = vsel %vm407, %v1745, 0.0
        %1758 = vadd.xlane.f32.xlu0 %v1757
        %v1759 = vpop.xlane.xlu0 %1758
        %v1760 = vsel %vm407, %v1746, 0.0
        %1761 = vadd.xlane.f32.xlu0 %v1760
        %v1762 = vpop.xlane.xlu0 %1761
        %v1763 = vsel %vm407, %v1747, 0.0
        %1764 = vadd.xlane.f32.xlu0 %v1763
        %v1765 = vpop.xlane.xlu0 %1764
        %v1766 = vsel %vm407, %v1748, 0.0
        %1767 = vadd.xlane.f32.xlu0 %v1766
        %v1768 = vpop.xlane.xlu0 %1767
        %v1769 = vsel %vm407, %v1749, 0.0
        %1770 = vadd.xlane.f32.xlu0 %v1769
        %v1771 = vpop.xlane.xlu0 %1770
        %v1772 = vsel %vm407, %v1750, 0.0
        %1773 = vadd.xlane.f32.xlu0 %v1772
        %v1774 = vpop.xlane.xlu0 %1773
        %v1775 = vrcp.pop 32.0
        %v1776 = vmul.f32 %v1753, %v1775
        %v1777 = vmul.f32 %v1756, %v1775
        %v1778 = vmul.f32 %v1759, %v1775
        %v1779 = vmul.f32 %v1762, %v1775
        %v1780 = vmul.f32 %v1765, %v1775
        %v1781 = vmul.f32 %v1768, %v1775
        %v1782 = vmul.f32 %v1771, %v1775
        %v1783 = vmul.f32 %v1774, %v1775
        %v1784 = vsub.f32 %v1743, %v1776
        %v1785 = vsub.f32 %v1744, %v1777
        %v1786 = vsub.f32 %v1745, %v1778
        %v1787 = vsub.f32 %v1746, %v1779
        %v1788 = vsub.f32 %v1747, %v1780
        %v1789 = vsub.f32 %v1748, %v1781
        %v1790 = vsub.f32 %v1749, %v1782
        %v1791 = vsub.f32 %v1750, %v1783
        %v1792 = vmul.f32 %v1784, %v1784
        %v1793 = vmul.f32 %v1785, %v1785
        %v1794 = vmul.f32 %v1786, %v1786
        %v1795 = vmul.f32 %v1787, %v1787
        %v1796 = vmul.f32 %v1788, %v1788
        %v1797 = vmul.f32 %v1789, %v1789
        %v1798 = vmul.f32 %v1790, %v1790
        %v1799 = vmul.f32 %v1791, %v1791
        %v1800 = vsel %vm407, %v1792, 0.0
        %1801 = vadd.xlane.f32.xlu0 %v1800
        %v1802 = vpop.xlane.xlu0 %1801
        %v1803 = vsel %vm407, %v1793, 0.0
        %1804 = vadd.xlane.f32.xlu0 %v1803
        %v1805 = vpop.xlane.xlu0 %1804
        %v1806 = vsel %vm407, %v1794, 0.0
        %1807 = vadd.xlane.f32.xlu0 %v1806
        %v1808 = vpop.xlane.xlu0 %1807
        %v1809 = vsel %vm407, %v1795, 0.0
        %1810 = vadd.xlane.f32.xlu0 %v1809
        %v1811 = vpop.xlane.xlu0 %1810
        %v1812 = vsel %vm407, %v1796, 0.0
        %1813 = vadd.xlane.f32.xlu0 %v1812
        %v1814 = vpop.xlane.xlu0 %1813
        %v1815 = vsel %vm407, %v1797, 0.0
        %1816 = vadd.xlane.f32.xlu0 %v1815
        %v1817 = vpop.xlane.xlu0 %1816
        %v1818 = vsel %vm407, %v1798, 0.0
        %1819 = vadd.xlane.f32.xlu0 %v1818
        %v1820 = vpop.xlane.xlu0 %1819
        %v1821 = vsel %vm407, %v1799, 0.0
        %1822 = vadd.xlane.f32.xlu0 %v1821
        %v1823 = vpop.xlane.xlu0 %1822
        %v1824 = vmul.f32 %v1802, %v1775
        %v1825 = vmul.f32 %v1805, %v1775
        %v1826 = vmul.f32 %v1808, %v1775
        %v1827 = vmul.f32 %v1811, %v1775
        %v1828 = vmul.f32 %v1814, %v1775
        %v1829 = vmul.f32 %v1817, %v1775
        %v1830 = vmul.f32 %v1820, %v1775
        %v1831 = vmul.f32 %v1823, %v1775
        %v1832 = vadd.f32 %v1824, 1e-06
        %v1833 = vadd.f32 %v1825, 1e-06
        %v1834 = vadd.f32 %v1826, 1e-06
        %v1835 = vadd.f32 %v1827, 1e-06
        %v1836 = vadd.f32 %v1828, 1e-06
        %v1837 = vadd.f32 %v1829, 1e-06
        %v1838 = vadd.f32 %v1830, 1e-06
        %v1839 = vadd.f32 %v1831, 1e-06
        %v1840 = vrsqrt.pop %v1832
        %v1841 = vrsqrt.pop %v1833
        %v1842 = vrsqrt.pop %v1834
        %v1843 = vrsqrt.pop %v1835
        %v1844 = vrsqrt.pop %v1836
        %v1845 = vrsqrt.pop %v1837
        %v1846 = vrsqrt.pop %v1838
        %v1847 = vrsqrt.pop %v1839
        %v1848 = vmul.f32 %v1784, %v1840
        %v1849 = vmul.f32 %v1785, %v1841
        %v1850 = vmul.f32 %v1786, %v1842
        %v1851 = vmul.f32 %v1787, %v1843
        %v1852 = vmul.f32 %v1788, %v1844
        %v1853 = vmul.f32 %v1789, %v1845
        %v1854 = vmul.f32 %v1790, %v1846
        %v1855 = vmul.f32 %v1791, %v1847
        %v1856 = vld [vmem:[%s3] sm:$0x1]
        %v1858 = vlaneseq
        %v1859 = vshrl.u32 %v1858, 7
        %v1860 = vsub.s32 0, %v1859
        %v1861 = vrot.slane %v1856, %v1860
        %v1863 = vmul.f32 %v1848, %v1861
        %v1864 = vmul.f32 %v1849, %v1861
        %v1865 = vmul.f32 %v1850, %v1861
        %v1866 = vmul.f32 %v1851, %v1861
        %v1867 = vmul.f32 %v1852, %v1861
        %v1868 = vmul.f32 %v1853, %v1861
        %v1869 = vmul.f32 %v1854, %v1861
        %v1870 = vmul.f32 %v1855, %v1861
        %v1871 = vld [vmem:[%s4] sm:$0x1]
        %v1873 = vlaneseq
        %v1874 = vshrl.u32 %v1873, 7
        %v1875 = vsub.s32 0, %v1874
        %v1876 = vrot.slane %v1871, %v1875
        %v1878 = vadd.f32 %v1863, %v1876
        %v1879 = vadd.f32 %v1864, %v1876
        %v1880 = vadd.f32 %v1865, %v1876
        %v1881 = vadd.f32 %v1866, %v1876
        %v1882 = vadd.f32 %v1867, %v1876
        %v1883 = vadd.f32 %v1868, %v1876
        %v1884 = vadd.f32 %v1869, %v1876
        %v1885 = vadd.f32 %v1870, %v1876
        %v1886 = vpack.c.bf16 %v1879, %v1878
        %v1887 = vpack.c.bf16 %v1881, %v1880
        %v1888 = vpack.c.bf16 %v1883, %v1882
        %v1889 = vpack.c.bf16 %v1885, %v1884
        %v1890 = vld [vmem:[%s5] sm:$0xf]
        %v1891 = vld [vmem:[%s5 + $0x4] sm:$0xf]
        %v1892 = vld [vmem:[%s5 + $0x8] sm:$0xf]
        %v1893 = vld [vmem:[%s5 + $0xc] sm:$0xf]
        %v1894 = vld [vmem:[%s6] sm:$0x1]
        %v1896 = vlaneseq
        %v1897 = vshrl.u32 %v1896, 7
        %v1898 = vsub.s32 0, %v1897
        %v1899 = vrot.slane %v1894, %v1898
        %v1905 = vunpack.c.l.b16 %v1890
        %v1906 = vunpack.c.l.b16 %v1891
        %v1907 = vunpack.c.l.b16 %v1892
        %v1908 = vunpack.c.l.b16 %v1893
        %v1909 = vpack.c.b16 %v1906, %v1905
        %v1910 = vpack.c.b16 %v1908, %v1907
        %v1914 = vsel %vm407, %v1886, 0
        %v1917 = vsel %vm407, %v1887, 0
        %v1920 = vsel %vm407, %v1888, 0
        %v1923 = vsel %vm407, %v1889, 0
        %1925 = vmatprep.subr.bf16.mxu0 0
        %1926 = vmatpush1.bf16.msra.mxu0 %v1909
        %1927 = vmatprep.subr.bf16.mxu0 0
        %1928 = vmatpush1.bf16.msra.mxu0 %v1910
        %1929 = vmatprep.subr.bf16.mxu0 0
        %1930 = vmatpush1.bf16.msra.mxu0 0
        %1931 = vmatprep.subr.bf16.mxu0 0
        %1932 = vmatpush1.bf16.msra.mxu0 0
        %1933 = vmatprep.subr.bf16.mxu0 0
        %1934 = vmatpush1.bf16.msra.mxu0 0
        %1935 = vmatprep.subr.bf16.mxu0 0
        %1936 = vmatpush1.bf16.msra.mxu0 0
        %1937 = vmatprep.subr.bf16.mxu0 0
        %1938 = vmatpush1.bf16.msra.mxu0 0
        %1939 = vmatprep.subr.bf16.mxu0 0
        %1940 = vmatpush1.bf16.msra.mxu0 0
        %1941 = vmatprep.subr.bf16.mxu0 0
        %1942 = vmatpush1.bf16.msra.mxu0 0
        %1943 = vmatprep.subr.bf16.mxu0 0
        %1944 = vmatpush1.bf16.msra.mxu0 0
        %1945 = vmatprep.subr.bf16.mxu0 0
        %1946 = vmatpush1.bf16.msra.mxu0 0
        %1947 = vmatprep.subr.bf16.mxu0 0
        %1948 = vmatpush1.bf16.msra.mxu0 0
        %1949 = vmatprep.subr.bf16.mxu0 0
        %1950 = vmatpush1.bf16.msra.mxu0 0
        %1951 = vmatprep.subr.bf16.mxu0 0
        %1952 = vmatpush1.bf16.msra.mxu0 0
        %1953 = vmatprep.subr.bf16.mxu0 0
        %1954 = vmatpush1.bf16.msra.mxu0 0
        %1955 = vmatprep.subr.bf16.mxu0 0
        %1956 = vmatpush1.bf16.msra.mxu0 0
        %1957 = vmatprep.mubr.bf16.mxu0 0
        %1958 = vmatmul.mubr.bf16.gmra.mrb[0].mxu0 %v1914
        %v1959 = vpop.f32.mrb[0].mxu0
        %v1960 = vadd.f32 %v1899, %v1959
        %v1961 = vpop.f32.mrb[0].mxu0
        %v1962 = vpop.f32.mrb[0].mxu0
        %v1963 = vadd.f32 %v1899, %v1962
        %v1964 = vpop.f32.mrb[0].mxu0
        %1965 = vmatprep.mubr.bf16.mxu0 0
        %1966 = vmatmul.mubr.bf16.gmra.mrb[0].mxu0 %v1917
        %v1967 = vpop.f32.mrb[0].mxu0
        %v1968 = vadd.f32 %v1899, %v1967
        %v1969 = vpop.f32.mrb[0].mxu0
        %v1970 = vpop.f32.mrb[0].mxu0
        %v1971 = vadd.f32 %v1899, %v1970
        %v1972 = vpop.f32.mrb[0].mxu0
        %1973 = vmatprep.mubr.bf16.mxu0 0
        %1974 = vmatmul.mubr.bf16.gmra.mrb[0].mxu0 %v1920
        %v1975 = vpop.f32.mrb[0].mxu0
        %v1976 = vadd.f32 %v1899, %v1975
        %v1977 = vpop.f32.mrb[0].mxu0
        %v1978 = vpop.f32.mrb[0].mxu0
        %v1979 = vadd.f32 %v1899, %v1978
        %v1980 = vpop.f32.mrb[0].mxu0
        %1981 = vmatprep.mubr.bf16.mxu0 0
        %1982 = vmatmul.mubr.bf16.gmra.mrb[0].mxu0 %v1923
        %v1983 = vpop.f32.mrb[0].mxu0
        %v1984 = vadd.f32 %v1899, %v1983
        %v1985 = vpop.f32.mrb[0].mxu0
        %v1986 = vpop.f32.mrb[0].mxu0
        %v1987 = vadd.f32 %v1899, %v1986
        %v1988 = vpop.f32.mrb[0].mxu0
        %1989 = vdwg.mxu0
        %v1990 = vmul.f32 %v1960, %v1960
        %v1991 = vmul.f32 %v1963, %v1963
        %v1992 = vmul.f32 %v1968, %v1968
        %v1993 = vmul.f32 %v1971, %v1971
        %v1994 = vmul.f32 %v1976, %v1976
        %v1995 = vmul.f32 %v1979, %v1979
        %v1996 = vmul.f32 %v1984, %v1984
        %v1997 = vmul.f32 %v1987, %v1987
        %v1998 = vmul.f32 %v1960, %v1990
        %v1999 = vmul.f32 %v1963, %v1991
        %v2000 = vmul.f32 %v1968, %v1992
        %v2001 = vmul.f32 %v1971, %v1993
        %v2002 = vmul.f32 %v1976, %v1994
        %v2003 = vmul.f32 %v1979, %v1995
        %v2004 = vmul.f32 %v1984, %v1996
        %v2005 = vmul.f32 %v1987, %v1997
        %v2006 = vmul.f32 %v1998, 0.044715
        %v2007 = vmul.f32 %v1999, 0.044715
        %v2008 = vmul.f32 %v2000, 0.044715
        %v2009 = vmul.f32 %v2001, 0.044715
        %v2010 = vmul.f32 %v2002, 0.044715
        %v2011 = vmul.f32 %v2003, 0.044715
        %v2012 = vmul.f32 %v2004, 0.044715
        %v2013 = vmul.f32 %v2005, 0.044715
        %v2014 = vadd.f32 %v1960, %v2006
        %v2015 = vadd.f32 %v1963, %v2007
        %v2016 = vadd.f32 %v1968, %v2008
        %v2017 = vadd.f32 %v1971, %v2009
        %v2018 = vadd.f32 %v1976, %v2010
        %v2019 = vadd.f32 %v1979, %v2011
        %v2020 = vadd.f32 %v1984, %v2012
        %v2021 = vadd.f32 %v1987, %v2013
        %v2022 = vmul.f32 %v2014, 0.7978846
        %v2023 = vmul.f32 %v2015, 0.7978846
        %v2024 = vmul.f32 %v2016, 0.7978846
        %v2025 = vmul.f32 %v2017, 0.7978846
        %v2026 = vmul.f32 %v2018, 0.7978846
        %v2027 = vmul.f32 %v2019, 0.7978846
        %v2028 = vmul.f32 %v2020, 0.7978846
        %v2029 = vmul.f32 %v2021, 0.7978846
        %v2030 = vtanh.pop %v2022
        %v2031 = vtanh.pop %v2023
        %v2032 = vtanh.pop %v2024
        %v2033 = vtanh.pop %v2025
        %v2034 = vtanh.pop %v2026
        %v2035 = vtanh.pop %v2027
        %v2036 = vtanh.pop %v2028
        %v2037 = vtanh.pop %v2029
        %v2038 = vadd.f32 %v2030, 1.0
        %v2039 = vadd.f32 %v2031, 1.0
        %v2040 = vadd.f32 %v2032, 1.0
        %v2041 = vadd.f32 %v2033, 1.0
        %v2042 = vadd.f32 %v2034, 1.0
        %v2043 = vadd.f32 %v2035, 1.0
        %v2044 = vadd.f32 %v2036, 1.0
        %v2045 = vadd.f32 %v2037, 1.0
        %v2046 = vmul.f32 %v2038, 0.5
        %v2047 = vmul.f32 %v2039, 0.5
        %v2048 = vmul.f32 %v2040, 0.5
        %v2049 = vmul.f32 %v2041, 0.5
        %v2050 = vmul.f32 %v2042, 0.5
        %v2051 = vmul.f32 %v2043, 0.5
        %v2052 = vmul.f32 %v2044, 0.5
        %v2053 = vmul.f32 %v2045, 0.5
        %v2054 = vmul.f32 %v1960, %v2046
        %v2055 = vmul.f32 %v1963, %v2047
        %v2056 = vmul.f32 %v1968, %v2048
        %v2057 = vmul.f32 %v1971, %v2049
        %v2058 = vmul.f32 %v1976, %v2050
        %v2059 = vmul.f32 %v1979, %v2051
        %v2060 = vmul.f32 %v1984, %v2052
        %v2061 = vmul.f32 %v1987, %v2053
        %v2062 = vpack.c.bf16 %v2055, %v2054
        %v2063 = vpack.c.bf16 %v2057, %v2056
        %v2064 = vpack.c.bf16 %v2059, %v2058
        %v2065 = vpack.c.bf16 %v2061, %v2060
        %v2066 = vmul.bf16 %v2062, %v2062
        %v2067 = vmul.bf16 %v2063, %v2063
        %v2068 = vmul.bf16 %v2064, %v2064
        %v2069 = vmul.bf16 %v2065, %v2065
        %vm2070 = vcmask 523264
        %v2072 = vsel %vm2070, 1065369472, 0
        %2074 = vmatprep.subr.bf16.mxu0 0
        %2075 = vmatpush1.bf16.msra.mxu0 %v2066
        %2076 = vmatprep.subr.bf16.mxu0 0
        %2077 = vmatpush1.bf16.msra.mxu0 %v2067
        %2078 = vmatprep.subr.bf16.mxu0 0
        %2079 = vmatpush1.bf16.msra.mxu0 %v2068
        %2080 = vmatprep.subr.bf16.mxu0 0
        %2081 = vmatpush1.bf16.msra.mxu0 %v2069
        %2082 = vmatprep.subr.bf16.mxu0 0
        %2083 = vmatpush1.bf16.msra.mxu0 0
        %2084 = vmatprep.subr.bf16.mxu0 0
        %2085 = vmatpush1.bf16.msra.mxu0 0
        %2086 = vmatprep.subr.bf16.mxu0 0
        %2087 = vmatpush1.bf16.msra.mxu0 0
        %2088 = vmatprep.subr.bf16.mxu0 0
        %2089 = vmatpush1.bf16.msra.mxu0 0
        %2090 = vmatprep.subr.bf16.mxu0 0
        %2091 = vmatpush1.bf16.msra.mxu0 0
        %2092 = vmatprep.subr.bf16.mxu0 0
        %2093 = vmatpush1.bf16.msra.mxu0 0
        %2094 = vmatprep.subr.bf16.mxu0 0
        %2095 = vmatpush1.bf16.msra.mxu0 0
        %2096 = vmatprep.subr.bf16.mxu0 0
        %2097 = vmatpush1.bf16.msra.mxu0 0
        %2098 = vmatprep.subr.bf16.mxu0 0
        %2099 = vmatpush1.bf16.msra.mxu0 0
        %2100 = vmatprep.subr.bf16.mxu0 0
        %2101 = vmatpush1.bf16.msra.mxu0 0
        %2102 = vmatprep.subr.bf16.mxu0 0
        %2103 = vmatpush1.bf16.msra.mxu0 0
        %2104 = vmatprep.subr.bf16.mxu0 0
        %2105 = vmatpush1.bf16.msra.mxu0 0
        %2106 = vmatprep.mubr.bf16.mxu0 0
        %2107 = vmatmul.mubr.bf16.gmra.mrb[0].mxu0 %v2072
        %v2108 = vpop.f32.mrb[0].mxu0
        %v2109 = vadd.f32 0.0, %v2108
        %v2110 = vpop.f32.mrb[0].mxu0
        %v2111 = vpop.f32.mrb[0].mxu0
        %v2112 = vpop.f32.mrb[0].mxu0
        %2113 = vdwg.mxu0
        %v2114 = vrsqrt.pop %v2109
        %v2115 = vmul.f32 %v2109, %v2114
        %vm2116 = vcmp.eq.f32.partialorder %v2109, inf
        %v2117 = vsel %vm2116, %v2109, %v2115
        %vm2118 = vcmp.eq.f32.partialorder %v2109, 0.0
        %v2119 = vand.u32 %v2109, 2147483648
        %v2120 = vsel %vm2118, %v2119, %v2117
        %vm2121 = vcmask 1040384
        %v2122 = vsel %vm2121, %v2120, 0.0
        %2123 = vadd.xlane.f32.xlu0 %v2122
        %v2124 = vpop.xlane.xlu0 %2123
        %v2125 = vrcp.pop 128.0
        %v2126 = vmul.f32 %v2124, %v2125
        %v2127 = vadd.f32 %v2126, 1e-06
        %v2128 = vrcp.pop %v2127
        %v2129 = vmul.f32 %v2120, %v2128
        %v2130 = vld [vmem:[%s7] sm:$0x1]
        %v2131 = vpack.c.bf16 %v2130, %v2130
        %v2132 = vld [vmem:[%s8] sm:$0x1]
        %v2133 = vpack.c.bf16 %v2132, %v2132
        %v2134 = vpack.c.bf16 %v2129, %v2129
        %v2136 = vpack.i.b16 %v2134, %v2134
        %v2138 = vlaneseq
        %v2139 = vshrl.u32 %v2138, 7
        %v2140 = vsub.s32 0, %v2139
        %v2141 = vrot.slane %v2136, %v2140
        %v2142 = vmul.bf16 %v2062, %v2141
        %v2143 = vmul.bf16 %v2063, %v2141
        %v2144 = vmul.bf16 %v2064, %v2141
        %v2145 = vmul.bf16 %v2065, %v2141
        %v2147 = vpack.i.b16 %v2131, %v2131
        %v2149 = vlaneseq
        %v2150 = vshrl.u32 %v2149, 7
        %v2151 = vsub.s32 0, %v2150
        %v2152 = vrot.slane %v2147, %v2151
        %v2153 = vmul.bf16 %v2152, %v2142
        %v2154 = vmul.bf16 %v2152, %v2143
        %v2155 = vmul.bf16 %v2152, %v2144
        %v2156 = vmul.bf16 %v2152, %v2145
        %v2158 = vpack.i.b16 %v2133, %v2133
        %v2160 = vlaneseq
        %v2161 = vshrl.u32 %v2160, 7
        %v2162 = vsub.s32 0, %v2161
        %v2163 = vrot.slane %v2158, %v2162
        %v2164 = vadd.bf16 %v2153, %v2163
        %v2165 = vadd.bf16 %v2154, %v2163
        %v2166 = vadd.bf16 %v2155, %v2163
        %v2167 = vadd.bf16 %v2156, %v2163
        %v2168 = vadd.bf16 %v2164, %v2062
        %v2169 = vadd.bf16 %v2165, %v2063
        %v2170 = vadd.bf16 %v2166, %v2064
        %v2171 = vadd.bf16 %v2167, %v2065
        %v2172 = vld [vmem:[%s9] sm:$0xf]
        %v2173 = vld [vmem:[%s9 + $0x4] sm:$0xf]
        %v2174 = vld [vmem:[%s9 + $0x8] sm:$0xf]
        %v2175 = vld [vmem:[%s9 + $0xc] sm:$0xf]
        %v2176 = vld [vmem:[%s9 + $0x10] sm:$0xf]
        %v2177 = vld [vmem:[%s9 + $0x14] sm:$0xf]
        %v2178 = vld [vmem:[%s9 + $0x18] sm:$0xf]
        %v2179 = vld [vmem:[%s9 + $0x1c] sm:$0xf]
        %v2180 = vld [vmem:[%s9 + $0x20] sm:$0xf]
        %v2181 = vld [vmem:[%s9 + $0x24] sm:$0xf]
        %v2182 = vld [vmem:[%s9 + $0x28] sm:$0xf]
        %v2183 = vld [vmem:[%s9 + $0x2c] sm:$0xf]
        %v2184 = vld [vmem:[%s9 + $0x30] sm:$0xf]
        %v2185 = vld [vmem:[%s9 + $0x34] sm:$0xf]
        %v2186 = vld [vmem:[%s9 + $0x38] sm:$0xf]
        %v2187 = vld [vmem:[%s9 + $0x3c] sm:$0xf]
        %v2188 = vld [vmem:[%s10] sm:$0x1]
        %v2190 = vlaneseq
        %v2191 = vshrl.u32 %v2190, 7
        %v2192 = vsub.s32 0, %v2191
        %v2193 = vrot.slane %v2188, %v2192
        %v2211 = vunpack.c.l.b16 %v2172
        %v2212 = vunpack.c.l.b16 %v2173
        %v2213 = vunpack.c.l.b16 %v2174
        %v2214 = vunpack.c.l.b16 %v2175
        %v2215 = vunpack.c.l.b16 %v2176
        %v2216 = vunpack.c.l.b16 %v2177
        %v2217 = vunpack.c.l.b16 %v2178
        %v2218 = vunpack.c.l.b16 %v2179
        %v2219 = vunpack.c.l.b16 %v2180
        %v2220 = vunpack.c.l.b16 %v2181
        %v2221 = vunpack.c.l.b16 %v2182
        %v2222 = vunpack.c.l.b16 %v2183
        %v2223 = vunpack.c.l.b16 %v2184
        %v2224 = vunpack.c.l.b16 %v2185
        %v2225 = vunpack.c.l.b16 %v2186
        %v2226 = vunpack.c.l.b16 %v2187
        %v2227 = vpack.c.b16 %v2212, %v2211
        %v2228 = vpack.c.b16 %v2214, %v2213
        %v2229 = vpack.c.b16 %v2216, %v2215
        %v2230 = vpack.c.b16 %v2218, %v2217
        %v2231 = vpack.c.b16 %v2220, %v2219
        %v2232 = vpack.c.b16 %v2222, %v2221
        %v2233 = vpack.c.b16 %v2224, %v2223
        %v2234 = vpack.c.b16 %v2226, %v2225
        %2243 = vmatprep.subr.bf16.mxu0 0
        %2244 = vmatpush1.bf16.msra.mxu0 %v2227
        %2245 = vmatprep.subr.bf16.mxu0 0
        %2246 = vmatpush1.bf16.msra.mxu0 %v2228
        %2247 = vmatprep.subr.bf16.mxu0 0
        %2248 = vmatpush1.bf16.msra.mxu0 %v2229
        %2249 = vmatprep.subr.bf16.mxu0 0
        %2250 = vmatpush1.bf16.msra.mxu0 %v2230
        %2251 = vmatprep.subr.bf16.mxu0 0
        %2252 = vmatpush1.bf16.msra.mxu0 %v2231
        %2253 = vmatprep.subr.bf16.mxu0 0
        %2254 = vmatpush1.bf16.msra.mxu0 %v2232
        %2255 = vmatprep.subr.bf16.mxu0 0
        %2256 = vmatpush1.bf16.msra.mxu0 %v2233
        %2257 = vmatprep.subr.bf16.mxu0 0
        %2258 = vmatpush1.bf16.msra.mxu0 %v2234
        %2259 = vmatprep.subr.bf16.mxu0 0
        %2260 = vmatpush1.bf16.msra.mxu0 0
        %2261 = vmatprep.subr.bf16.mxu0 0
        %2262 = vmatpush1.bf16.msra.mxu0 0
        %2263 = vmatprep.subr.bf16.mxu0 0
        %2264 = vmatpush1.bf16.msra.mxu0 0
        %2265 = vmatprep.subr.bf16.mxu0 0
        %2266 = vmatpush1.bf16.msra.mxu0 0
        %2267 = vmatprep.subr.bf16.mxu0 0
        %2268 = vmatpush1.bf16.msra.mxu0 0
        %2269 = vmatprep.subr.bf16.mxu0 0
        %2270 = vmatpush1.bf16.msra.mxu0 0
        %2271 = vmatprep.subr.bf16.mxu0 0
        %2272 = vmatpush1.bf16.msra.mxu0 0
        %2273 = vmatprep.subr.bf16.mxu0 0
        %2274 = vmatpush1.bf16.msra.mxu0 0
        %2275 = vmatprep.mubr.bf16.mxu0 0
        %2276 = vmatmul.mubr.bf16.gmra.mrb[0].mxu0 %v2168
        %v2277 = vpop.f32.mrb[0].mxu0
        %v2278 = vadd.f32 %v2193, %v2277
        %v2279 = vpop.f32.mrb[0].mxu0
        %v2280 = vpop.f32.mrb[0].mxu0
        %v2281 = vadd.f32 %v2193, %v2280
        %v2282 = vpop.f32.mrb[0].mxu0
        %2283 = vmatprep.mubr.bf16.mxu0 0
        %2284 = vmatmul.mubr.bf16.gmra.mrb[0].mxu0 %v2169
        %v2285 = vpop.f32.mrb[0].mxu0
        %v2286 = vadd.f32 %v2193, %v2285
        %v2287 = vpop.f32.mrb[0].mxu0
        %v2288 = vpop.f32.mrb[0].mxu0
        %v2289 = vadd.f32 %v2193, %v2288
        %v2290 = vpop.f32.mrb[0].mxu0
        %2291 = vmatprep.mubr.bf16.mxu0 0
        %2292 = vmatmul.mubr.bf16.gmra.mrb[0].mxu0 %v2170
        %v2293 = vpop.f32.mrb[0].mxu0
        %v2294 = vadd.f32 %v2193, %v2293
        %v2295 = vpop.f32.mrb[0].mxu0
        %v2296 = vpop.f32.mrb[0].mxu0
        %v2297 = vadd.f32 %v2193, %v2296
        %v2298 = vpop.f32.mrb[0].mxu0
        %2299 = vmatprep.mubr.bf16.mxu0 0
        %2300 = vmatmul.mubr.bf16.gmra.mrb[0].mxu0 %v2171
        %v2301 = vpop.f32.mrb[0].mxu0
        %v2302 = vadd.f32 %v2193, %v2301
        %v2303 = vpop.f32.mrb[0].mxu0
        %v2304 = vpop.f32.mrb[0].mxu0
        %v2305 = vadd.f32 %v2193, %v2304
        %v2306 = vpop.f32.mrb[0].mxu0
        %2307 = vdwg.mxu0
        %v2308 = vld [vmem:[%s366] sm:$0xff]
        %v2309 = vld [vmem:[%s366 + $0x8] sm:$0xff]
        %v2310 = vld [vmem:[%s366 + $0x10] sm:$0xff]
        %v2311 = vld [vmem:[%s366 + $0x18] sm:$0xff]
        %v2312 = vld [vmem:[%s366 + $0x20] sm:$0xff]
        %v2313 = vld [vmem:[%s366 + $0x28] sm:$0xff]
        %v2314 = vld [vmem:[%s366 + $0x30] sm:$0xff]
        %v2315 = vld [vmem:[%s366 + $0x38] sm:$0xff]
        %v2316 = vadd.f32 %v2308, %v2278
        %v2317 = vadd.f32 %v2309, %v2281
        %v2318 = vadd.f32 %v2310, %v2286
        %v2319 = vadd.f32 %v2311, %v2289
        %v2320 = vadd.f32 %v2312, %v2294
        %v2321 = vadd.f32 %v2313, %v2297
        %v2322 = vadd.f32 %v2314, %v2302
        %v2323 = vadd.f32 %v2315, %v2305
        %2324 = vst.msk [vmem:[%s404] sm:$0xff] %vm407, %v2316
        %2325 = vst.msk [vmem:[%s404 + $0x8] sm:$0xff] %vm407, %v2317
        %2326 = vst.msk [vmem:[%s404 + $0x10] sm:$0xff] %vm407, %v2318
        %2327 = vst.msk [vmem:[%s404 + $0x18] sm:$0xff] %vm407, %v2319
        %2328 = vst.msk [vmem:[%s404 + $0x20] sm:$0xff] %vm407, %v2320
        %2329 = vst.msk [vmem:[%s404 + $0x28] sm:$0xff] %vm407, %v2321
        %2330 = vst.msk [vmem:[%s404 + $0x30] sm:$0xff] %vm407, %v2322
        %2331 = vst.msk [vmem:[%s404 + $0x38] sm:$0xff] %vm407, %v2323
        %s2332 = sand.u32 %s272, 1
        %s2333 = scalar_lea.sflag [#allocation5], %s2332
        %s2334 = sand.u32 %s272, 1
        %s2335 = smul.addr %s2334, 64
        %s2336 = scalar_lea.vmem [#allocation6], %s2335
        // Predicated region
        $region69: #{tpu_custom_call.1} parent=63 // pred_check
          %p2337 = pneg %p282
        $region70: #{tpu_custom_call.1} parent=63 // pred_check_branch
          %2339 = sbr.rel (%p2337) target = $region72
        $region71: #{tpu_custom_call.1} parent=63 // pred_region
          %s2341 = ssub.s32 1024, 1024
          %2342 = vsyncadd %s2333, %s2341
          %s2343 = smul.addr %s28, 8
          %s2344 = smul.addr %s2343, 128
          %s2345 = scalar_lea.hbm %s11, %s2344
          %s2346 = sshll.u32 %s2336, 4
          %s2347 = int_to_ptr.vmem [resolvable:$true] %s2346
          %2352 = dma.vmem_to_hbm [thread:$0]  %s2347, 1024, %s2345, %s2333, 128, 128, 8
        $region72: #{tpu_custom_call.1} parent=63 // pred_fallthru
          _
      $region64: #{tpu_custom_call.1} parent=5 // pred_fallthru
        _
      %p2353 = scmp.le.s32.totalorder 2, %s23
      // Predicated region
      $region73: #{tpu_custom_call.1} parent=5 // pred_check
        %p2354 = pneg %p2353
      $region74: #{tpu_custom_call.1} parent=5 // pred_check_branch
        %2356 = sbr.rel (%p2354) target = $region76
      $region75: #{tpu_custom_call.1} parent=5 // pred_region
        %s2357 = ssub.s32 %s23, 2
        // Predicated region
        $region77: #{tpu_custom_call.1} parent=75 // pred_check
          %p2358 = pneg %p288
        $region78: #{tpu_custom_call.1} parent=75 // pred_check_branch
          %2360 = sbr.rel (%p2358) target = $region80
        $region79: #{tpu_custom_call.1} parent=75 // pred_region
          %s2361 = sand.u32 %s273, 1
          %s2362 = scalar_lea.sflag [#allocation5], %s2361
          %s2363 = sand.u32 %s273, 1
          %s2364 = smul.addr %s2363, 64
          %s2365 = scalar_lea.vmem [#allocation6], %s2364
          %2366 = dma.done %s2362, 1024
        $region80: #{tpu_custom_call.1} parent=75 // pred_fallthru
          _
      $region76: #{tpu_custom_call.1} parent=5 // pred_fallthru
        _
    $region6: #{tpu_custom_call.1} parent=1 // loop_footer
      %s27 = sadd.s32 1, %s23
    $region7: #{tpu_custom_call.1} parent=1 // loop_footer_branch
      %22 = sbr.rel target = $region3
    $region8: #{tpu_custom_call.1} parent=1 // loop_exit
      _
    %2367 = vsyncpa [#allocation4], 1
    %s2368 = scalar_lea.sflag [#allocation4], 1
    %2369 = vsyncpa %s2368, 1
    %2370 = vsyncpa [#allocation5], 1
    %s2371 = scalar_lea.sflag [#allocation5], 1
    %2372 = vsyncpa %s2371, 1

</llo_original>
